<compile_context>
chip_gen: v7x
topology: tpu7x:2x2x1
jax: 0.10.0
libtpu: 0.0.40
codegen_flags: <defaults>
</compile_context>

<pallas_src>
import jax
import jax.numpy as jnp
from jax.experimental import pallas as pl
from jax.experimental.pallas import tpu as pltpu


def _round_up(x, m):
    return ((x + m - 1) // m) * m


def _lstm_block_kernel(x_ref, wih_ref, whh_ref, b_ref, wfc_ref, bfc_ref,
                       out_ref, h_scr, c_scr, hs_scr):
    """One grid step = one (batch tile, time block).

    INVARIANT: the time axis must stay the LAST (innermost, "arbitrary") grid
    axis -- h_scr / c_scr carry the recurrent state across the time blocks of
    one batch tile and are reset when the time-block index is 0.  Reordering
    the grid axes or marking time "parallel" would silently corrupt the
    recurrence.
    """
    t_blk = pl.program_id(1)

    @pl.when(t_blk == 0)
    def _():
        h_scr[...] = jnp.zeros_like(h_scr)
        c_scr[...] = jnp.zeros_like(c_scr)

    tile_b, TB, I = x_ref.shape
    Hp = h_scr.shape[-1]          # per-gate width, padded to a multiple of 128

    # ---- Hoisted input projection: one big MXU matmul for the whole time
    # block (bias folded here), off the serial recurrence path.
    x_blk = x_ref[...].reshape(tile_b * TB, I)
    xproj = (jnp.dot(x_blk, wih_ref[...], preferred_element_type=jnp.float32)
             + b_ref[...])
    xproj = xproj.reshape(tile_b, TB, 4 * Hp)

    h = h_scr[...]
    c = c_scr[...]
    whh = whh_ref[...]

    # ---- Serial recurrence over the block.  Static Python loop == fully
    # unrolled (TB is small) so the scheduler sees the whole block; only
    # h @ W_hh^T is on the latency-critical chain.  Gate slices are
    # 128-lane aligned thanks to the Hp padding.
    for t in range(TB):
        gates = xproj[:, t, :] + jnp.dot(h, whh,
                                         preferred_element_type=jnp.float32)
        i_g = jax.nn.sigmoid(gates[:, 0 * Hp:1 * Hp])
        f_g = jax.nn.sigmoid(gates[:, 1 * Hp:2 * Hp])
        g_g = jnp.tanh(gates[:, 2 * Hp:3 * Hp])
        o_g = jax.nn.sigmoid(gates[:, 3 * Hp:4 * Hp])
        c = f_g * c + i_g * g_g
        h = o_g * jnp.tanh(c)
        hs_scr[:, t:t + 1, :] = h[:, None, :]

    h_scr[...] = h
    c_scr[...] = c

    # ---- Block-level fused fc: one [(tile_b*TB), Hp] x [Hp, O_pad] matmul
    # instead of TB under-filled per-step pushes.
    hs = hs_scr[...].reshape(tile_b * TB, Hp)
    out = (jnp.dot(hs, wfc_ref[...], preferred_element_type=jnp.float32)
           + bfc_ref[...])
    out_ref[...] = out.reshape(out_ref.shape)


def _pick_tile_b(batch):
    """batch is already a multiple of 8.  Prefer >= 2 batch tiles so the
    'parallel' batch axis can feed both v7x TensorCores."""
    for cand in (256, 128, 64, 32, 16, 8):
        if batch % cand == 0 and batch // cand >= 2:
            return cand
    for cand in (256, 128, 64, 32, 16, 8):
        if batch % cand == 0:
            return cand
    return batch


def _pick_time_block(T):
    for cand in (16, 8):
        if T % cand == 0:
            return cand
    return 8          # T will be zero-padded up to a multiple of 8


def lstm_model_forward(x, params):
    """x: [B, T, input_size] f32 -> [B, T, output_size] f32."""
    w_ih, w_hh, b_ih, b_hh, w_fc, b_fc = params
    B, T, I = x.shape
    H = w_hh.shape[1]
    O = w_fc.shape[0]

    Hp = _round_up(H, 128)        # 128-aligned per-gate width
    Op = _round_up(O, 128)        # lane-dense fc output block

    TB = _pick_time_block(T)
    T_pad = _round_up(T, TB)
    B_pad = _round_up(B, 8)
    tile_b = _pick_tile_b(B_pad)

    x = x.astype(jnp.float32)
    if (B_pad, T_pad) != (B, T):
        # Zero-pad batch (independent rows) and trailing timesteps (the
        # recurrence is causal, so padded steps only affect discarded rows).
        x = jnp.pad(x, ((0, B_pad - B), (0, T_pad - T), (0, 0)))

    # Kernel-friendly weights: [in, out]-major, folded LSTM bias, and each
    # gate's H columns padded to Hp so in-kernel gate slices are 128-aligned.
    f32 = jnp.float32
    wih_p = jnp.zeros((I, 4 * Hp), f32)
    whh_p = jnp.zeros((Hp, 4 * Hp), f32)
    bias_p = jnp.zeros((1, 4 * Hp), f32)
    b_sum = (b_ih + b_hh).astype(f32)
    for g in range(4):
        wih_p = wih_p.at[:, g * Hp:g * Hp + H].set(w_ih[g * H:(g + 1) * H, :].T)
        whh_p = whh_p.at[:H, g * Hp:g * Hp + H].set(w_hh[g * H:(g + 1) * H, :].T)
        bias_p = bias_p.at[:, g * Hp:g * Hp + H].set(b_sum[None, g * H:(g + 1) * H])
    wfc_p = jnp.zeros((Hp, Op), f32).at[:H, :O].set(w_fc.T)
    bfc_p = jnp.zeros((1, Op), f32).at[:, :O].set(b_fc[None, :])

    # Time MUST be the last (innermost, "arbitrary") grid axis (see kernel).
    grid = (B_pad // tile_b, T_pad // TB)

    # Explicit VMEM budget: resident weights + double-buffered x/out blocks +
    # h/c/hs scratch + the live xproj block, with 2x headroom.
    vmem_bytes = 4 * (
        I * 4 * Hp + Hp * 4 * Hp + 4 * Hp + Hp * Op + Op        # resident weights
        + 2 * tile_b * TB * (I + Op)                            # x / out double buffers
        + tile_b * (2 * Hp + TB * Hp + TB * 4 * Hp))            # h, c, hs, xproj
    vmem_limit = int(min(max(2 * vmem_bytes, 16 * 1024 * 1024), 64 * 1024 * 1024))

    out_p = pl.pallas_call(
        _lstm_block_kernel,
        out_shape=jax.ShapeDtypeStruct((B_pad, T_pad, Op), jnp.float32),
        grid=grid,
        in_specs=[
            pl.BlockSpec((tile_b, TB, I), lambda b, t: (b, t, 0)),   # x block
            pl.BlockSpec((I, 4 * Hp), lambda b, t: (0, 0)),          # W_ih^T (resident)
            pl.BlockSpec((Hp, 4 * Hp), lambda b, t: (0, 0)),         # W_hh^T (resident)
            pl.BlockSpec((1, 4 * Hp), lambda b, t: (0, 0)),          # folded LSTM bias
            pl.BlockSpec((Hp, Op), lambda b, t: (0, 0)),             # W_fc^T (resident)
            pl.BlockSpec((1, Op), lambda b, t: (0, 0)),              # b_fc
        ],
        out_specs=pl.BlockSpec((tile_b, TB, Op), lambda b, t: (b, t, 0)),
        scratch_shapes=[
            pltpu.VMEM((tile_b, Hp), jnp.float32),        # h carry
            pltpu.VMEM((tile_b, Hp), jnp.float32),        # c carry
            pltpu.VMEM((tile_b, TB, Hp), jnp.float32),    # block hidden states
        ],
        compiler_params=pltpu.CompilerParams(
            dimension_semantics=("parallel", "arbitrary"),
            vmem_limit_bytes=vmem_limit),
    )(x, wih_p, whh_p, bias_p, wfc_p, bfc_p)

    return out_p[:B, :T, :O]


def make_params(key, input_size, hidden_size, output_size):
    """Deterministic synthetic parameters matching PyTorch LSTM/Linear shapes."""
    ks = jax.random.split(key, 6)
    bound = 1.0 / jnp.sqrt(jnp.float32(hidden_size))

    def u(k, shape):
        return jax.random.uniform(k, shape, jnp.float32, -bound, bound)

    w_ih = u(ks[0], (4 * hidden_size, input_size))
    w_hh = u(ks[1], (4 * hidden_size, hidden_size))
    b_ih = u(ks[2], (4 * hidden_size,))
    b_hh = u(ks[3], (4 * hidden_size,))
    w_fc = u(ks[4], (output_size, hidden_size))
    b_fc = u(ks[5], (output_size,))
    return (w_ih, w_hh, b_ih, b_hh, w_fc, b_fc)


def lstm_model_reference(x, params):
    """Pure-JAX reference of the same PyTorch forward (h0 = c0 = 0)."""
    w_ih, w_hh, b_ih, b_hh, w_fc, b_fc = params
    B, T, _ = x.shape
    H = w_hh.shape[1]

    def step(carry, x_t):
        h, c = carry
        gates = x_t @ w_ih.T + h @ w_hh.T + b_ih + b_hh
        i = jax.nn.sigmoid(gates[:, 0 * H:1 * H])
        f = jax.nn.sigmoid(gates[:, 1 * H:2 * H])
        g = jnp.tanh(gates[:, 2 * H:3 * H])
        o = jax.nn.sigmoid(gates[:, 3 * H:4 * H])
        c = f * c + i * g
        h = o * jnp.tanh(c)
        return (h, c), h

    h0 = jnp.zeros((B, H), jnp.float32)
    c0 = jnp.zeros((B, H), jnp.float32)
    _, hs = jax.lax.scan(step, (h0, c0), jnp.transpose(x, (1, 0, 2)))
    out = jnp.transpose(hs, (1, 0, 2)) @ w_fc.T + b_fc
    return out


if __name__ == "__main__":
    key = jax.random.PRNGKey(0)
    k_x, k_p = jax.random.split(key)

    B, T, input_size, hidden_size, output_size = 2, 8, 16, 32, 8

    x = jax.random.normal(k_x, (B, T, input_size), jnp.float32)
    params = make_params(k_p, input_size, hidden_size, output_size)

    out = lstm_model_forward(x, params)
    out = jax.block_until_ready(out)

    ref = lstm_model_reference(x, params)
    assert out.shape == (B, T, output_size)
    assert jnp.allclose(out, ref, atol=1e-5, rtol=1e-5)

    print("KERNEL_OK")
</pallas_src>

<mosaic_0001>
module attributes {stable_mosaic.version = 11 : i64} {
  func.func @_lstm_block_kernel(%arg0: i32, %arg1: i32, %arg2: memref<8x8x16xf32, #tpu.memory_space<vmem>>, %arg3: memref<16x512xf32, #tpu.memory_space<vmem>>, %arg4: memref<128x512xf32, #tpu.memory_space<vmem>>, %arg5: memref<1x512xf32, #tpu.memory_space<vmem>>, %arg6: memref<128x128xf32, #tpu.memory_space<vmem>>, %arg7: memref<1x128xf32, #tpu.memory_space<vmem>>, %arg8: memref<8x8x128xf32, #tpu.memory_space<vmem>>, %arg9: memref<8x128xf32, #tpu.memory_space<vmem>>, %arg10: memref<8x128xf32, #tpu.memory_space<vmem>>, %arg11: memref<8x8x128xf32, #tpu.memory_space<vmem>>) attributes {dimension_semantics = [#tpu.dimension_semantics<parallel>, #tpu.dimension_semantics<arbitrary>], iteration_bounds = array<i64: 1, 1>, scalar_prefetch = 0 : i64, scratch_operands = 3 : i64, tpu.core_type = #tpu.core_type<tc>, window_params = [{transform_indices = @transform_0, window_bounds = array<i64: 8, 8, 16>}, {pipeline_mode = #tpu.pipeline_mode<synchronous>, transform_indices = @transform_1, window_bounds = array<i64: 16, 512>}, {pipeline_mode = #tpu.pipeline_mode<synchronous>, transform_indices = @transform_2, window_bounds = array<i64: 128, 512>}, {pipeline_mode = #tpu.pipeline_mode<synchronous>, transform_indices = @transform_3, window_bounds = array<i64: 1, 512>}, {pipeline_mode = #tpu.pipeline_mode<synchronous>, transform_indices = @transform_4, window_bounds = array<i64: 128, 128>}, {pipeline_mode = #tpu.pipeline_mode<synchronous>, transform_indices = @transform_5, window_bounds = array<i64: 1, 128>}, {transform_indices = @transform_6, window_bounds = array<i64: 8, 8, 128>}]} {
    %c0_i32 = arith.constant 0 : i32
    %0 = arith.cmpi eq, %arg1, %c0_i32 : i32
    %1 = arith.extui %0 : i1 to i32
    %c0_i32_0 = arith.constant 0 : i32
    %2 = arith.cmpi ne, %1, %c0_i32_0 : i32
    scf.if %2 {
      %cst_77 = arith.constant 0.000000e+00 : f32
      %273 = vector.broadcast %cst_77 : f32 to vector<8x128xf32>
      %c0_78 = arith.constant 0 : index
      %c0_79 = arith.constant 0 : index
      %274 = vector.load %arg9[%c0_78, %c0_79] : memref<8x128xf32, #tpu.memory_space<vmem>>, vector<8x128xf32>
      tpu.vector_store %arg9[%c0_78, %c0_79], %273 {strides = array<i32>} : memref<8x128xf32, #tpu.memory_space<vmem>>, vector<8x128xf32>,
      %cst_80 = arith.constant 0.000000e+00 : f32
      %275 = vector.broadcast %cst_80 : f32 to vector<8x128xf32>
      %c0_81 = arith.constant 0 : index
      %c0_82 = arith.constant 0 : index
      %276 = vector.load %arg10[%c0_81, %c0_82] : memref<8x128xf32, #tpu.memory_space<vmem>>, vector<8x128xf32>
      tpu.vector_store %arg10[%c0_81, %c0_82], %275 {strides = array<i32>} : memref<8x128xf32, #tpu.memory_space<vmem>>, vector<8x128xf32>,
    } else {
    }
    %c0 = arith.constant 0 : index
    %c0_1 = arith.constant 0 : index
    %c0_2 = arith.constant 0 : index
    %3 = vector.load %arg2[%c0, %c0_1, %c0_2] : memref<8x8x16xf32, #tpu.memory_space<vmem>>, vector<8x8x16xf32>
    %4 = vector.shape_cast %3 : vector<8x8x16xf32> to vector<64x16xf32>
    %c0_3 = arith.constant 0 : index
    %c0_4 = arith.constant 0 : index
    %5 = vector.load %arg3[%c0_3, %c0_4] : memref<16x512xf32, #tpu.memory_space<vmem>>, vector<16x512xf32>
    %cst = arith.constant dense<0.000000e+00> : vector<64x512xf32>
    %6 = tpu.matmul %4, %5, %cst {dimension_numbers = #tpu.dot_dimension_numbers<[1], [0], [0], [1], [0, 0, 1, 1], [], []>} : vector<64x16xf32>, vector<16x512xf32>, vector<64x512xf32> -> vector<64x512xf32>
    %c0_5 = arith.constant 0 : index
    %c0_6 = arith.constant 0 : index
    %7 = vector.load %arg5[%c0_5, %c0_6] : memref<1x512xf32, #tpu.memory_space<vmem>>, vector<1x512xf32>
    %8 = vector.broadcast %7 : vector<1x512xf32> to vector<64x512xf32>
    %9 = arith.addf %6, %8 : vector<64x512xf32>
    %10 = vector.shape_cast %9 : vector<64x512xf32> to vector<8x8x512xf32>
    %c0_7 = arith.constant 0 : index
    %c0_8 = arith.constant 0 : index
    %11 = vector.load %arg9[%c0_7, %c0_8] : memref<8x128xf32, #tpu.memory_space<vmem>>, vector<8x128xf32>
    %c0_9 = arith.constant 0 : index
    %c0_10 = arith.constant 0 : index
    %12 = vector.load %arg10[%c0_9, %c0_10] : memref<8x128xf32, #tpu.memory_space<vmem>>, vector<8x128xf32>
    %c0_11 = arith.constant 0 : index
    %c0_12 = arith.constant 0 : index
    %13 = vector.load %arg4[%c0_11, %c0_12] : memref<128x512xf32, #tpu.memory_space<vmem>>, vector<128x512xf32>
    %14 = vector.extract_strided_slice %10 {offsets = [0, 0, 0], sizes = [8, 1, 512], strides = [1, 1, 1]} : vector<8x8x512xf32> to vector<8x1x512xf32>
    %15 = vector.shape_cast %14 : vector<8x1x512xf32> to vector<8x512xf32>
    %cst_13 = arith.constant dense<0.000000e+00> : vector<8x512xf32>
    %16 = tpu.matmul %11, %13, %cst_13 {dimension_numbers = #tpu.dot_dimension_numbers<[1], [0], [0], [1], [0, 0, 1, 1], [], []>} : vector<8x128xf32>, vector<128x512xf32>, vector<8x512xf32> -> vector<8x512xf32>
    %17 = arith.addf %15, %16 : vector<8x512xf32>
    %18 = vector.extract_strided_slice %17 {offsets = [0, 0], sizes = [8, 128], strides = [1, 1]} : vector<8x512xf32> to vector<8x128xf32>
    %19 = arith.negf %18 : vector<8x128xf32>
    %20 = math.exp %19 : vector<8x128xf32>
    %cst_14 = arith.constant 1.000000e+00 : f32
    %21 = vector.broadcast %cst_14 : f32 to vector<8x128xf32>
    %22 = arith.addf %21, %20 : vector<8x128xf32>
    %23 = arith.divf %21, %22 : vector<8x128xf32>
    %24 = vector.extract_strided_slice %17 {offsets = [0, 128], sizes = [8, 128], strides = [1, 1]} : vector<8x512xf32> to vector<8x128xf32>
    %25 = arith.negf %24 : vector<8x128xf32>
    %26 = math.exp %25 : vector<8x128xf32>
    %cst_15 = arith.constant 1.000000e+00 : f32
    %27 = vector.broadcast %cst_15 : f32 to vector<8x128xf32>
    %28 = arith.addf %27, %26 : vector<8x128xf32>
    %29 = arith.divf %27, %28 : vector<8x128xf32>
    %30 = vector.extract_strided_slice %17 {offsets = [0, 256], sizes = [8, 128], strides = [1, 1]} : vector<8x512xf32> to vector<8x128xf32>
    %31 = math.tanh %30 : vector<8x128xf32>
    %32 = vector.extract_strided_slice %17 {offsets = [0, 384], sizes = [8, 128], strides = [1, 1]} : vector<8x512xf32> to vector<8x128xf32>
    %33 = arith.negf %32 : vector<8x128xf32>
    %34 = math.exp %33 : vector<8x128xf32>
    %cst_16 = arith.constant 1.000000e+00 : f32
    %35 = vector.broadcast %cst_16 : f32 to vector<8x128xf32>
    %36 = arith.addf %35, %34 : vector<8x128xf32>
    %37 = arith.divf %35, %36 : vector<8x128xf32>
    %38 = arith.mulf %29, %12 : vector<8x128xf32>
    %39 = arith.mulf %23, %31 : vector<8x128xf32>
    %40 = arith.addf %38, %39 : vector<8x128xf32>
    %41 = math.tanh %40 : vector<8x128xf32>
    %42 = arith.mulf %37, %41 : vector<8x128xf32>
    %43 = vector.shape_cast %42 : vector<8x128xf32> to vector<8x1x128xf32>
    %c0_17 = arith.constant 0 : index
    %c0_18 = arith.constant 0 : index
    %c0_19 = arith.constant 0 : index
    %44 = vector.load %arg11[%c0_17, %c0_18, %c0_19] : memref<8x8x128xf32, #tpu.memory_space<vmem>>, vector<8x1x128xf32>
    tpu.vector_store %arg11[%c0_17, %c0_18, %c0_19], %43 {strides = array<i32>} : memref<8x8x128xf32, #tpu.memory_space<vmem>>, vector<8x1x128xf32>,
    %45 = vector.extract_strided_slice %10 {offsets = [0, 1, 0], sizes = [8, 1, 512], strides = [1, 1, 1]} : vector<8x8x512xf32> to vector<8x1x512xf32>
    %46 = vector.shape_cast %45 : vector<8x1x512xf32> to vector<8x512xf32>
    %cst_20 = arith.constant dense<0.000000e+00> : vector<8x512xf32>
    %47 = tpu.matmul %42, %13, %cst_20 {dimension_numbers = #tpu.dot_dimension_numbers<[1], [0], [0], [1], [0, 0, 1, 1], [], []>} : vector<8x128xf32>, vector<128x512xf32>, vector<8x512xf32> -> vector<8x512xf32>
    %48 = arith.addf %46, %47 : vector<8x512xf32>
    %49 = vector.extract_strided_slice %48 {offsets = [0, 0], sizes = [8, 128], strides = [1, 1]} : vector<8x512xf32> to vector<8x128xf32>
    %50 = arith.negf %49 : vector<8x128xf32>
    %51 = math.exp %50 : vector<8x128xf32>
    %cst_21 = arith.constant 1.000000e+00 : f32
    %52 = vector.broadcast %cst_21 : f32 to vector<8x128xf32>
    %53 = arith.addf %52, %51 : vector<8x128xf32>
    %54 = arith.divf %52, %53 : vector<8x128xf32>
    %55 = vector.extract_strided_slice %48 {offsets = [0, 128], sizes = [8, 128], strides = [1, 1]} : vector<8x512xf32> to vector<8x128xf32>
    %56 = arith.negf %55 : vector<8x128xf32>
    %57 = math.exp %56 : vector<8x128xf32>
    %cst_22 = arith.constant 1.000000e+00 : f32
    %58 = vector.broadcast %cst_22 : f32 to vector<8x128xf32>
    %59 = arith.addf %58, %57 : vector<8x128xf32>
    %60 = arith.divf %58, %59 : vector<8x128xf32>
    %61 = vector.extract_strided_slice %48 {offsets = [0, 256], sizes = [8, 128], strides = [1, 1]} : vector<8x512xf32> to vector<8x128xf32>
    %62 = math.tanh %61 : vector<8x128xf32>
    %63 = vector.extract_strided_slice %48 {offsets = [0, 384], sizes = [8, 128], strides = [1, 1]} : vector<8x512xf32> to vector<8x128xf32>
    %64 = arith.negf %63 : vector<8x128xf32>
    %65 = math.exp %64 : vector<8x128xf32>
    %cst_23 = arith.constant 1.000000e+00 : f32
    %66 = vector.broadcast %cst_23 : f32 to vector<8x128xf32>
    %67 = arith.addf %66, %65 : vector<8x128xf32>
    %68 = arith.divf %66, %67 : vector<8x128xf32>
    %69 = arith.mulf %60, %40 : vector<8x128xf32>
    %70 = arith.mulf %54, %62 : vector<8x128xf32>
    %71 = arith.addf %69, %70 : vector<8x128xf32>
    %72 = math.tanh %71 : vector<8x128xf32>
    %73 = arith.mulf %68, %72 : vector<8x128xf32>
    %74 = vector.shape_cast %73 : vector<8x128xf32> to vector<8x1x128xf32>
    %c0_24 = arith.constant 0 : index
    %c1 = arith.constant 1 : index
    %c0_25 = arith.constant 0 : index
    %75 = vector.load %arg11[%c0_24, %c1, %c0_25] : memref<8x8x128xf32, #tpu.memory_space<vmem>>, vector<8x1x128xf32>
    tpu.vector_store %arg11[%c0_24, %c1, %c0_25], %74 {strides = array<i32>} : memref<8x8x128xf32, #tpu.memory_space<vmem>>, vector<8x1x128xf32>,
    %76 = vector.extract_strided_slice %10 {offsets = [0, 2, 0], sizes = [8, 1, 512], strides = [1, 1, 1]} : vector<8x8x512xf32> to vector<8x1x512xf32>
    %77 = vector.shape_cast %76 : vector<8x1x512xf32> to vector<8x512xf32>
    %cst_26 = arith.constant dense<0.000000e+00> : vector<8x512xf32>
    %78 = tpu.matmul %73, %13, %cst_26 {dimension_numbers = #tpu.dot_dimension_numbers<[1], [0], [0], [1], [0, 0, 1, 1], [], []>} : vector<8x128xf32>, vector<128x512xf32>, vector<8x512xf32> -> vector<8x512xf32>
    %79 = arith.addf %77, %78 : vector<8x512xf32>
    %80 = vector.extract_strided_slice %79 {offsets = [0, 0], sizes = [8, 128], strides = [1, 1]} : vector<8x512xf32> to vector<8x128xf32>
    %81 = arith.negf %80 : vector<8x128xf32>
    %82 = math.exp %81 : vector<8x128xf32>
    %cst_27 = arith.constant 1.000000e+00 : f32
    %83 = vector.broadcast %cst_27 : f32 to vector<8x128xf32>
    %84 = arith.addf %83, %82 : vector<8x128xf32>
    %85 = arith.divf %83, %84 : vector<8x128xf32>
    %86 = vector.extract_strided_slice %79 {offsets = [0, 128], sizes = [8, 128], strides = [1, 1]} : vector<8x512xf32> to vector<8x128xf32>
    %87 = arith.negf %86 : vector<8x128xf32>
    %88 = math.exp %87 : vector<8x128xf32>
    %cst_28 = arith.constant 1.000000e+00 : f32
    %89 = vector.broadcast %cst_28 : f32 to vector<8x128xf32>
    %90 = arith.addf %89, %88 : vector<8x128xf32>
    %91 = arith.divf %89, %90 : vector<8x128xf32>
    %92 = vector.extract_strided_slice %79 {offsets = [0, 256], sizes = [8, 128], strides = [1, 1]} : vector<8x512xf32> to vector<8x128xf32>
    %93 = math.tanh %92 : vector<8x128xf32>
    %94 = vector.extract_strided_slice %79 {offsets = [0, 384], sizes = [8, 128], strides = [1, 1]} : vector<8x512xf32> to vector<8x128xf32>
    %95 = arith.negf %94 : vector<8x128xf32>
    %96 = math.exp %95 : vector<8x128xf32>
    %cst_29 = arith.constant 1.000000e+00 : f32
    %97 = vector.broadcast %cst_29 : f32 to vector<8x128xf32>
    %98 = arith.addf %97, %96 : vector<8x128xf32>
    %99 = arith.divf %97, %98 : vector<8x128xf32>
    %100 = arith.mulf %91, %71 : vector<8x128xf32>
    %101 = arith.mulf %85, %93 : vector<8x128xf32>
    %102 = arith.addf %100, %101 : vector<8x128xf32>
    %103 = math.tanh %102 : vector<8x128xf32>
    %104 = arith.mulf %99, %103 : vector<8x128xf32>
    %105 = vector.shape_cast %104 : vector<8x128xf32> to vector<8x1x128xf32>
    %c0_30 = arith.constant 0 : index
    %c2 = arith.constant 2 : index
    %c0_31 = arith.constant 0 : index
    %106 = vector.load %arg11[%c0_30, %c2, %c0_31] : memref<8x8x128xf32, #tpu.memory_space<vmem>>, vector<8x1x128xf32>
    tpu.vector_store %arg11[%c0_30, %c2, %c0_31], %105 {strides = array<i32>} : memref<8x8x128xf32, #tpu.memory_space<vmem>>, vector<8x1x128xf32>,
    %107 = vector.extract_strided_slice %10 {offsets = [0, 3, 0], sizes = [8, 1, 512], strides = [1, 1, 1]} : vector<8x8x512xf32> to vector<8x1x512xf32>
    %108 = vector.shape_cast %107 : vector<8x1x512xf32> to vector<8x512xf32>
    %cst_32 = arith.constant dense<0.000000e+00> : vector<8x512xf32>
    %109 = tpu.matmul %104, %13, %cst_32 {dimension_numbers = #tpu.dot_dimension_numbers<[1], [0], [0], [1], [0, 0, 1, 1], [], []>} : vector<8x128xf32>, vector<128x512xf32>, vector<8x512xf32> -> vector<8x512xf32>
    %110 = arith.addf %108, %109 : vector<8x512xf32>
    %111 = vector.extract_strided_slice %110 {offsets = [0, 0], sizes = [8, 128], strides = [1, 1]} : vector<8x512xf32> to vector<8x128xf32>
    %112 = arith.negf %111 : vector<8x128xf32>
    %113 = math.exp %112 : vector<8x128xf32>
    %cst_33 = arith.constant 1.000000e+00 : f32
    %114 = vector.broadcast %cst_33 : f32 to vector<8x128xf32>
    %115 = arith.addf %114, %113 : vector<8x128xf32>
    %116 = arith.divf %114, %115 : vector<8x128xf32>
    %117 = vector.extract_strided_slice %110 {offsets = [0, 128], sizes = [8, 128], strides = [1, 1]} : vector<8x512xf32> to vector<8x128xf32>
    %118 = arith.negf %117 : vector<8x128xf32>
    %119 = math.exp %118 : vector<8x128xf32>
    %cst_34 = arith.constant 1.000000e+00 : f32
    %120 = vector.broadcast %cst_34 : f32 to vector<8x128xf32>
    %121 = arith.addf %120, %119 : vector<8x128xf32>
    %122 = arith.divf %120, %121 : vector<8x128xf32>
    %123 = vector.extract_strided_slice %110 {offsets = [0, 256], sizes = [8, 128], strides = [1, 1]} : vector<8x512xf32> to vector<8x128xf32>
    %124 = math.tanh %123 : vector<8x128xf32>
    %125 = vector.extract_strided_slice %110 {offsets = [0, 384], sizes = [8, 128], strides = [1, 1]} : vector<8x512xf32> to vector<8x128xf32>
    %126 = arith.negf %125 : vector<8x128xf32>
    %127 = math.exp %126 : vector<8x128xf32>
    %cst_35 = arith.constant 1.000000e+00 : f32
    %128 = vector.broadcast %cst_35 : f32 to vector<8x128xf32>
    %129 = arith.addf %128, %127 : vector<8x128xf32>
    %130 = arith.divf %128, %129 : vector<8x128xf32>
    %131 = arith.mulf %122, %102 : vector<8x128xf32>
    %132 = arith.mulf %116, %124 : vector<8x128xf32>
    %133 = arith.addf %131, %132 : vector<8x128xf32>
    %134 = math.tanh %133 : vector<8x128xf32>
    %135 = arith.mulf %130, %134 : vector<8x128xf32>
    %136 = vector.shape_cast %135 : vector<8x128xf32> to vector<8x1x128xf32>
    %c0_36 = arith.constant 0 : index
    %c3 = arith.constant 3 : index
    %c0_37 = arith.constant 0 : index
    %137 = vector.load %arg11[%c0_36, %c3, %c0_37] : memref<8x8x128xf32, #tpu.memory_space<vmem>>, vector<8x1x128xf32>
    tpu.vector_store %arg11[%c0_36, %c3, %c0_37], %136 {strides = array<i32>} : memref<8x8x128xf32, #tpu.memory_space<vmem>>, vector<8x1x128xf32>,
    %138 = vector.extract_strided_slice %10 {offsets = [0, 4, 0], sizes = [8, 1, 512], strides = [1, 1, 1]} : vector<8x8x512xf32> to vector<8x1x512xf32>
    %139 = vector.shape_cast %138 : vector<8x1x512xf32> to vector<8x512xf32>
    %cst_38 = arith.constant dense<0.000000e+00> : vector<8x512xf32>
    %140 = tpu.matmul %135, %13, %cst_38 {dimension_numbers = #tpu.dot_dimension_numbers<[1], [0], [0], [1], [0, 0, 1, 1], [], []>} : vector<8x128xf32>, vector<128x512xf32>, vector<8x512xf32> -> vector<8x512xf32>
    %141 = arith.addf %139, %140 : vector<8x512xf32>
    %142 = vector.extract_strided_slice %141 {offsets = [0, 0], sizes = [8, 128], strides = [1, 1]} : vector<8x512xf32> to vector<8x128xf32>
    %143 = arith.negf %142 : vector<8x128xf32>
    %144 = math.exp %143 : vector<8x128xf32>
    %cst_39 = arith.constant 1.000000e+00 : f32
    %145 = vector.broadcast %cst_39 : f32 to vector<8x128xf32>
    %146 = arith.addf %145, %144 : vector<8x128xf32>
    %147 = arith.divf %145, %146 : vector<8x128xf32>
    %148 = vector.extract_strided_slice %141 {offsets = [0, 128], sizes = [8, 128], strides = [1, 1]} : vector<8x512xf32> to vector<8x128xf32>
    %149 = arith.negf %148 : vector<8x128xf32>
    %150 = math.exp %149 : vector<8x128xf32>
    %cst_40 = arith.constant 1.000000e+00 : f32
    %151 = vector.broadcast %cst_40 : f32 to vector<8x128xf32>
    %152 = arith.addf %151, %150 : vector<8x128xf32>
    %153 = arith.divf %151, %152 : vector<8x128xf32>
    %154 = vector.extract_strided_slice %141 {offsets = [0, 256], sizes = [8, 128], strides = [1, 1]} : vector<8x512xf32> to vector<8x128xf32>
    %155 = math.tanh %154 : vector<8x128xf32>
    %156 = vector.extract_strided_slice %141 {offsets = [0, 384], sizes = [8, 128], strides = [1, 1]} : vector<8x512xf32> to vector<8x128xf32>
    %157 = arith.negf %156 : vector<8x128xf32>
    %158 = math.exp %157 : vector<8x128xf32>
    %cst_41 = arith.constant 1.000000e+00 : f32
    %159 = vector.broadcast %cst_41 : f32 to vector<8x128xf32>
    %160 = arith.addf %159, %158 : vector<8x128xf32>
    %161 = arith.divf %159, %160 : vector<8x128xf32>
    %162 = arith.mulf %153, %133 : vector<8x128xf32>
    %163 = arith.mulf %147, %155 : vector<8x128xf32>
    %164 = arith.addf %162, %163 : vector<8x128xf32>
    %165 = math.tanh %164 : vector<8x128xf32>
    %166 = arith.mulf %161, %165 : vector<8x128xf32>
    %167 = vector.shape_cast %166 : vector<8x128xf32> to vector<8x1x128xf32>
    %c0_42 = arith.constant 0 : index
    %c4 = arith.constant 4 : index
    %c0_43 = arith.constant 0 : index
    %168 = vector.load %arg11[%c0_42, %c4, %c0_43] : memref<8x8x128xf32, #tpu.memory_space<vmem>>, vector<8x1x128xf32>
    tpu.vector_store %arg11[%c0_42, %c4, %c0_43], %167 {strides = array<i32>} : memref<8x8x128xf32, #tpu.memory_space<vmem>>, vector<8x1x128xf32>,
    %169 = vector.extract_strided_slice %10 {offsets = [0, 5, 0], sizes = [8, 1, 512], strides = [1, 1, 1]} : vector<8x8x512xf32> to vector<8x1x512xf32>
    %170 = vector.shape_cast %169 : vector<8x1x512xf32> to vector<8x512xf32>
    %cst_44 = arith.constant dense<0.000000e+00> : vector<8x512xf32>
    %171 = tpu.matmul %166, %13, %cst_44 {dimension_numbers = #tpu.dot_dimension_numbers<[1], [0], [0], [1], [0, 0, 1, 1], [], []>} : vector<8x128xf32>, vector<128x512xf32>, vector<8x512xf32> -> vector<8x512xf32>
    %172 = arith.addf %170, %171 : vector<8x512xf32>
    %173 = vector.extract_strided_slice %172 {offsets = [0, 0], sizes = [8, 128], strides = [1, 1]} : vector<8x512xf32> to vector<8x128xf32>
    %174 = arith.negf %173 : vector<8x128xf32>
    %175 = math.exp %174 : vector<8x128xf32>
    %cst_45 = arith.constant 1.000000e+00 : f32
    %176 = vector.broadcast %cst_45 : f32 to vector<8x128xf32>
    %177 = arith.addf %176, %175 : vector<8x128xf32>
    %178 = arith.divf %176, %177 : vector<8x128xf32>
    %179 = vector.extract_strided_slice %172 {offsets = [0, 128], sizes = [8, 128], strides = [1, 1]} : vector<8x512xf32> to vector<8x128xf32>
    %180 = arith.negf %179 : vector<8x128xf32>
    %181 = math.exp %180 : vector<8x128xf32>
    %cst_46 = arith.constant 1.000000e+00 : f32
    %182 = vector.broadcast %cst_46 : f32 to vector<8x128xf32>
    %183 = arith.addf %182, %181 : vector<8x128xf32>
    %184 = arith.divf %182, %183 : vector<8x128xf32>
    %185 = vector.extract_strided_slice %172 {offsets = [0, 256], sizes = [8, 128], strides = [1, 1]} : vector<8x512xf32> to vector<8x128xf32>
    %186 = math.tanh %185 : vector<8x128xf32>
    %187 = vector.extract_strided_slice %172 {offsets = [0, 384], sizes = [8, 128], strides = [1, 1]} : vector<8x512xf32> to vector<8x128xf32>
    %188 = arith.negf %187 : vector<8x128xf32>
    %189 = math.exp %188 : vector<8x128xf32>
    %cst_47 = arith.constant 1.000000e+00 : f32
    %190 = vector.broadcast %cst_47 : f32 to vector<8x128xf32>
    %191 = arith.addf %190, %189 : vector<8x128xf32>
    %192 = arith.divf %190, %191 : vector<8x128xf32>
    %193 = arith.mulf %184, %164 : vector<8x128xf32>
    %194 = arith.mulf %178, %186 : vector<8x128xf32>
    %195 = arith.addf %193, %194 : vector<8x128xf32>
    %196 = math.tanh %195 : vector<8x128xf32>
    %197 = arith.mulf %192, %196 : vector<8x128xf32>
    %198 = vector.shape_cast %197 : vector<8x128xf32> to vector<8x1x128xf32>
    %c0_48 = arith.constant 0 : index
    %c5 = arith.constant 5 : index
    %c0_49 = arith.constant 0 : index
    %199 = vector.load %arg11[%c0_48, %c5, %c0_49] : memref<8x8x128xf32, #tpu.memory_space<vmem>>, vector<8x1x128xf32>
    tpu.vector_store %arg11[%c0_48, %c5, %c0_49], %198 {strides = array<i32>} : memref<8x8x128xf32, #tpu.memory_space<vmem>>, vector<8x1x128xf32>,
    %200 = vector.extract_strided_slice %10 {offsets = [0, 6, 0], sizes = [8, 1, 512], strides = [1, 1, 1]} : vector<8x8x512xf32> to vector<8x1x512xf32>
    %201 = vector.shape_cast %200 : vector<8x1x512xf32> to vector<8x512xf32>
    %cst_50 = arith.constant dense<0.000000e+00> : vector<8x512xf32>
    %202 = tpu.matmul %197, %13, %cst_50 {dimension_numbers = #tpu.dot_dimension_numbers<[1], [0], [0], [1], [0, 0, 1, 1], [], []>} : vector<8x128xf32>, vector<128x512xf32>, vector<8x512xf32> -> vector<8x512xf32>
    %203 = arith.addf %201, %202 : vector<8x512xf32>
    %204 = vector.extract_strided_slice %203 {offsets = [0, 0], sizes = [8, 128], strides = [1, 1]} : vector<8x512xf32> to vector<8x128xf32>
    %205 = arith.negf %204 : vector<8x128xf32>
    %206 = math.exp %205 : vector<8x128xf32>
    %cst_51 = arith.constant 1.000000e+00 : f32
    %207 = vector.broadcast %cst_51 : f32 to vector<8x128xf32>
    %208 = arith.addf %207, %206 : vector<8x128xf32>
    %209 = arith.divf %207, %208 : vector<8x128xf32>
    %210 = vector.extract_strided_slice %203 {offsets = [0, 128], sizes = [8, 128], strides = [1, 1]} : vector<8x512xf32> to vector<8x128xf32>
    %211 = arith.negf %210 : vector<8x128xf32>
    %212 = math.exp %211 : vector<8x128xf32>
    %cst_52 = arith.constant 1.000000e+00 : f32
    %213 = vector.broadcast %cst_52 : f32 to vector<8x128xf32>
    %214 = arith.addf %213, %212 : vector<8x128xf32>
    %215 = arith.divf %213, %214 : vector<8x128xf32>
    %216 = vector.extract_strided_slice %203 {offsets = [0, 256], sizes = [8, 128], strides = [1, 1]} : vector<8x512xf32> to vector<8x128xf32>
    %217 = math.tanh %216 : vector<8x128xf32>
    %218 = vector.extract_strided_slice %203 {offsets = [0, 384], sizes = [8, 128], strides = [1, 1]} : vector<8x512xf32> to vector<8x128xf32>
    %219 = arith.negf %218 : vector<8x128xf32>
    %220 = math.exp %219 : vector<8x128xf32>
    %cst_53 = arith.constant 1.000000e+00 : f32
    %221 = vector.broadcast %cst_53 : f32 to vector<8x128xf32>
    %222 = arith.addf %221, %220 : vector<8x128xf32>
    %223 = arith.divf %221, %222 : vector<8x128xf32>
    %224 = arith.mulf %215, %195 : vector<8x128xf32>
    %225 = arith.mulf %209, %217 : vector<8x128xf32>
    %226 = arith.addf %224, %225 : vector<8x128xf32>
    %227 = math.tanh %226 : vector<8x128xf32>
    %228 = arith.mulf %223, %227 : vector<8x128xf32>
    %229 = vector.shape_cast %228 : vector<8x128xf32> to vector<8x1x128xf32>
    %c0_54 = arith.constant 0 : index
    %c6 = arith.constant 6 : index
    %c0_55 = arith.constant 0 : index
    %230 = vector.load %arg11[%c0_54, %c6, %c0_55] : memref<8x8x128xf32, #tpu.memory_space<vmem>>, vector<8x1x128xf32>
    tpu.vector_store %arg11[%c0_54, %c6, %c0_55], %229 {strides = array<i32>} : memref<8x8x128xf32, #tpu.memory_space<vmem>>, vector<8x1x128xf32>,
    %231 = vector.extract_strided_slice %10 {offsets = [0, 7, 0], sizes = [8, 1, 512], strides = [1, 1, 1]} : vector<8x8x512xf32> to vector<8x1x512xf32>
    %232 = vector.shape_cast %231 : vector<8x1x512xf32> to vector<8x512xf32>
    %cst_56 = arith.constant dense<0.000000e+00> : vector<8x512xf32>
    %233 = tpu.matmul %228, %13, %cst_56 {dimension_numbers = #tpu.dot_dimension_numbers<[1], [0], [0], [1], [0, 0, 1, 1], [], []>} : vector<8x128xf32>, vector<128x512xf32>, vector<8x512xf32> -> vector<8x512xf32>
    %234 = arith.addf %232, %233 : vector<8x512xf32>
    %235 = vector.extract_strided_slice %234 {offsets = [0, 0], sizes = [8, 128], strides = [1, 1]} : vector<8x512xf32> to vector<8x128xf32>
    %236 = arith.negf %235 : vector<8x128xf32>
    %237 = math.exp %236 : vector<8x128xf32>
    %cst_57 = arith.constant 1.000000e+00 : f32
    %238 = vector.broadcast %cst_57 : f32 to vector<8x128xf32>
    %239 = arith.addf %238, %237 : vector<8x128xf32>
    %240 = arith.divf %238, %239 : vector<8x128xf32>
    %241 = vector.extract_strided_slice %234 {offsets = [0, 128], sizes = [8, 128], strides = [1, 1]} : vector<8x512xf32> to vector<8x128xf32>
    %242 = arith.negf %241 : vector<8x128xf32>
    %243 = math.exp %242 : vector<8x128xf32>
    %cst_58 = arith.constant 1.000000e+00 : f32
    %244 = vector.broadcast %cst_58 : f32 to vector<8x128xf32>
    %245 = arith.addf %244, %243 : vector<8x128xf32>
    %246 = arith.divf %244, %245 : vector<8x128xf32>
    %247 = vector.extract_strided_slice %234 {offsets = [0, 256], sizes = [8, 128], strides = [1, 1]} : vector<8x512xf32> to vector<8x128xf32>
    %248 = math.tanh %247 : vector<8x128xf32>
    %249 = vector.extract_strided_slice %234 {offsets = [0, 384], sizes = [8, 128], strides = [1, 1]} : vector<8x512xf32> to vector<8x128xf32>
    %250 = arith.negf %249 : vector<8x128xf32>
    %251 = math.exp %250 : vector<8x128xf32>
    %cst_59 = arith.constant 1.000000e+00 : f32
    %252 = vector.broadcast %cst_59 : f32 to vector<8x128xf32>
    %253 = arith.addf %252, %251 : vector<8x128xf32>
    %254 = arith.divf %252, %253 : vector<8x128xf32>
    %255 = arith.mulf %246, %226 : vector<8x128xf32>
    %256 = arith.mulf %240, %248 : vector<8x128xf32>
    %257 = arith.addf %255, %256 : vector<8x128xf32>
    %258 = math.tanh %257 : vector<8x128xf32>
    %259 = arith.mulf %254, %258 : vector<8x128xf32>
    %260 = vector.shape_cast %259 : vector<8x128xf32> to vector<8x1x128xf32>
    %c0_60 = arith.constant 0 : index
    %c7 = arith.constant 7 : index
    %c0_61 = arith.constant 0 : index
    %261 = vector.load %arg11[%c0_60, %c7, %c0_61] : memref<8x8x128xf32, #tpu.memory_space<vmem>>, vector<8x1x128xf32>
    tpu.vector_store %arg11[%c0_60, %c7, %c0_61], %260 {strides = array<i32>} : memref<8x8x128xf32, #tpu.memory_space<vmem>>, vector<8x1x128xf32>,
    %c0_62 = arith.constant 0 : index
    %c0_63 = arith.constant 0 : index
    %262 = vector.load %arg9[%c0_62, %c0_63] : memref<8x128xf32, #tpu.memory_space<vmem>>, vector<8x128xf32>
    tpu.vector_store %arg9[%c0_62, %c0_63], %259 {strides = array<i32>} : memref<8x128xf32, #tpu.memory_space<vmem>>, vector<8x128xf32>,
    %c0_64 = arith.constant 0 : index
    %c0_65 = arith.constant 0 : index
    %263 = vector.load %arg10[%c0_64, %c0_65] : memref<8x128xf32, #tpu.memory_space<vmem>>, vector<8x128xf32>
    tpu.vector_store %arg10[%c0_64, %c0_65], %257 {strides = array<i32>} : memref<8x128xf32, #tpu.memory_space<vmem>>, vector<8x128xf32>,
    %c0_66 = arith.constant 0 : index
    %c0_67 = arith.constant 0 : index
    %c0_68 = arith.constant 0 : index
    %264 = vector.load %arg11[%c0_66, %c0_67, %c0_68] : memref<8x8x128xf32, #tpu.memory_space<vmem>>, vector<8x8x128xf32>
    %265 = vector.shape_cast %264 : vector<8x8x128xf32> to vector<64x128xf32>
    %c0_69 = arith.constant 0 : index
    %c0_70 = arith.constant 0 : index
    %266 = vector.load %arg6[%c0_69, %c0_70] : memref<128x128xf32, #tpu.memory_space<vmem>>, vector<128x128xf32>
    %cst_71 = arith.constant dense<0.000000e+00> : vector<64x128xf32>
    %267 = tpu.matmul %265, %266, %cst_71 {dimension_numbers = #tpu.dot_dimension_numbers<[1], [0], [0], [1], [0, 0, 1, 1], [], []>} : vector<64x128xf32>, vector<128x128xf32>, vector<64x128xf32> -> vector<64x128xf32>
    %c0_72 = arith.constant 0 : index
    %c0_73 = arith.constant 0 : index
    %268 = vector.load %arg7[%c0_72, %c0_73] : memref<1x128xf32, #tpu.memory_space<vmem>>, vector<1x128xf32>
    %269 = vector.broadcast %268 : vector<1x128xf32> to vector<64x128xf32>
    %270 = arith.addf %267, %269 : vector<64x128xf32>
    %271 = vector.shape_cast %270 : vector<64x128xf32> to vector<8x8x128xf32>
    %c0_74 = arith.constant 0 : index
    %c0_75 = arith.constant 0 : index
    %c0_76 = arith.constant 0 : index
    %272 = vector.load %arg8[%c0_74, %c0_75, %c0_76] : memref<8x8x128xf32, #tpu.memory_space<vmem>>, vector<8x8x128xf32>
    tpu.vector_store %arg8[%c0_74, %c0_75, %c0_76], %271 {strides = array<i32>} : memref<8x8x128xf32, #tpu.memory_space<vmem>>, vector<8x8x128xf32>,
    return
  }
  func.func @transform_0(%arg0: i32, %arg1: i32) -> (i32, i32, i32) {
    %c0_i32 = arith.constant 0 : i32
    %c0_i32_0 = arith.constant 0 : i32
    return %arg0, %arg1, %c0_i32 : i32, i32, i32
  }
  func.func @transform_1(%arg0: i32, %arg1: i32) -> (i32, i32) {
    %c0_i32 = arith.constant 0 : i32
    %c0_i32_0 = arith.constant 0 : i32
    %c0_i32_1 = arith.constant 0 : i32
    return %c0_i32, %c0_i32_0 : i32, i32
  }
  func.func @transform_2(%arg0: i32, %arg1: i32) -> (i32, i32) {
    %c0_i32 = arith.constant 0 : i32
    %c0_i32_0 = arith.constant 0 : i32
    %c0_i32_1 = arith.constant 0 : i32
    return %c0_i32, %c0_i32_0 : i32, i32
  }
  func.func @transform_3(%arg0: i32, %arg1: i32) -> (i32, i32) {
    %c0_i32 = arith.constant 0 : i32
    %c0_i32_0 = arith.constant 0 : i32
    %c0_i32_1 = arith.constant 0 : i32
    return %c0_i32, %c0_i32_0 : i32, i32
  }
  func.func @transform_4(%arg0: i32, %arg1: i32) -> (i32, i32) {
    %c0_i32 = arith.constant 0 : i32
    %c0_i32_0 = arith.constant 0 : i32
    %c0_i32_1 = arith.constant 0 : i32
    return %c0_i32, %c0_i32_0 : i32, i32
  }
  func.func @transform_5(%arg0: i32, %arg1: i32) -> (i32, i32) {
    %c0_i32 = arith.constant 0 : i32
    %c0_i32_0 = arith.constant 0 : i32
    %c0_i32_1 = arith.constant 0 : i32
    return %c0_i32, %c0_i32_0 : i32, i32
  }
  func.func @transform_6(%arg0: i32, %arg1: i32) -> (i32, i32, i32) {
    %c0_i32 = arith.constant 0 : i32
    %c0_i32_0 = arith.constant 0 : i32
    return %arg0, %arg1, %c0_i32 : i32, i32, i32
  }
}

</mosaic_0001>

<llo_original>
// kernel: tpu_custom_call.1
$region0: #{tpu_custom_call.1}
  #allocation0 [shape = 'u32[]', space=smem, size = 0x4, offset = 0x4, fixed_abs, tag = 'smem constant byte address 0x4 - core index']
  #allocation1 [shape = 'u32[144,128]{1,0:T(1,128)}', space=vmem, size = 0x12000, scoped, tag = 'internal scratch']
  #allocation2 [shape = 'f32[8,128]{1,0:T(8,128)}', space=vmem, size = 0x1000, scoped, tag = 'scratch operand']
  #allocation3 [shape = 'f32[8,128]{1,0:T(8,128)}', space=vmem, size = 0x1000, scoped, tag = 'scratch operand']
  #allocation4 [shape = 'f32[8,8,128]{2,1,0:T(8,128)}', space=vmem, size = 0x8000, scoped, tag = 'scratch operand']
  %s0 = inlined_call_operand.hbm [shape: f32[8,8,16], index: 0, kind: input, shape index: {}]
  %s1 = inlined_call_operand.hbm [shape: f32[16,512], index: 1, kind: input, shape index: {}]
  %s2 = inlined_call_operand.hbm [shape: f32[128,512], index: 2, kind: input, shape index: {}]
  %s3 = inlined_call_operand.vmem [shape: f32[1,512], index: 3, kind: input, shape index: {}]
  %s4 = inlined_call_operand.hbm [shape: f32[128,128], index: 4, kind: input, shape index: {}]
  %s5 = inlined_call_operand.vmem [shape: f32[1,128], index: 5, kind: input, shape index: {}]
  %s6 = inlined_call_operand.hbm [shape: f32[8,8,128], index: 6, kind: output, shape index: {}]
  %s7 = sld [smem:[#allocation0]]
  $region54: #{tpu_custom_call.1} parent=0
    _
  %s9 = ssub.s32 1, %s7
  %s10 = scalar_select 0, %s9, %s7
  $region1: #{tpu_custom_call.1} parent=0
    #allocation5 [shape = 'u8[32768]{0}', space=vmem, size = 0x8000, scoped, tag = 'input window, operand 0, single buffered']
    #allocation6 [shape = 's32[1]{0}', space=sflag, size = 0x4, scoped, tag = 'scoped memory for tpu_custom_call.1']
    #allocation7 [shape = 's32[1]{0}', space=sflag, size = 0x4, scoped, tag = 'scoped memory for tpu_custom_call.1']
    #allocation8 [shape = 'u8[32768]{0}', space=vmem, size = 0x8000, scoped, tag = 'input window, operand 1, single buffered']
    #allocation9 [shape = 's32[1]{0}', space=sflag, size = 0x4, scoped, tag = 'scoped memory for tpu_custom_call.1']
    #allocation10 [shape = 'u8[262144]{0}', space=vmem, size = 0x40000, scoped, tag = 'input window, operand 2, single buffered']
    #allocation11 [shape = 'u8[65536]{0}', space=vmem, size = 0x10000, scoped, tag = 'input window, operand 4, single buffered']
    #allocation12 [shape = 's32[1]{0}', space=sflag, size = 0x4, scoped, tag = 'scoped memory for tpu_custom_call.1']
    #allocation13 [shape = 'u8[32768]{0}', space=vmem, size = 0x8000, scoped, tag = 'output window, operand 0, single buffered']
    %11 = vsyncpa [#allocation6], 0
    %12 = vsyncpa [#allocation9], 0
    %13 = vsyncpa [#allocation12], 0
    %14 = vsyncpa [#allocation7], 0
    // Predicated region
    $region2: #{tpu_custom_call.1} parent=1 // pred_check
      _
    $region3: #{tpu_custom_call.1} parent=1 // pred_check_branch
      %16 = sbr.rel (0) target = $region5
    $region4: #{tpu_custom_call.1} parent=1 // pred_region
      %s18 = ssub.s32 1024, 1024
      %19 = vsyncadd [#allocation6], %s18
      %s20 = sshll.u32 [#allocation5], 4
      %s21 = int_to_ptr.vmem [resolvable:$true] %s20
      %26 = dma.hbm_to_vmem [thread:$0]  %s0, 1024, %s21, [#allocation6], 128, 128, 8
    $region5: #{tpu_custom_call.1} parent=1 // pred_fallthru
      _
    // Predicated region
    $region6: #{tpu_custom_call.1} parent=1 // pred_check
      _
    $region7: #{tpu_custom_call.1} parent=1 // pred_check_branch
      %28 = sbr.rel (0) target = $region9
    $region8: #{tpu_custom_call.1} parent=1 // pred_region
      %s30 = ssub.s32 1024, 1024
      %31 = vsyncadd [#allocation9], %s30
      %s32 = sshll.u32 [#allocation8], 4
      %s33 = int_to_ptr.vmem [resolvable:$true] %s32
      %38 = dma.hbm_to_vmem [thread:$0]  %s1, 1024, %s33, [#allocation9], 512, 512, 32
    $region9: #{tpu_custom_call.1} parent=1 // pred_fallthru
      _
    // Predicated region
    $region10: #{tpu_custom_call.1} parent=1 // pred_check
      _
    $region11: #{tpu_custom_call.1} parent=1 // pred_check_branch
      %40 = sbr.rel (0) target = $region13
    $region12: #{tpu_custom_call.1} parent=1 // pred_region
      %s42 = ssub.s32 8192, 8192
      %43 = vsyncadd [#allocation9], %s42
      %s44 = sshll.u32 [#allocation10], 4
      %s45 = int_to_ptr.vmem [resolvable:$true] %s44
      %50 = dma.hbm_to_vmem [thread:$0]  %s2, 8192, %s45, [#allocation9], 512, 512, 32
    $region13: #{tpu_custom_call.1} parent=1 // pred_fallthru
      _
    // Predicated region
    $region14: #{tpu_custom_call.1} parent=1 // pred_check
      _
    $region15: #{tpu_custom_call.1} parent=1 // pred_check_branch
      %52 = sbr.rel (0) target = $region17
    $region16: #{tpu_custom_call.1} parent=1 // pred_region
      _
    $region17: #{tpu_custom_call.1} parent=1 // pred_fallthru
      _
    // Predicated region
    $region18: #{tpu_custom_call.1} parent=1 // pred_check
      _
    $region19: #{tpu_custom_call.1} parent=1 // pred_check_branch
      %54 = sbr.rel (0) target = $region21
    $region20: #{tpu_custom_call.1} parent=1 // pred_region
      %s56 = ssub.s32 2048, 2048
      %57 = vsyncadd [#allocation12], %s56
      %s58 = sshll.u32 [#allocation11], 4
      %s59 = int_to_ptr.vmem [resolvable:$true] %s58
      %64 = dma.hbm_to_vmem [thread:$0]  %s4, 2048, %s59, [#allocation12], 128, 128, 8
    $region21: #{tpu_custom_call.1} parent=1 // pred_fallthru
      _
    // Predicated region
    $region22: #{tpu_custom_call.1} parent=1 // pred_check
      _
    $region23: #{tpu_custom_call.1} parent=1 // pred_check_branch
      %66 = sbr.rel (0) target = $region25
    $region24: #{tpu_custom_call.1} parent=1 // pred_region
      _
    $region25: #{tpu_custom_call.1} parent=1 // pred_fallthru
      _
    // Predicated region
    $region26: #{tpu_custom_call.1} parent=1 // pred_check
      _
    $region27: #{tpu_custom_call.1} parent=1 // pred_check_branch
      %68 = sbr.rel (0) target = $region29
    $region28: #{tpu_custom_call.1} parent=1 // pred_region
      %69 = dma.done [#allocation6], 1024
    $region29: #{tpu_custom_call.1} parent=1 // pred_fallthru
      _
    // Predicated region
    $region30: #{tpu_custom_call.1} parent=1 // pred_check
      _
    $region31: #{tpu_custom_call.1} parent=1 // pred_check_branch
      %71 = sbr.rel (0) target = $region33
    $region32: #{tpu_custom_call.1} parent=1 // pred_region
      %72 = dma.done [#allocation9], 1024
    $region33: #{tpu_custom_call.1} parent=1 // pred_fallthru
      _
    // Predicated region
    $region34: #{tpu_custom_call.1} parent=1 // pred_check
      _
    $region35: #{tpu_custom_call.1} parent=1 // pred_check_branch
      %74 = sbr.rel (0) target = $region37
    $region36: #{tpu_custom_call.1} parent=1 // pred_region
      %75 = dma.done [#allocation9], 8192
    $region37: #{tpu_custom_call.1} parent=1 // pred_fallthru
      _
    // Predicated region
    $region38: #{tpu_custom_call.1} parent=1 // pred_check
      _
    $region39: #{tpu_custom_call.1} parent=1 // pred_check_branch
      %77 = sbr.rel (0) target = $region41
    $region40: #{tpu_custom_call.1} parent=1 // pred_region
      %78 = dma.done [#allocation12], 2048
    $region41: #{tpu_custom_call.1} parent=1 // pred_fallthru
      _
    %p79 = scmp.eq.s32.totalorder 0, 0
    // Predicated region
    $region42: #{tpu_custom_call.1} parent=1 // pred_check
      %p80 = pneg %p79
    $region43: #{tpu_custom_call.1} parent=1 // pred_check_branch
      %82 = sbr.rel (%p80) target = $region45
    $region44: #{tpu_custom_call.1} parent=1 // pred_region
      %83 = vst [vmem:[#allocation2] sm:$0xff] 0.0
      %84 = vst [vmem:[#allocation3] sm:$0xff] 0.0
    $region45: #{tpu_custom_call.1} parent=1 // pred_fallthru
      _
    %v85 = vld [vmem:[#allocation5] sm:$0xff]
    %v86 = vld [vmem:[#allocation5 + $0x8] sm:$0xff]
    %v87 = vld [vmem:[#allocation5 + $0x10] sm:$0xff]
    %v88 = vld [vmem:[#allocation5 + $0x18] sm:$0xff]
    %v89 = vld [vmem:[#allocation5 + $0x20] sm:$0xff]
    %v90 = vld [vmem:[#allocation5 + $0x28] sm:$0xff]
    %v91 = vld [vmem:[#allocation5 + $0x30] sm:$0xff]
    %v92 = vld [vmem:[#allocation5 + $0x38] sm:$0xff]
    %v93 = vld [vmem:[#allocation8] sm:$0xff]
    %v94 = vld [vmem:[#allocation8 + $0x8] sm:$0xff]
    %v95 = vld [vmem:[#allocation8 + $0x10] sm:$0xff]
    %v96 = vld [vmem:[#allocation8 + $0x18] sm:$0xff]
    %v97 = vld [vmem:[#allocation8 + $0x20] sm:$0xff]
    %v98 = vld [vmem:[#allocation8 + $0x28] sm:$0xff]
    %v99 = vld [vmem:[#allocation8 + $0x30] sm:$0xff]
    %v100 = vld [vmem:[#allocation8 + $0x38] sm:$0xff]
    %v101 = vld [vmem:[%s3] sm:$0xf]
    %v103 = vlaneseq
    %v104 = vshrl.u32 %v103, 7
    %v105 = vsub.s32 0, %v104
    %v106 = vrot.slane %v101, %v105
    %v107 = vlaneseq
    %v108 = vshrl.u32 %v107, 7
    %v109 = vsub.s32 1, %v108
    %v110 = vrot.slane %v101, %v109
    %v111 = vlaneseq
    %v112 = vshrl.u32 %v111, 7
    %v113 = vsub.s32 2, %v112
    %v114 = vrot.slane %v101, %v113
    %v115 = vlaneseq
    %v116 = vshrl.u32 %v115, 7
    %v117 = vsub.s32 3, %v116
    %v118 = vrot.slane %v101, %v117
    %vm123 = vcmask 130048
    %v125 = vsel %vm123, %v85, 0
    %v128 = vsel %vm123, %v86, 0
    %v131 = vsel %vm123, %v87, 0
    %v134 = vsel %vm123, %v88, 0
    %v137 = vsel %vm123, %v89, 0
    %v140 = vsel %vm123, %v90, 0
    %v143 = vsel %vm123, %v91, 0
    %v146 = vsel %vm123, %v92, 0
    %148 = vmatprep.subr.mxu0 %v94
    %149 = vmatpush1.msra.mxu0 %v93
    %150 = vmatprep.subr.mxu0 %v98
    %151 = vmatpush1.msra.mxu0 %v97
    %152 = vmatprep.subr.mxu0 0.0
    %153 = vmatpush1.msra.mxu0 0.0
    %154 = vmatprep.subr.mxu0 0.0
    %155 = vmatpush1.msra.mxu0 0.0
    %156 = vmatprep.subr.mxu0 0.0
    %157 = vmatpush1.msra.mxu0 0.0
    %158 = vmatprep.subr.mxu0 0.0
    %159 = vmatpush1.msra.mxu0 0.0
    %160 = vmatprep.subr.mxu0 0.0
    %161 = vmatpush1.msra.mxu0 0.0
    %162 = vmatprep.subr.mxu0 0.0
    %163 = vmatpush1.msra.mxu0 0.0
    %164 = vmatprep.subr.mxu0 0.0
    %165 = vmatpush1.msra.mxu0 0.0
    %166 = vmatprep.subr.mxu0 0.0
    %167 = vmatpush1.msra.mxu0 0.0
    %168 = vmatprep.subr.mxu0 0.0
    %169 = vmatpush1.msra.mxu0 0.0
    %170 = vmatprep.subr.mxu0 0.0
    %171 = vmatpush1.msra.mxu0 0.0
    %172 = vmatprep.subr.mxu0 0.0
    %173 = vmatpush1.msra.mxu0 0.0
    %174 = vmatprep.subr.mxu0 0.0
    %175 = vmatpush1.msra.mxu0 0.0
    %176 = vmatprep.subr.mxu0 0.0
    %177 = vmatpush1.msra.mxu0 0.0
    %178 = vmatprep.subr.mxu0 0.0
    %179 = vmatpush1.msra.mxu0 0.0
    %180 = vmatprep.subr.mxu0 0.0
    %181 = vmatpush1.msra.mxu0 0.0
    %182 = vmatprep.subr.mxu0 0.0
    %183 = vmatpush1.msra.mxu0 0.0
    %184 = vmatprep.subr.mxu0 0.0
    %185 = vmatpush1.msra.mxu0 0.0
    %186 = vmatprep.subr.mxu0 0.0
    %187 = vmatpush1.msra.mxu0 0.0
    %188 = vmatprep.subr.mxu0 0.0
    %189 = vmatpush1.msra.mxu0 0.0
    %190 = vmatprep.subr.mxu0 0.0
    %191 = vmatpush1.msra.mxu0 0.0
    %192 = vmatprep.subr.mxu0 0.0
    %193 = vmatpush1.msra.mxu0 0.0
    %194 = vmatprep.subr.mxu0 0.0
    %195 = vmatpush1.msra.mxu0 0.0
    %196 = vmatprep.subr.mxu0 0.0
    %197 = vmatpush1.msra.mxu0 0.0
    %198 = vmatprep.subr.mxu0 0.0
    %199 = vmatpush1.msra.mxu0 0.0
    %200 = vmatprep.subr.mxu0 0.0
    %201 = vmatpush1.msra.mxu0 0.0
    %202 = vmatprep.subr.mxu0 0.0
    %203 = vmatpush1.msra.mxu0 0.0
    %204 = vmatprep.subr.mxu0 0.0
    %205 = vmatpush1.msra.mxu0 0.0
    %206 = vmatprep.subr.mxu0 0.0
    %207 = vmatpush1.msra.mxu0 0.0
    %208 = vmatprep.subr.mxu0 0.0
    %209 = vmatpush1.msra.mxu0 0.0
    %210 = vmatprep.subr.mxu0 0.0
    %211 = vmatpush1.msra.mxu0 0.0
    %212 = vmatprep.mubr.f32.mxu0 0.0
    %213 = vmatmul.mubr.f32.gmra.mrb[0].mxu0 %v125
    %v214 = vpop.f32.mrb[0].mxu0
    %v215 = vadd.f32 %v106, %v214
    %v216 = vpop.f32.mrb[0].mxu0
    %v217 = vadd.f32 %v110, %v216
    %218 = vmatprep.mubr.f32.mxu0 0.0
    %219 = vmatmul.mubr.f32.gmra.mrb[0].mxu0 %v128
    %v220 = vpop.f32.mrb[0].mxu0
    %v221 = vadd.f32 %v106, %v220
    %v222 = vpop.f32.mrb[0].mxu0
    %v223 = vadd.f32 %v110, %v222
    %224 = vmatprep.mubr.f32.mxu0 0.0
    %225 = vmatmul.mubr.f32.gmra.mrb[0].mxu0 %v131
    %v226 = vpop.f32.mrb[0].mxu0
    %v227 = vadd.f32 %v106, %v226
    %v228 = vpop.f32.mrb[0].mxu0
    %v229 = vadd.f32 %v110, %v228
    %230 = vmatprep.mubr.f32.mxu0 0.0
    %231 = vmatmul.mubr.f32.gmra.mrb[0].mxu0 %v134
    %v232 = vpop.f32.mrb[0].mxu0
    %v233 = vadd.f32 %v106, %v232
    %v234 = vpop.f32.mrb[0].mxu0
    %v235 = vadd.f32 %v110, %v234
    %236 = vmatprep.mubr.f32.mxu0 0.0
    %237 = vmatmul.mubr.f32.gmra.mrb[0].mxu0 %v137
    %v238 = vpop.f32.mrb[0].mxu0
    %v239 = vadd.f32 %v106, %v238
    %v240 = vpop.f32.mrb[0].mxu0
    %v241 = vadd.f32 %v110, %v240
    %242 = vmatprep.mubr.f32.mxu0 0.0
    %243 = vmatmul.mubr.f32.gmra.mrb[0].mxu0 %v140
    %v244 = vpop.f32.mrb[0].mxu0
    %v245 = vadd.f32 %v106, %v244
    %v246 = vpop.f32.mrb[0].mxu0
    %v247 = vadd.f32 %v110, %v246
    %248 = vmatprep.mubr.f32.mxu0 0.0
    %249 = vmatmul.mubr.f32.gmra.mrb[0].mxu0 %v143
    %v250 = vpop.f32.mrb[0].mxu0
    %v251 = vadd.f32 %v106, %v250
    %v252 = vpop.f32.mrb[0].mxu0
    %v253 = vadd.f32 %v110, %v252
    %254 = vmatprep.mubr.f32.mxu0 0.0
    %255 = vmatmul.mubr.f32.gmra.mrb[0].mxu0 %v146
    %v256 = vpop.f32.mrb[0].mxu0
    %v257 = vadd.f32 %v106, %v256
    %v258 = vpop.f32.mrb[0].mxu0
    %v259 = vadd.f32 %v110, %v258
    %260 = vdwg.mxu0
    %261 = vmatprep.subr.mxu0 %v96
    %262 = vmatpush1.msra.mxu0 %v95
    %263 = vmatprep.subr.mxu0 %v100
    %264 = vmatpush1.msra.mxu0 %v99
    %265 = vmatprep.subr.mxu0 0.0
    %266 = vmatpush1.msra.mxu0 0.0
    %267 = vmatprep.subr.mxu0 0.0
    %268 = vmatpush1.msra.mxu0 0.0
    %269 = vmatprep.subr.mxu0 0.0
    %270 = vmatpush1.msra.mxu0 0.0
    %271 = vmatprep.subr.mxu0 0.0
    %272 = vmatpush1.msra.mxu0 0.0
    %273 = vmatprep.subr.mxu0 0.0
    %274 = vmatpush1.msra.mxu0 0.0
    %275 = vmatprep.subr.mxu0 0.0
    %276 = vmatpush1.msra.mxu0 0.0
    %277 = vmatprep.subr.mxu0 0.0
    %278 = vmatpush1.msra.mxu0 0.0
    %279 = vmatprep.subr.mxu0 0.0
    %280 = vmatpush1.msra.mxu0 0.0
    %281 = vmatprep.subr.mxu0 0.0
    %282 = vmatpush1.msra.mxu0 0.0
    %283 = vmatprep.subr.mxu0 0.0
    %284 = vmatpush1.msra.mxu0 0.0
    %285 = vmatprep.subr.mxu0 0.0
    %286 = vmatpush1.msra.mxu0 0.0
    %287 = vmatprep.subr.mxu0 0.0
    %288 = vmatpush1.msra.mxu0 0.0
    %289 = vmatprep.subr.mxu0 0.0
    %290 = vmatpush1.msra.mxu0 0.0
    %291 = vmatprep.subr.mxu0 0.0
    %292 = vmatpush1.msra.mxu0 0.0
    %293 = vmatprep.subr.mxu0 0.0
    %294 = vmatpush1.msra.mxu0 0.0
    %295 = vmatprep.subr.mxu0 0.0
    %296 = vmatpush1.msra.mxu0 0.0
    %297 = vmatprep.subr.mxu0 0.0
    %298 = vmatpush1.msra.mxu0 0.0
    %299 = vmatprep.subr.mxu0 0.0
    %300 = vmatpush1.msra.mxu0 0.0
    %301 = vmatprep.subr.mxu0 0.0
    %302 = vmatpush1.msra.mxu0 0.0
    %303 = vmatprep.subr.mxu0 0.0
    %304 = vmatpush1.msra.mxu0 0.0
    %305 = vmatprep.subr.mxu0 0.0
    %306 = vmatpush1.msra.mxu0 0.0
    %307 = vmatprep.subr.mxu0 0.0
    %308 = vmatpush1.msra.mxu0 0.0
    %309 = vmatprep.subr.mxu0 0.0
    %310 = vmatpush1.msra.mxu0 0.0
    %311 = vmatprep.subr.mxu0 0.0
    %312 = vmatpush1.msra.mxu0 0.0
    %313 = vmatprep.subr.mxu0 0.0
    %314 = vmatpush1.msra.mxu0 0.0
    %315 = vmatprep.subr.mxu0 0.0
    %316 = vmatpush1.msra.mxu0 0.0
    %317 = vmatprep.subr.mxu0 0.0
    %318 = vmatpush1.msra.mxu0 0.0
    %319 = vmatprep.subr.mxu0 0.0
    %320 = vmatpush1.msra.mxu0 0.0
    %321 = vmatprep.subr.mxu0 0.0
    %322 = vmatpush1.msra.mxu0 0.0
    %323 = vmatprep.subr.mxu0 0.0
    %324 = vmatpush1.msra.mxu0 0.0
    %325 = vmatprep.mubr.f32.mxu0 0.0
    %326 = vmatmul.mubr.f32.gmra.mrb[0].mxu0 %v125
    %v327 = vpop.f32.mrb[0].mxu0
    %v328 = vadd.f32 %v114, %v327
    %v329 = vpop.f32.mrb[0].mxu0
    %v330 = vadd.f32 %v118, %v329
    %331 = vmatprep.mubr.f32.mxu0 0.0
    %332 = vmatmul.mubr.f32.gmra.mrb[0].mxu0 %v128
    %v333 = vpop.f32.mrb[0].mxu0
    %v334 = vadd.f32 %v114, %v333
    %v335 = vpop.f32.mrb[0].mxu0
    %v336 = vadd.f32 %v118, %v335
    %337 = vmatprep.mubr.f32.mxu0 0.0
    %338 = vmatmul.mubr.f32.gmra.mrb[0].mxu0 %v131
    %v339 = vpop.f32.mrb[0].mxu0
    %v340 = vadd.f32 %v114, %v339
    %v341 = vpop.f32.mrb[0].mxu0
    %v342 = vadd.f32 %v118, %v341
    %343 = vmatprep.mubr.f32.mxu0 0.0
    %344 = vmatmul.mubr.f32.gmra.mrb[0].mxu0 %v134
    %v345 = vpop.f32.mrb[0].mxu0
    %v346 = vadd.f32 %v114, %v345
    %v347 = vpop.f32.mrb[0].mxu0
    %v348 = vadd.f32 %v118, %v347
    %349 = vmatprep.mubr.f32.mxu0 0.0
    %350 = vmatmul.mubr.f32.gmra.mrb[0].mxu0 %v137
    %v351 = vpop.f32.mrb[0].mxu0
    %v352 = vadd.f32 %v114, %v351
    %v353 = vpop.f32.mrb[0].mxu0
    %v354 = vadd.f32 %v118, %v353
    %355 = vmatprep.mubr.f32.mxu0 0.0
    %356 = vmatmul.mubr.f32.gmra.mrb[0].mxu0 %v140
    %v357 = vpop.f32.mrb[0].mxu0
    %v358 = vadd.f32 %v114, %v357
    %v359 = vpop.f32.mrb[0].mxu0
    %v360 = vadd.f32 %v118, %v359
    %361 = vmatprep.mubr.f32.mxu0 0.0
    %362 = vmatmul.mubr.f32.gmra.mrb[0].mxu0 %v143
    %v363 = vpop.f32.mrb[0].mxu0
    %v364 = vadd.f32 %v114, %v363
    %v365 = vpop.f32.mrb[0].mxu0
    %v366 = vadd.f32 %v118, %v365
    %367 = vmatprep.mubr.f32.mxu0 0.0
    %368 = vmatmul.mubr.f32.gmra.mrb[0].mxu0 %v146
    %v369 = vpop.f32.mrb[0].mxu0
    %v370 = vadd.f32 %v114, %v369
    %v371 = vpop.f32.mrb[0].mxu0
    %v372 = vadd.f32 %v118, %v371
    %373 = vdwg.mxu0
    %v374 = vld [vmem:[#allocation2] sm:$0xff]
    %v375 = vld [vmem:[#allocation3] sm:$0xff]
    %v376 = vld [vmem:[#allocation10] sm:$0xff]
    %v377 = vld [vmem:[#allocation10 + $0x8] sm:$0xff]
    %v378 = vld [vmem:[#allocation10 + $0x10] sm:$0xff]
    %v379 = vld [vmem:[#allocation10 + $0x18] sm:$0xff]
    %v380 = vld [vmem:[#allocation10 + $0x20] sm:$0xff]
    %v381 = vld [vmem:[#allocation10 + $0x28] sm:$0xff]
    %v382 = vld [vmem:[#allocation10 + $0x30] sm:$0xff]
    %v383 = vld [vmem:[#allocation10 + $0x38] sm:$0xff]
    %v384 = vld [vmem:[#allocation10 + $0x40] sm:$0xff]
    %v385 = vld [vmem:[#allocation10 + $0x48] sm:$0xff]
    %v386 = vld [vmem:[#allocation10 + $0x50] sm:$0xff]
    %v387 = vld [vmem:[#allocation10 + $0x58] sm:$0xff]
    %v388 = vld [vmem:[#allocation10 + $0x60] sm:$0xff]
    %v389 = vld [vmem:[#allocation10 + $0x68] sm:$0xff]
    %v390 = vld [vmem:[#allocation10 + $0x70] sm:$0xff]
    %v391 = vld [vmem:[#allocation10 + $0x78] sm:$0xff]
    %v392 = vld [vmem:[#allocation10 + $0x80] sm:$0xff]
    %v393 = vld [vmem:[#allocation10 + $0x88] sm:$0xff]
    %v394 = vld [vmem:[#allocation10 + $0x90] sm:$0xff]
    %v395 = vld [vmem:[#allocation10 + $0x98] sm:$0xff]
    %v396 = vld [vmem:[#allocation10 + $0xa0] sm:$0xff]
    %v397 = vld [vmem:[#allocation10 + $0xa8] sm:$0xff]
    %v398 = vld [vmem:[#allocation10 + $0xb0] sm:$0xff]
    %v399 = vld [vmem:[#allocation10 + $0xb8] sm:$0xff]
    %v400 = vld [vmem:[#allocation10 + $0xc0] sm:$0xff]
    %v401 = vld [vmem:[#allocation10 + $0xc8] sm:$0xff]
    %v402 = vld [vmem:[#allocation10 + $0xd0] sm:$0xff]
    %v403 = vld [vmem:[#allocation10 + $0xd8] sm:$0xff]
    %v404 = vld [vmem:[#allocation10 + $0xe0] sm:$0xff]
    %v405 = vld [vmem:[#allocation10 + $0xe8] sm:$0xff]
    %v406 = vld [vmem:[#allocation10 + $0xf0] sm:$0xff]
    %v407 = vld [vmem:[#allocation10 + $0xf8] sm:$0xff]
    %v408 = vld [vmem:[#allocation10 + $0x100] sm:$0xff]
    %v409 = vld [vmem:[#allocation10 + $0x108] sm:$0xff]
    %v410 = vld [vmem:[#allocation10 + $0x110] sm:$0xff]
    %v411 = vld [vmem:[#allocation10 + $0x118] sm:$0xff]
    %v412 = vld [vmem:[#allocation10 + $0x120] sm:$0xff]
    %v413 = vld [vmem:[#allocation10 + $0x128] sm:$0xff]
    %v414 = vld [vmem:[#allocation10 + $0x130] sm:$0xff]
    %v415 = vld [vmem:[#allocation10 + $0x138] sm:$0xff]
    %v416 = vld [vmem:[#allocation10 + $0x140] sm:$0xff]
    %v417 = vld [vmem:[#allocation10 + $0x148] sm:$0xff]
    %v418 = vld [vmem:[#allocation10 + $0x150] sm:$0xff]
    %v419 = vld [vmem:[#allocation10 + $0x158] sm:$0xff]
    %v420 = vld [vmem:[#allocation10 + $0x160] sm:$0xff]
    %v421 = vld [vmem:[#allocation10 + $0x168] sm:$0xff]
    %v422 = vld [vmem:[#allocation10 + $0x170] sm:$0xff]
    %v423 = vld [vmem:[#allocation10 + $0x178] sm:$0xff]
    %v424 = vld [vmem:[#allocation10 + $0x180] sm:$0xff]
    %v425 = vld [vmem:[#allocation10 + $0x188] sm:$0xff]
    %v426 = vld [vmem:[#allocation10 + $0x190] sm:$0xff]
    %v427 = vld [vmem:[#allocation10 + $0x198] sm:$0xff]
    %v428 = vld [vmem:[#allocation10 + $0x1a0] sm:$0xff]
    %v429 = vld [vmem:[#allocation10 + $0x1a8] sm:$0xff]
    %v430 = vld [vmem:[#allocation10 + $0x1b0] sm:$0xff]
    %v431 = vld [vmem:[#allocation10 + $0x1b8] sm:$0xff]
    %v432 = vld [vmem:[#allocation10 + $0x1c0] sm:$0xff]
    %v433 = vld [vmem:[#allocation10 + $0x1c8] sm:$0xff]
    %v434 = vld [vmem:[#allocation10 + $0x1d0] sm:$0xff]
    %v435 = vld [vmem:[#allocation10 + $0x1d8] sm:$0xff]
    %v436 = vld [vmem:[#allocation10 + $0x1e0] sm:$0xff]
    %v437 = vld [vmem:[#allocation10 + $0x1e8] sm:$0xff]
    %v438 = vld [vmem:[#allocation10 + $0x1f0] sm:$0xff]
    %v439 = vld [vmem:[#allocation10 + $0x1f8] sm:$0xff]
    %440 = vmatprep.subr.mxu0 %v377
    %441 = vmatpush1.msra.mxu0 %v376
    %442 = vmatprep.subr.mxu0 %v381
    %443 = vmatpush1.msra.mxu0 %v380
    %444 = vmatprep.subr.mxu0 %v385
    %445 = vmatpush1.msra.mxu0 %v384
    %446 = vmatprep.subr.mxu0 %v389
    %447 = vmatpush1.msra.mxu0 %v388
    %448 = vmatprep.subr.mxu0 %v393
    %449 = vmatpush1.msra.mxu0 %v392
    %450 = vmatprep.subr.mxu0 %v397
    %451 = vmatpush1.msra.mxu0 %v396
    %452 = vmatprep.subr.mxu0 %v401
    %453 = vmatpush1.msra.mxu0 %v400
    %454 = vmatprep.subr.mxu0 %v405
    %455 = vmatpush1.msra.mxu0 %v404
    %456 = vmatprep.subr.mxu0 %v409
    %457 = vmatpush1.msra.mxu0 %v408
    %458 = vmatprep.subr.mxu0 %v413
    %459 = vmatpush1.msra.mxu0 %v412
    %460 = vmatprep.subr.mxu0 %v417
    %461 = vmatpush1.msra.mxu0 %v416
    %462 = vmatprep.subr.mxu0 %v421
    %463 = vmatpush1.msra.mxu0 %v420
    %464 = vmatprep.subr.mxu0 %v425
    %465 = vmatpush1.msra.mxu0 %v424
    %466 = vmatprep.subr.mxu0 %v429
    %467 = vmatpush1.msra.mxu0 %v428
    %468 = vmatprep.subr.mxu0 %v433
    %469 = vmatpush1.msra.mxu0 %v432
    %470 = vmatprep.subr.mxu0 %v437
    %471 = vmatpush1.msra.mxu0 %v436
    %472 = vmatprep.subr.mxu0 0.0
    %473 = vmatpush1.msra.mxu0 0.0
    %474 = vmatprep.subr.mxu0 0.0
    %475 = vmatpush1.msra.mxu0 0.0
    %476 = vmatprep.subr.mxu0 0.0
    %477 = vmatpush1.msra.mxu0 0.0
    %478 = vmatprep.subr.mxu0 0.0
    %479 = vmatpush1.msra.mxu0 0.0
    %480 = vmatprep.subr.mxu0 0.0
    %481 = vmatpush1.msra.mxu0 0.0
    %482 = vmatprep.subr.mxu0 0.0
    %483 = vmatpush1.msra.mxu0 0.0
    %484 = vmatprep.subr.mxu0 0.0
    %485 = vmatpush1.msra.mxu0 0.0
    %486 = vmatprep.subr.mxu0 0.0
    %487 = vmatpush1.msra.mxu0 0.0
    %488 = vmatprep.subr.mxu0 0.0
    %489 = vmatpush1.msra.mxu0 0.0
    %490 = vmatprep.subr.mxu0 0.0
    %491 = vmatpush1.msra.mxu0 0.0
    %492 = vmatprep.subr.mxu0 0.0
    %493 = vmatpush1.msra.mxu0 0.0
    %494 = vmatprep.subr.mxu0 0.0
    %495 = vmatpush1.msra.mxu0 0.0
    %496 = vmatprep.subr.mxu0 0.0
    %497 = vmatpush1.msra.mxu0 0.0
    %498 = vmatprep.subr.mxu0 0.0
    %499 = vmatpush1.msra.mxu0 0.0
    %500 = vmatprep.subr.mxu0 0.0
    %501 = vmatpush1.msra.mxu0 0.0
    %502 = vmatprep.subr.mxu0 0.0
    %503 = vmatpush1.msra.mxu0 0.0
    %504 = vmatprep.mubr.f32.mxu0 0.0
    %505 = vmatmul.mubr.f32.gmra.mrb[0].mxu0 %v374
    %v506 = vpop.f32.mrb[0].mxu0
    %v507 = vadd.f32 0.0, %v506
    %v508 = vpop.f32.mrb[0].mxu0
    %v509 = vadd.f32 0.0, %v508
    %510 = vdwg.mxu0
    %511 = vmatprep.subr.mxu0 %v379
    %512 = vmatpush1.msra.mxu0 %v378
    %513 = vmatprep.subr.mxu0 %v383
    %514 = vmatpush1.msra.mxu0 %v382
    %515 = vmatprep.subr.mxu0 %v387
    %516 = vmatpush1.msra.mxu0 %v386
    %517 = vmatprep.subr.mxu0 %v391
    %518 = vmatpush1.msra.mxu0 %v390
    %519 = vmatprep.subr.mxu0 %v395
    %520 = vmatpush1.msra.mxu0 %v394
    %521 = vmatprep.subr.mxu0 %v399
    %522 = vmatpush1.msra.mxu0 %v398
    %523 = vmatprep.subr.mxu0 %v403
    %524 = vmatpush1.msra.mxu0 %v402
    %525 = vmatprep.subr.mxu0 %v407
    %526 = vmatpush1.msra.mxu0 %v406
    %527 = vmatprep.subr.mxu0 %v411
    %528 = vmatpush1.msra.mxu0 %v410
    %529 = vmatprep.subr.mxu0 %v415
    %530 = vmatpush1.msra.mxu0 %v414
    %531 = vmatprep.subr.mxu0 %v419
    %532 = vmatpush1.msra.mxu0 %v418
    %533 = vmatprep.subr.mxu0 %v423
    %534 = vmatpush1.msra.mxu0 %v422
    %535 = vmatprep.subr.mxu0 %v427
    %536 = vmatpush1.msra.mxu0 %v426
    %537 = vmatprep.subr.mxu0 %v431
    %538 = vmatpush1.msra.mxu0 %v430
    %539 = vmatprep.subr.mxu0 %v435
    %540 = vmatpush1.msra.mxu0 %v434
    %541 = vmatprep.subr.mxu0 %v439
    %542 = vmatpush1.msra.mxu0 %v438
    %543 = vmatprep.subr.mxu0 0.0
    %544 = vmatpush1.msra.mxu0 0.0
    %545 = vmatprep.subr.mxu0 0.0
    %546 = vmatpush1.msra.mxu0 0.0
    %547 = vmatprep.subr.mxu0 0.0
    %548 = vmatpush1.msra.mxu0 0.0
    %549 = vmatprep.subr.mxu0 0.0
    %550 = vmatpush1.msra.mxu0 0.0
    %551 = vmatprep.subr.mxu0 0.0
    %552 = vmatpush1.msra.mxu0 0.0
    %553 = vmatprep.subr.mxu0 0.0
    %554 = vmatpush1.msra.mxu0 0.0
    %555 = vmatprep.subr.mxu0 0.0
    %556 = vmatpush1.msra.mxu0 0.0
    %557 = vmatprep.subr.mxu0 0.0
    %558 = vmatpush1.msra.mxu0 0.0
    %559 = vmatprep.subr.mxu0 0.0
    %560 = vmatpush1.msra.mxu0 0.0
    %561 = vmatprep.subr.mxu0 0.0
    %562 = vmatpush1.msra.mxu0 0.0
    %563 = vmatprep.subr.mxu0 0.0
    %564 = vmatpush1.msra.mxu0 0.0
    %565 = vmatprep.subr.mxu0 0.0
    %566 = vmatpush1.msra.mxu0 0.0
    %567 = vmatprep.subr.mxu0 0.0
    %568 = vmatpush1.msra.mxu0 0.0
    %569 = vmatprep.subr.mxu0 0.0
    %570 = vmatpush1.msra.mxu0 0.0
    %571 = vmatprep.subr.mxu0 0.0
    %572 = vmatpush1.msra.mxu0 0.0
    %573 = vmatprep.subr.mxu0 0.0
    %574 = vmatpush1.msra.mxu0 0.0
    %575 = vmatprep.mubr.f32.mxu0 0.0
    %576 = vmatmul.mubr.f32.gmra.mrb[0].mxu0 %v374
    %v577 = vpop.f32.mrb[0].mxu0
    %v578 = vadd.f32 0.0, %v577
    %v579 = vpop.f32.mrb[0].mxu0
    %v580 = vadd.f32 0.0, %v579
    %581 = vdwg.mxu0
    %v586 = vrot.slane %v507, 1
    %v587 = vrot.slane %v509, 1
    %v588 = vrot.slane %v578, 1
    %v589 = vrot.slane %v580, 1
    %v590 = vrot.slane %v507, 2
    %v591 = vrot.slane %v509, 2
    %v592 = vrot.slane %v578, 2
    %v593 = vrot.slane %v580, 2
    %v594 = vrot.slane %v507, 3
    %v595 = vrot.slane %v509, 3
    %v596 = vrot.slane %v578, 3
    %v597 = vrot.slane %v580, 3
    %v598 = vrot.slane %v507, 4
    %v599 = vrot.slane %v509, 4
    %v600 = vrot.slane %v578, 4
    %v601 = vrot.slane %v580, 4
    %v602 = vrot.slane %v507, 5
    %v603 = vrot.slane %v509, 5
    %v604 = vrot.slane %v578, 5
    %v605 = vrot.slane %v580, 5
    %v606 = vrot.slane %v507, 6
    %v607 = vrot.slane %v509, 6
    %v608 = vrot.slane %v578, 6
    %v609 = vrot.slane %v580, 6
    %v610 = vrot.slane %v507, 7
    %v611 = vrot.slane %v509, 7
    %v612 = vrot.slane %v578, 7
    %v613 = vrot.slane %v580, 7
    %v646 = vadd.f32 %v215, %v507
    %v647 = vadd.f32 %v217, %v509
    %v648 = vadd.f32 %v328, %v578
    %v649 = vadd.f32 %v330, %v580
    %v650 = vadd.f32 %v221, %v586
    %v651 = vadd.f32 %v223, %v587
    %v652 = vadd.f32 %v334, %v588
    %v653 = vadd.f32 %v336, %v589
    %v654 = vadd.f32 %v227, %v590
    %v655 = vadd.f32 %v229, %v591
    %v656 = vadd.f32 %v340, %v592
    %v657 = vadd.f32 %v342, %v593
    %v658 = vadd.f32 %v233, %v594
    %v659 = vadd.f32 %v235, %v595
    %v660 = vadd.f32 %v346, %v596
    %v661 = vadd.f32 %v348, %v597
    %v662 = vadd.f32 %v239, %v598
    %v663 = vadd.f32 %v241, %v599
    %v664 = vadd.f32 %v352, %v600
    %v665 = vadd.f32 %v354, %v601
    %v666 = vadd.f32 %v245, %v602
    %v667 = vadd.f32 %v247, %v603
    %v668 = vadd.f32 %v358, %v604
    %v669 = vadd.f32 %v360, %v605
    %v670 = vadd.f32 %v251, %v606
    %v671 = vadd.f32 %v253, %v607
    %v672 = vadd.f32 %v364, %v608
    %v673 = vadd.f32 %v366, %v609
    %v674 = vadd.f32 %v257, %v610
    %v675 = vadd.f32 %v259, %v611
    %v676 = vadd.f32 %v370, %v612
    %v677 = vadd.f32 %v372, %v613
    %v678 = vxor.u32 %v646, 2147483648
    %v679 = vxor.u32 %v650, 2147483648
    %v680 = vxor.u32 %v654, 2147483648
    %v681 = vxor.u32 %v658, 2147483648
    %v682 = vxor.u32 %v662, 2147483648
    %v683 = vxor.u32 %v666, 2147483648
    %v684 = vxor.u32 %v670, 2147483648
    %v685 = vxor.u32 %v674, 2147483648
    %v686 = vmul.f32 %v678, 1.442695
    %v687 = vpow.pop %v686
    %v688 = vmul.f32 %v679, 1.442695
    %v689 = vpow.pop %v688
    %v690 = vmul.f32 %v680, 1.442695
    %v691 = vpow.pop %v690
    %v692 = vmul.f32 %v681, 1.442695
    %v693 = vpow.pop %v692
    %v694 = vmul.f32 %v682, 1.442695
    %v695 = vpow.pop %v694
    %v696 = vmul.f32 %v683, 1.442695
    %v697 = vpow.pop %v696
    %v698 = vmul.f32 %v684, 1.442695
    %v699 = vpow.pop %v698
    %v700 = vmul.f32 %v685, 1.442695
    %v701 = vpow.pop %v700
    %v702 = vadd.f32 %v687, 1.0
    %v703 = vadd.f32 %v689, 1.0
    %v704 = vadd.f32 %v691, 1.0
    %v705 = vadd.f32 %v693, 1.0
    %v706 = vadd.f32 %v695, 1.0
    %v707 = vadd.f32 %v697, 1.0
    %v708 = vadd.f32 %v699, 1.0
    %v709 = vadd.f32 %v701, 1.0
    %v710 = vrcp.pop %v702
    %v711 = vmul.f32 1.0, %v710
    %v712 = vrcp.pop %v703
    %v713 = vmul.f32 1.0, %v712
    %v714 = vrcp.pop %v704
    %v715 = vmul.f32 1.0, %v714
    %v716 = vrcp.pop %v705
    %v717 = vmul.f32 1.0, %v716
    %v718 = vrcp.pop %v706
    %v719 = vmul.f32 1.0, %v718
    %v720 = vrcp.pop %v707
    %v721 = vmul.f32 1.0, %v720
    %v722 = vrcp.pop %v708
    %v723 = vmul.f32 1.0, %v722
    %v724 = vrcp.pop %v709
    %v725 = vmul.f32 1.0, %v724
    %v726 = vxor.u32 %v647, 2147483648
    %v727 = vxor.u32 %v651, 2147483648
    %v728 = vxor.u32 %v655, 2147483648
    %v729 = vxor.u32 %v659, 2147483648
    %v730 = vxor.u32 %v663, 2147483648
    %v731 = vxor.u32 %v667, 2147483648
    %v732 = vxor.u32 %v671, 2147483648
    %v733 = vxor.u32 %v675, 2147483648
    %v734 = vmul.f32 %v726, 1.442695
    %v735 = vpow.pop %v734
    %v736 = vmul.f32 %v727, 1.442695
    %v737 = vpow.pop %v736
    %v738 = vmul.f32 %v728, 1.442695
    %v739 = vpow.pop %v738
    %v740 = vmul.f32 %v729, 1.442695
    %v741 = vpow.pop %v740
    %v742 = vmul.f32 %v730, 1.442695
    %v743 = vpow.pop %v742
    %v744 = vmul.f32 %v731, 1.442695
    %v745 = vpow.pop %v744
    %v746 = vmul.f32 %v732, 1.442695
    %v747 = vpow.pop %v746
    %v748 = vmul.f32 %v733, 1.442695
    %v749 = vpow.pop %v748
    %v750 = vadd.f32 %v735, 1.0
    %v751 = vadd.f32 %v737, 1.0
    %v752 = vadd.f32 %v739, 1.0
    %v753 = vadd.f32 %v741, 1.0
    %v754 = vadd.f32 %v743, 1.0
    %v755 = vadd.f32 %v745, 1.0
    %v756 = vadd.f32 %v747, 1.0
    %v757 = vadd.f32 %v749, 1.0
    %v758 = vrcp.pop %v750
    %v759 = vmul.f32 1.0, %v758
    %v760 = vrcp.pop %v751
    %v761 = vmul.f32 1.0, %v760
    %v762 = vrcp.pop %v752
    %v763 = vmul.f32 1.0, %v762
    %v764 = vrcp.pop %v753
    %v765 = vmul.f32 1.0, %v764
    %v766 = vrcp.pop %v754
    %v767 = vmul.f32 1.0, %v766
    %v768 = vrcp.pop %v755
    %v769 = vmul.f32 1.0, %v768
    %v770 = vrcp.pop %v756
    %v771 = vmul.f32 1.0, %v770
    %v772 = vrcp.pop %v757
    %v773 = vmul.f32 1.0, %v772
    %v774 = vtanh.pop %v648
    %v775 = vtanh.pop %v652
    %v776 = vtanh.pop %v656
    %v777 = vtanh.pop %v660
    %v778 = vtanh.pop %v664
    %v779 = vtanh.pop %v668
    %v780 = vtanh.pop %v672
    %v781 = vtanh.pop %v676
    %v782 = vxor.u32 %v649, 2147483648
    %v783 = vxor.u32 %v653, 2147483648
    %v784 = vxor.u32 %v657, 2147483648
    %v785 = vxor.u32 %v661, 2147483648
    %v786 = vxor.u32 %v665, 2147483648
    %v787 = vxor.u32 %v669, 2147483648
    %v788 = vxor.u32 %v673, 2147483648
    %v789 = vxor.u32 %v677, 2147483648
    %v790 = vmul.f32 %v782, 1.442695
    %v791 = vpow.pop %v790
    %v792 = vmul.f32 %v783, 1.442695
    %v793 = vpow.pop %v792
    %v794 = vmul.f32 %v784, 1.442695
    %v795 = vpow.pop %v794
    %v796 = vmul.f32 %v785, 1.442695
    %v797 = vpow.pop %v796
    %v798 = vmul.f32 %v786, 1.442695
    %v799 = vpow.pop %v798
    %v800 = vmul.f32 %v787, 1.442695
    %v801 = vpow.pop %v800
    %v802 = vmul.f32 %v788, 1.442695
    %v803 = vpow.pop %v802
    %v804 = vmul.f32 %v789, 1.442695
    %v805 = vpow.pop %v804
    %v806 = vadd.f32 %v791, 1.0
    %v807 = vadd.f32 %v793, 1.0
    %v808 = vadd.f32 %v795, 1.0
    %v809 = vadd.f32 %v797, 1.0
    %v810 = vadd.f32 %v799, 1.0
    %v811 = vadd.f32 %v801, 1.0
    %v812 = vadd.f32 %v803, 1.0
    %v813 = vadd.f32 %v805, 1.0
    %v814 = vrcp.pop %v806
    %v815 = vmul.f32 1.0, %v814
    %v816 = vrcp.pop %v807
    %v817 = vmul.f32 1.0, %v816
    %v818 = vrcp.pop %v808
    %v819 = vmul.f32 1.0, %v818
    %v820 = vrcp.pop %v809
    %v821 = vmul.f32 1.0, %v820
    %v822 = vrcp.pop %v810
    %v823 = vmul.f32 1.0, %v822
    %v824 = vrcp.pop %v811
    %v825 = vmul.f32 1.0, %v824
    %v826 = vrcp.pop %v812
    %v827 = vmul.f32 1.0, %v826
    %v828 = vrcp.pop %v813
    %v829 = vmul.f32 1.0, %v828
    %v831 = vrot.slane %v375, 1
    %v832 = vrot.slane %v375, 2
    %v833 = vrot.slane %v375, 3
    %v834 = vrot.slane %v375, 4
    %v835 = vrot.slane %v375, 5
    %v836 = vrot.slane %v375, 6
    %v837 = vrot.slane %v375, 7
    %v846 = vmul.f32 %v759, %v375
    %v847 = vmul.f32 %v761, %v831
    %v848 = vmul.f32 %v763, %v832
    %v849 = vmul.f32 %v765, %v833
    %v850 = vmul.f32 %v767, %v834
    %v851 = vmul.f32 %v769, %v835
    %v852 = vmul.f32 %v771, %v836
    %v853 = vmul.f32 %v773, %v837
    %v854 = vmul.f32 %v711, %v774
    %v855 = vmul.f32 %v713, %v775
    %v856 = vmul.f32 %v715, %v776
    %v857 = vmul.f32 %v717, %v777
    %v858 = vmul.f32 %v719, %v778
    %v859 = vmul.f32 %v721, %v779
    %v860 = vmul.f32 %v723, %v780
    %v861 = vmul.f32 %v725, %v781
    %v862 = vadd.f32 %v846, %v854
    %v863 = vadd.f32 %v847, %v855
    %v864 = vadd.f32 %v848, %v856
    %v865 = vadd.f32 %v849, %v857
    %v866 = vadd.f32 %v850, %v858
    %v867 = vadd.f32 %v851, %v859
    %v868 = vadd.f32 %v852, %v860
    %v869 = vadd.f32 %v853, %v861
    %v870 = vtanh.pop %v862
    %v871 = vtanh.pop %v863
    %v872 = vtanh.pop %v864
    %v873 = vtanh.pop %v865
    %v874 = vtanh.pop %v866
    %v875 = vtanh.pop %v867
    %v876 = vtanh.pop %v868
    %v877 = vtanh.pop %v869
    %v878 = vmul.f32 %v815, %v870
    %v879 = vmul.f32 %v817, %v871
    %v880 = vmul.f32 %v819, %v872
    %v881 = vmul.f32 %v821, %v873
    %v882 = vmul.f32 %v823, %v874
    %v883 = vmul.f32 %v825, %v875
    %v884 = vmul.f32 %v827, %v876
    %v885 = vmul.f32 %v829, %v877
    %886 = vst [vmem:[#allocation4] sm:$0x1] %v878
    %887 = vst [vmem:[#allocation4 + $0x8] sm:$0x1] %v879
    %888 = vst [vmem:[#allocation4 + $0x10] sm:$0x1] %v880
    %889 = vst [vmem:[#allocation4 + $0x18] sm:$0x1] %v881
    %890 = vst [vmem:[#allocation4 + $0x20] sm:$0x1] %v882
    %891 = vst [vmem:[#allocation4 + $0x28] sm:$0x1] %v883
    %892 = vst [vmem:[#allocation4 + $0x30] sm:$0x1] %v884
    %893 = vst [vmem:[#allocation4 + $0x38] sm:$0x1] %v885
    %v902 = vrot.slane %v879, 7
    %vm903 = vcmask 1041409
    %v904 = vsel %vm903, %v902, %v878
    %v905 = vrot.slane %v880, 6
    %vm906 = vcmask 1042434
    %v907 = vsel %vm906, %v905, %v904
    %v908 = vrot.slane %v881, 5
    %vm909 = vcmask 1043459
    %v910 = vsel %vm909, %v908, %v907
    %v911 = vrot.slane %v882, 4
    %vm912 = vcmask 1044484
    %v913 = vsel %vm912, %v911, %v910
    %v914 = vrot.slane %v883, 3
    %vm915 = vcmask 1045509
    %v916 = vsel %vm915, %v914, %v913
    %v917 = vrot.slane %v884, 2
    %vm918 = vcmask 1046534
    %v919 = vsel %vm918, %v917, %v916
    %v920 = vrot.slane %v885, 1
    %vm921 = vcmask 1047559
    %v922 = vsel %vm921, %v920, %v919
    %924 = vmatprep.subr.mxu0 %v377
    %925 = vmatpush1.msra.mxu0 %v376
    %926 = vmatprep.subr.mxu0 %v381
    %927 = vmatpush1.msra.mxu0 %v380
    %928 = vmatprep.subr.mxu0 %v385
    %929 = vmatpush1.msra.mxu0 %v384
    %930 = vmatprep.subr.mxu0 %v389
    %931 = vmatpush1.msra.mxu0 %v388
    %932 = vmatprep.subr.mxu0 %v393
    %933 = vmatpush1.msra.mxu0 %v392
    %934 = vmatprep.subr.mxu0 %v397
    %935 = vmatpush1.msra.mxu0 %v396
    %936 = vmatprep.subr.mxu0 %v401
    %937 = vmatpush1.msra.mxu0 %v400
    %938 = vmatprep.subr.mxu0 %v405
    %939 = vmatpush1.msra.mxu0 %v404
    %940 = vmatprep.subr.mxu0 %v409
    %941 = vmatpush1.msra.mxu0 %v408
    %942 = vmatprep.subr.mxu0 %v413
    %943 = vmatpush1.msra.mxu0 %v412
    %944 = vmatprep.subr.mxu0 %v417
    %945 = vmatpush1.msra.mxu0 %v416
    %946 = vmatprep.subr.mxu0 %v421
    %947 = vmatpush1.msra.mxu0 %v420
    %948 = vmatprep.subr.mxu0 %v425
    %949 = vmatpush1.msra.mxu0 %v424
    %950 = vmatprep.subr.mxu0 %v429
    %951 = vmatpush1.msra.mxu0 %v428
    %952 = vmatprep.subr.mxu0 %v433
    %953 = vmatpush1.msra.mxu0 %v432
    %954 = vmatprep.subr.mxu0 %v437
    %955 = vmatpush1.msra.mxu0 %v436
    %956 = vmatprep.subr.mxu0 0.0
    %957 = vmatpush1.msra.mxu0 0.0
    %958 = vmatprep.subr.mxu0 0.0
    %959 = vmatpush1.msra.mxu0 0.0
    %960 = vmatprep.subr.mxu0 0.0
    %961 = vmatpush1.msra.mxu0 0.0
    %962 = vmatprep.subr.mxu0 0.0
    %963 = vmatpush1.msra.mxu0 0.0
    %964 = vmatprep.subr.mxu0 0.0
    %965 = vmatpush1.msra.mxu0 0.0
    %966 = vmatprep.subr.mxu0 0.0
    %967 = vmatpush1.msra.mxu0 0.0
    %968 = vmatprep.subr.mxu0 0.0
    %969 = vmatpush1.msra.mxu0 0.0
    %970 = vmatprep.subr.mxu0 0.0
    %971 = vmatpush1.msra.mxu0 0.0
    %972 = vmatprep.subr.mxu0 0.0
    %973 = vmatpush1.msra.mxu0 0.0
    %974 = vmatprep.subr.mxu0 0.0
    %975 = vmatpush1.msra.mxu0 0.0
    %976 = vmatprep.subr.mxu0 0.0
    %977 = vmatpush1.msra.mxu0 0.0
    %978 = vmatprep.subr.mxu0 0.0
    %979 = vmatpush1.msra.mxu0 0.0
    %980 = vmatprep.subr.mxu0 0.0
    %981 = vmatpush1.msra.mxu0 0.0
    %982 = vmatprep.subr.mxu0 0.0
    %983 = vmatpush1.msra.mxu0 0.0
    %984 = vmatprep.subr.mxu0 0.0
    %985 = vmatpush1.msra.mxu0 0.0
    %986 = vmatprep.subr.mxu0 0.0
    %987 = vmatpush1.msra.mxu0 0.0
    %988 = vmatprep.mubr.f32.mxu0 0.0
    %989 = vmatmul.mubr.f32.gmra.mrb[0].mxu0 %v922
    %v990 = vpop.f32.mrb[0].mxu0
    %v991 = vadd.f32 0.0, %v990
    %v992 = vpop.f32.mrb[0].mxu0
    %v993 = vadd.f32 0.0, %v992
    %994 = vdwg.mxu0
    %995 = vmatprep.subr.mxu0 %v379
    %996 = vmatpush1.msra.mxu0 %v378
    %997 = vmatprep.subr.mxu0 %v383
    %998 = vmatpush1.msra.mxu0 %v382
    %999 = vmatprep.subr.mxu0 %v387
    %1000 = vmatpush1.msra.mxu0 %v386
    %1001 = vmatprep.subr.mxu0 %v391
    %1002 = vmatpush1.msra.mxu0 %v390
    %1003 = vmatprep.subr.mxu0 %v395
    %1004 = vmatpush1.msra.mxu0 %v394
    %1005 = vmatprep.subr.mxu0 %v399
    %1006 = vmatpush1.msra.mxu0 %v398
    %1007 = vmatprep.subr.mxu0 %v403
    %1008 = vmatpush1.msra.mxu0 %v402
    %1009 = vmatprep.subr.mxu0 %v407
    %1010 = vmatpush1.msra.mxu0 %v406
    %1011 = vmatprep.subr.mxu0 %v411
    %1012 = vmatpush1.msra.mxu0 %v410
    %1013 = vmatprep.subr.mxu0 %v415
    %1014 = vmatpush1.msra.mxu0 %v414
    %1015 = vmatprep.subr.mxu0 %v419
    %1016 = vmatpush1.msra.mxu0 %v418
    %1017 = vmatprep.subr.mxu0 %v423
    %1018 = vmatpush1.msra.mxu0 %v422
    %1019 = vmatprep.subr.mxu0 %v427
    %1020 = vmatpush1.msra.mxu0 %v426
    %1021 = vmatprep.subr.mxu0 %v431
    %1022 = vmatpush1.msra.mxu0 %v430
    %1023 = vmatprep.subr.mxu0 %v435
    %1024 = vmatpush1.msra.mxu0 %v434
    %1025 = vmatprep.subr.mxu0 %v439
    %1026 = vmatpush1.msra.mxu0 %v438
    %1027 = vmatprep.subr.mxu0 0.0
    %1028 = vmatpush1.msra.mxu0 0.0
    %1029 = vmatprep.subr.mxu0 0.0
    %1030 = vmatpush1.msra.mxu0 0.0
    %1031 = vmatprep.subr.mxu0 0.0
    %1032 = vmatpush1.msra.mxu0 0.0
    %1033 = vmatprep.subr.mxu0 0.0
    %1034 = vmatpush1.msra.mxu0 0.0
    %1035 = vmatprep.subr.mxu0 0.0
    %1036 = vmatpush1.msra.mxu0 0.0
    %1037 = vmatprep.subr.mxu0 0.0
    %1038 = vmatpush1.msra.mxu0 0.0
    %1039 = vmatprep.subr.mxu0 0.0
    %1040 = vmatpush1.msra.mxu0 0.0
    %1041 = vmatprep.subr.mxu0 0.0
    %1042 = vmatpush1.msra.mxu0 0.0
    %1043 = vmatprep.subr.mxu0 0.0
    %1044 = vmatpush1.msra.mxu0 0.0
    %1045 = vmatprep.subr.mxu0 0.0
    %1046 = vmatpush1.msra.mxu0 0.0
    %1047 = vmatprep.subr.mxu0 0.0
    %1048 = vmatpush1.msra.mxu0 0.0
    %1049 = vmatprep.subr.mxu0 0.0
    %1050 = vmatpush1.msra.mxu0 0.0
    %1051 = vmatprep.subr.mxu0 0.0
    %1052 = vmatpush1.msra.mxu0 0.0
    %1053 = vmatprep.subr.mxu0 0.0
    %1054 = vmatpush1.msra.mxu0 0.0
    %1055 = vmatprep.subr.mxu0 0.0
    %1056 = vmatpush1.msra.mxu0 0.0
    %1057 = vmatprep.subr.mxu0 0.0
    %1058 = vmatpush1.msra.mxu0 0.0
    %1059 = vmatprep.mubr.f32.mxu0 0.0
    %1060 = vmatmul.mubr.f32.gmra.mrb[0].mxu0 %v922
    %v1061 = vpop.f32.mrb[0].mxu0
    %v1062 = vadd.f32 0.0, %v1061
    %v1063 = vpop.f32.mrb[0].mxu0
    %v1064 = vadd.f32 0.0, %v1063
    %1065 = vdwg.mxu0
    %v1070 = vrot.slane %v991, 7
    %v1071 = vrot.slane %v993, 7
    %v1072 = vrot.slane %v1062, 7
    %v1073 = vrot.slane %v1064, 7
    %v1074 = vrot.slane %v991, 1
    %v1075 = vrot.slane %v993, 1
    %v1076 = vrot.slane %v1062, 1
    %v1077 = vrot.slane %v1064, 1
    %v1078 = vrot.slane %v991, 2
    %v1079 = vrot.slane %v993, 2
    %v1080 = vrot.slane %v1062, 2
    %v1081 = vrot.slane %v1064, 2
    %v1082 = vrot.slane %v991, 3
    %v1083 = vrot.slane %v993, 3
    %v1084 = vrot.slane %v1062, 3
    %v1085 = vrot.slane %v1064, 3
    %v1086 = vrot.slane %v991, 4
    %v1087 = vrot.slane %v993, 4
    %v1088 = vrot.slane %v1062, 4
    %v1089 = vrot.slane %v1064, 4
    %v1090 = vrot.slane %v991, 5
    %v1091 = vrot.slane %v993, 5
    %v1092 = vrot.slane %v1062, 5
    %v1093 = vrot.slane %v1064, 5
    %v1094 = vrot.slane %v991, 6
    %v1095 = vrot.slane %v993, 6
    %v1096 = vrot.slane %v1062, 6
    %v1097 = vrot.slane %v1064, 6
    %v1130 = vadd.f32 %v215, %v1070
    %v1131 = vadd.f32 %v217, %v1071
    %v1132 = vadd.f32 %v328, %v1072
    %v1133 = vadd.f32 %v330, %v1073
    %v1134 = vadd.f32 %v221, %v991
    %v1135 = vadd.f32 %v223, %v993
    %v1136 = vadd.f32 %v334, %v1062
    %v1137 = vadd.f32 %v336, %v1064
    %v1138 = vadd.f32 %v227, %v1074
    %v1139 = vadd.f32 %v229, %v1075
    %v1140 = vadd.f32 %v340, %v1076
    %v1141 = vadd.f32 %v342, %v1077
    %v1142 = vadd.f32 %v233, %v1078
    %v1143 = vadd.f32 %v235, %v1079
    %v1144 = vadd.f32 %v346, %v1080
    %v1145 = vadd.f32 %v348, %v1081
    %v1146 = vadd.f32 %v239, %v1082
    %v1147 = vadd.f32 %v241, %v1083
    %v1148 = vadd.f32 %v352, %v1084
    %v1149 = vadd.f32 %v354, %v1085
    %v1150 = vadd.f32 %v245, %v1086
    %v1151 = vadd.f32 %v247, %v1087
    %v1152 = vadd.f32 %v358, %v1088
    %v1153 = vadd.f32 %v360, %v1089
    %v1154 = vadd.f32 %v251, %v1090
    %v1155 = vadd.f32 %v253, %v1091
    %v1156 = vadd.f32 %v364, %v1092
    %v1157 = vadd.f32 %v366, %v1093
    %v1158 = vadd.f32 %v257, %v1094
    %v1159 = vadd.f32 %v259, %v1095
    %v1160 = vadd.f32 %v370, %v1096
    %v1161 = vadd.f32 %v372, %v1097
    %v1162 = vxor.u32 %v1130, 2147483648
    %v1163 = vxor.u32 %v1134, 2147483648
    %v1164 = vxor.u32 %v1138, 2147483648
    %v1165 = vxor.u32 %v1142, 2147483648
    %v1166 = vxor.u32 %v1146, 2147483648
    %v1167 = vxor.u32 %v1150, 2147483648
    %v1168 = vxor.u32 %v1154, 2147483648
    %v1169 = vxor.u32 %v1158, 2147483648
    %v1170 = vmul.f32 %v1162, 1.442695
    %v1171 = vpow.pop %v1170
    %v1172 = vmul.f32 %v1163, 1.442695
    %v1173 = vpow.pop %v1172
    %v1174 = vmul.f32 %v1164, 1.442695
    %v1175 = vpow.pop %v1174
    %v1176 = vmul.f32 %v1165, 1.442695
    %v1177 = vpow.pop %v1176
    %v1178 = vmul.f32 %v1166, 1.442695
    %v1179 = vpow.pop %v1178
    %v1180 = vmul.f32 %v1167, 1.442695
    %v1181 = vpow.pop %v1180
    %v1182 = vmul.f32 %v1168, 1.442695
    %v1183 = vpow.pop %v1182
    %v1184 = vmul.f32 %v1169, 1.442695
    %v1185 = vpow.pop %v1184
    %v1186 = vadd.f32 %v1171, 1.0
    %v1187 = vadd.f32 %v1173, 1.0
    %v1188 = vadd.f32 %v1175, 1.0
    %v1189 = vadd.f32 %v1177, 1.0
    %v1190 = vadd.f32 %v1179, 1.0
    %v1191 = vadd.f32 %v1181, 1.0
    %v1192 = vadd.f32 %v1183, 1.0
    %v1193 = vadd.f32 %v1185, 1.0
    %v1194 = vrcp.pop %v1186
    %v1195 = vmul.f32 1.0, %v1194
    %v1196 = vrcp.pop %v1187
    %v1197 = vmul.f32 1.0, %v1196
    %v1198 = vrcp.pop %v1188
    %v1199 = vmul.f32 1.0, %v1198
    %v1200 = vrcp.pop %v1189
    %v1201 = vmul.f32 1.0, %v1200
    %v1202 = vrcp.pop %v1190
    %v1203 = vmul.f32 1.0, %v1202
    %v1204 = vrcp.pop %v1191
    %v1205 = vmul.f32 1.0, %v1204
    %v1206 = vrcp.pop %v1192
    %v1207 = vmul.f32 1.0, %v1206
    %v1208 = vrcp.pop %v1193
    %v1209 = vmul.f32 1.0, %v1208
    %v1210 = vxor.u32 %v1131, 2147483648
    %v1211 = vxor.u32 %v1135, 2147483648
    %v1212 = vxor.u32 %v1139, 2147483648
    %v1213 = vxor.u32 %v1143, 2147483648
    %v1214 = vxor.u32 %v1147, 2147483648
    %v1215 = vxor.u32 %v1151, 2147483648
    %v1216 = vxor.u32 %v1155, 2147483648
    %v1217 = vxor.u32 %v1159, 2147483648
    %v1218 = vmul.f32 %v1210, 1.442695
    %v1219 = vpow.pop %v1218
    %v1220 = vmul.f32 %v1211, 1.442695
    %v1221 = vpow.pop %v1220
    %v1222 = vmul.f32 %v1212, 1.442695
    %v1223 = vpow.pop %v1222
    %v1224 = vmul.f32 %v1213, 1.442695
    %v1225 = vpow.pop %v1224
    %v1226 = vmul.f32 %v1214, 1.442695
    %v1227 = vpow.pop %v1226
    %v1228 = vmul.f32 %v1215, 1.442695
    %v1229 = vpow.pop %v1228
    %v1230 = vmul.f32 %v1216, 1.442695
    %v1231 = vpow.pop %v1230
    %v1232 = vmul.f32 %v1217, 1.442695
    %v1233 = vpow.pop %v1232
    %v1234 = vadd.f32 %v1219, 1.0
    %v1235 = vadd.f32 %v1221, 1.0
    %v1236 = vadd.f32 %v1223, 1.0
    %v1237 = vadd.f32 %v1225, 1.0
    %v1238 = vadd.f32 %v1227, 1.0
    %v1239 = vadd.f32 %v1229, 1.0
    %v1240 = vadd.f32 %v1231, 1.0
    %v1241 = vadd.f32 %v1233, 1.0
    %v1242 = vrcp.pop %v1234
    %v1243 = vmul.f32 1.0, %v1242
    %v1244 = vrcp.pop %v1235
    %v1245 = vmul.f32 1.0, %v1244
    %v1246 = vrcp.pop %v1236
    %v1247 = vmul.f32 1.0, %v1246
    %v1248 = vrcp.pop %v1237
    %v1249 = vmul.f32 1.0, %v1248
    %v1250 = vrcp.pop %v1238
    %v1251 = vmul.f32 1.0, %v1250
    %v1252 = vrcp.pop %v1239
    %v1253 = vmul.f32 1.0, %v1252
    %v1254 = vrcp.pop %v1240
    %v1255 = vmul.f32 1.0, %v1254
    %v1256 = vrcp.pop %v1241
    %v1257 = vmul.f32 1.0, %v1256
    %v1258 = vtanh.pop %v1132
    %v1259 = vtanh.pop %v1136
    %v1260 = vtanh.pop %v1140
    %v1261 = vtanh.pop %v1144
    %v1262 = vtanh.pop %v1148
    %v1263 = vtanh.pop %v1152
    %v1264 = vtanh.pop %v1156
    %v1265 = vtanh.pop %v1160
    %v1266 = vxor.u32 %v1133, 2147483648
    %v1267 = vxor.u32 %v1137, 2147483648
    %v1268 = vxor.u32 %v1141, 2147483648
    %v1269 = vxor.u32 %v1145, 2147483648
    %v1270 = vxor.u32 %v1149, 2147483648
    %v1271 = vxor.u32 %v1153, 2147483648
    %v1272 = vxor.u32 %v1157, 2147483648
    %v1273 = vxor.u32 %v1161, 2147483648
    %v1274 = vmul.f32 %v1266, 1.442695
    %v1275 = vpow.pop %v1274
    %v1276 = vmul.f32 %v1267, 1.442695
    %v1277 = vpow.pop %v1276
    %v1278 = vmul.f32 %v1268, 1.442695
    %v1279 = vpow.pop %v1278
    %v1280 = vmul.f32 %v1269, 1.442695
    %v1281 = vpow.pop %v1280
    %v1282 = vmul.f32 %v1270, 1.442695
    %v1283 = vpow.pop %v1282
    %v1284 = vmul.f32 %v1271, 1.442695
    %v1285 = vpow.pop %v1284
    %v1286 = vmul.f32 %v1272, 1.442695
    %v1287 = vpow.pop %v1286
    %v1288 = vmul.f32 %v1273, 1.442695
    %v1289 = vpow.pop %v1288
    %v1290 = vadd.f32 %v1275, 1.0
    %v1291 = vadd.f32 %v1277, 1.0
    %v1292 = vadd.f32 %v1279, 1.0
    %v1293 = vadd.f32 %v1281, 1.0
    %v1294 = vadd.f32 %v1283, 1.0
    %v1295 = vadd.f32 %v1285, 1.0
    %v1296 = vadd.f32 %v1287, 1.0
    %v1297 = vadd.f32 %v1289, 1.0
    %v1298 = vrcp.pop %v1290
    %v1299 = vmul.f32 1.0, %v1298
    %v1300 = vrcp.pop %v1291
    %v1301 = vmul.f32 1.0, %v1300
    %v1302 = vrcp.pop %v1292
    %v1303 = vmul.f32 1.0, %v1302
    %v1304 = vrcp.pop %v1293
    %v1305 = vmul.f32 1.0, %v1304
    %v1306 = vrcp.pop %v1294
    %v1307 = vmul.f32 1.0, %v1306
    %v1308 = vrcp.pop %v1295
    %v1309 = vmul.f32 1.0, %v1308
    %v1310 = vrcp.pop %v1296
    %v1311 = vmul.f32 1.0, %v1310
    %v1312 = vrcp.pop %v1297
    %v1313 = vmul.f32 1.0, %v1312
    %v1322 = vrot.slane %v862, 7
    %v1323 = vrot.slane %v863, 7
    %v1324 = vrot.slane %v864, 7
    %v1325 = vrot.slane %v865, 7
    %v1326 = vrot.slane %v866, 7
    %v1327 = vrot.slane %v867, 7
    %v1328 = vrot.slane %v868, 7
    %v1329 = vrot.slane %v869, 7
    %v1338 = vmul.f32 %v1243, %v1322
    %v1339 = vmul.f32 %v1245, %v1323
    %v1340 = vmul.f32 %v1247, %v1324
    %v1341 = vmul.f32 %v1249, %v1325
    %v1342 = vmul.f32 %v1251, %v1326
    %v1343 = vmul.f32 %v1253, %v1327
    %v1344 = vmul.f32 %v1255, %v1328
    %v1345 = vmul.f32 %v1257, %v1329
    %v1346 = vmul.f32 %v1195, %v1258
    %v1347 = vmul.f32 %v1197, %v1259
    %v1348 = vmul.f32 %v1199, %v1260
    %v1349 = vmul.f32 %v1201, %v1261
    %v1350 = vmul.f32 %v1203, %v1262
    %v1351 = vmul.f32 %v1205, %v1263
    %v1352 = vmul.f32 %v1207, %v1264
    %v1353 = vmul.f32 %v1209, %v1265
    %v1354 = vadd.f32 %v1338, %v1346
    %v1355 = vadd.f32 %v1339, %v1347
    %v1356 = vadd.f32 %v1340, %v1348
    %v1357 = vadd.f32 %v1341, %v1349
    %v1358 = vadd.f32 %v1342, %v1350
    %v1359 = vadd.f32 %v1343, %v1351
    %v1360 = vadd.f32 %v1344, %v1352
    %v1361 = vadd.f32 %v1345, %v1353
    %v1362 = vtanh.pop %v1354
    %v1363 = vtanh.pop %v1355
    %v1364 = vtanh.pop %v1356
    %v1365 = vtanh.pop %v1357
    %v1366 = vtanh.pop %v1358
    %v1367 = vtanh.pop %v1359
    %v1368 = vtanh.pop %v1360
    %v1369 = vtanh.pop %v1361
    %v1370 = vmul.f32 %v1299, %v1362
    %v1371 = vmul.f32 %v1301, %v1363
    %v1372 = vmul.f32 %v1303, %v1364
    %v1373 = vmul.f32 %v1305, %v1365
    %v1374 = vmul.f32 %v1307, %v1366
    %v1375 = vmul.f32 %v1309, %v1367
    %v1376 = vmul.f32 %v1311, %v1368
    %v1377 = vmul.f32 %v1313, %v1369
    %1378 = vst [vmem:[#allocation4] sm:$0x2] %v1370
    %1379 = vst [vmem:[#allocation4 + $0x8] sm:$0x2] %v1371
    %1380 = vst [vmem:[#allocation4 + $0x10] sm:$0x2] %v1372
    %1381 = vst [vmem:[#allocation4 + $0x18] sm:$0x2] %v1373
    %1382 = vst [vmem:[#allocation4 + $0x20] sm:$0x2] %v1374
    %1383 = vst [vmem:[#allocation4 + $0x28] sm:$0x2] %v1375
    %1384 = vst [vmem:[#allocation4 + $0x30] sm:$0x2] %v1376
    %1385 = vst [vmem:[#allocation4 + $0x38] sm:$0x2] %v1377
    %v1394 = vrot.slane %v1370, 1
    %v1395 = vsel %vm903, %v1371, %v1394
    %v1396 = vrot.slane %v1372, 7
    %v1397 = vsel %vm906, %v1396, %v1395
    %v1398 = vrot.slane %v1373, 6
    %v1399 = vsel %vm909, %v1398, %v1397
    %v1400 = vrot.slane %v1374, 5
    %v1401 = vsel %vm912, %v1400, %v1399
    %v1402 = vrot.slane %v1375, 4
    %v1403 = vsel %vm915, %v1402, %v1401
    %v1404 = vrot.slane %v1376, 3
    %v1405 = vsel %vm918, %v1404, %v1403
    %v1406 = vrot.slane %v1377, 2
    %v1407 = vsel %vm921, %v1406, %v1405
    %1409 = vmatprep.subr.mxu0 %v377
    %1410 = vmatpush1.msra.mxu0 %v376
    %1411 = vmatprep.subr.mxu0 %v381
    %1412 = vmatpush1.msra.mxu0 %v380
    %1413 = vmatprep.subr.mxu0 %v385
    %1414 = vmatpush1.msra.mxu0 %v384
    %1415 = vmatprep.subr.mxu0 %v389
    %1416 = vmatpush1.msra.mxu0 %v388
    %1417 = vmatprep.subr.mxu0 %v393
    %1418 = vmatpush1.msra.mxu0 %v392
    %1419 = vmatprep.subr.mxu0 %v397
    %1420 = vmatpush1.msra.mxu0 %v396
    %1421 = vmatprep.subr.mxu0 %v401
    %1422 = vmatpush1.msra.mxu0 %v400
    %1423 = vmatprep.subr.mxu0 %v405
    %1424 = vmatpush1.msra.mxu0 %v404
    %1425 = vmatprep.subr.mxu0 %v409
    %1426 = vmatpush1.msra.mxu0 %v408
    %1427 = vmatprep.subr.mxu0 %v413
    %1428 = vmatpush1.msra.mxu0 %v412
    %1429 = vmatprep.subr.mxu0 %v417
    %1430 = vmatpush1.msra.mxu0 %v416
    %1431 = vmatprep.subr.mxu0 %v421
    %1432 = vmatpush1.msra.mxu0 %v420
    %1433 = vmatprep.subr.mxu0 %v425
    %1434 = vmatpush1.msra.mxu0 %v424
    %1435 = vmatprep.subr.mxu0 %v429
    %1436 = vmatpush1.msra.mxu0 %v428
    %1437 = vmatprep.subr.mxu0 %v433
    %1438 = vmatpush1.msra.mxu0 %v432
    %1439 = vmatprep.subr.mxu0 %v437
    %1440 = vmatpush1.msra.mxu0 %v436
    %1441 = vmatprep.subr.mxu0 0.0
    %1442 = vmatpush1.msra.mxu0 0.0
    %1443 = vmatprep.subr.mxu0 0.0
    %1444 = vmatpush1.msra.mxu0 0.0
    %1445 = vmatprep.subr.mxu0 0.0
    %1446 = vmatpush1.msra.mxu0 0.0
    %1447 = vmatprep.subr.mxu0 0.0
    %1448 = vmatpush1.msra.mxu0 0.0
    %1449 = vmatprep.subr.mxu0 0.0
    %1450 = vmatpush1.msra.mxu0 0.0
    %1451 = vmatprep.subr.mxu0 0.0
    %1452 = vmatpush1.msra.mxu0 0.0
    %1453 = vmatprep.subr.mxu0 0.0
    %1454 = vmatpush1.msra.mxu0 0.0
    %1455 = vmatprep.subr.mxu0 0.0
    %1456 = vmatpush1.msra.mxu0 0.0
    %1457 = vmatprep.subr.mxu0 0.0
    %1458 = vmatpush1.msra.mxu0 0.0
    %1459 = vmatprep.subr.mxu0 0.0
    %1460 = vmatpush1.msra.mxu0 0.0
    %1461 = vmatprep.subr.mxu0 0.0
    %1462 = vmatpush1.msra.mxu0 0.0
    %1463 = vmatprep.subr.mxu0 0.0
    %1464 = vmatpush1.msra.mxu0 0.0
    %1465 = vmatprep.subr.mxu0 0.0
    %1466 = vmatpush1.msra.mxu0 0.0
    %1467 = vmatprep.subr.mxu0 0.0
    %1468 = vmatpush1.msra.mxu0 0.0
    %1469 = vmatprep.subr.mxu0 0.0
    %1470 = vmatpush1.msra.mxu0 0.0
    %1471 = vmatprep.subr.mxu0 0.0
    %1472 = vmatpush1.msra.mxu0 0.0
    %1473 = vmatprep.mubr.f32.mxu0 0.0
    %1474 = vmatmul.mubr.f32.gmra.mrb[0].mxu0 %v1407
    %v1475 = vpop.f32.mrb[0].mxu0
    %v1476 = vadd.f32 0.0, %v1475
    %v1477 = vpop.f32.mrb[0].mxu0
    %v1478 = vadd.f32 0.0, %v1477
    %1479 = vdwg.mxu0
    %1480 = vmatprep.subr.mxu0 %v379
    %1481 = vmatpush1.msra.mxu0 %v378
    %1482 = vmatprep.subr.mxu0 %v383
    %1483 = vmatpush1.msra.mxu0 %v382
    %1484 = vmatprep.subr.mxu0 %v387
    %1485 = vmatpush1.msra.mxu0 %v386
    %1486 = vmatprep.subr.mxu0 %v391
    %1487 = vmatpush1.msra.mxu0 %v390
    %1488 = vmatprep.subr.mxu0 %v395
    %1489 = vmatpush1.msra.mxu0 %v394
    %1490 = vmatprep.subr.mxu0 %v399
    %1491 = vmatpush1.msra.mxu0 %v398
    %1492 = vmatprep.subr.mxu0 %v403
    %1493 = vmatpush1.msra.mxu0 %v402
    %1494 = vmatprep.subr.mxu0 %v407
    %1495 = vmatpush1.msra.mxu0 %v406
    %1496 = vmatprep.subr.mxu0 %v411
    %1497 = vmatpush1.msra.mxu0 %v410
    %1498 = vmatprep.subr.mxu0 %v415
    %1499 = vmatpush1.msra.mxu0 %v414
    %1500 = vmatprep.subr.mxu0 %v419
    %1501 = vmatpush1.msra.mxu0 %v418
    %1502 = vmatprep.subr.mxu0 %v423
    %1503 = vmatpush1.msra.mxu0 %v422
    %1504 = vmatprep.subr.mxu0 %v427
    %1505 = vmatpush1.msra.mxu0 %v426
    %1506 = vmatprep.subr.mxu0 %v431
    %1507 = vmatpush1.msra.mxu0 %v430
    %1508 = vmatprep.subr.mxu0 %v435
    %1509 = vmatpush1.msra.mxu0 %v434
    %1510 = vmatprep.subr.mxu0 %v439
    %1511 = vmatpush1.msra.mxu0 %v438
    %1512 = vmatprep.subr.mxu0 0.0
    %1513 = vmatpush1.msra.mxu0 0.0
    %1514 = vmatprep.subr.mxu0 0.0
    %1515 = vmatpush1.msra.mxu0 0.0
    %1516 = vmatprep.subr.mxu0 0.0
    %1517 = vmatpush1.msra.mxu0 0.0
    %1518 = vmatprep.subr.mxu0 0.0
    %1519 = vmatpush1.msra.mxu0 0.0
    %1520 = vmatprep.subr.mxu0 0.0
    %1521 = vmatpush1.msra.mxu0 0.0
    %1522 = vmatprep.subr.mxu0 0.0
    %1523 = vmatpush1.msra.mxu0 0.0
    %1524 = vmatprep.subr.mxu0 0.0
    %1525 = vmatpush1.msra.mxu0 0.0
    %1526 = vmatprep.subr.mxu0 0.0
    %1527 = vmatpush1.msra.mxu0 0.0
    %1528 = vmatprep.subr.mxu0 0.0
    %1529 = vmatpush1.msra.mxu0 0.0
    %1530 = vmatprep.subr.mxu0 0.0
    %1531 = vmatpush1.msra.mxu0 0.0
    %1532 = vmatprep.subr.mxu0 0.0
    %1533 = vmatpush1.msra.mxu0 0.0
    %1534 = vmatprep.subr.mxu0 0.0
    %1535 = vmatpush1.msra.mxu0 0.0
    %1536 = vmatprep.subr.mxu0 0.0
    %1537 = vmatpush1.msra.mxu0 0.0
    %1538 = vmatprep.subr.mxu0 0.0
    %1539 = vmatpush1.msra.mxu0 0.0
    %1540 = vmatprep.subr.mxu0 0.0
    %1541 = vmatpush1.msra.mxu0 0.0
    %1542 = vmatprep.subr.mxu0 0.0
    %1543 = vmatpush1.msra.mxu0 0.0
    %1544 = vmatprep.mubr.f32.mxu0 0.0
    %1545 = vmatmul.mubr.f32.gmra.mrb[0].mxu0 %v1407
    %v1546 = vpop.f32.mrb[0].mxu0
    %v1547 = vadd.f32 0.0, %v1546
    %v1548 = vpop.f32.mrb[0].mxu0
    %v1549 = vadd.f32 0.0, %v1548
    %1550 = vdwg.mxu0
    %v1555 = vrot.slane %v1476, 6
    %v1556 = vrot.slane %v1478, 6
    %v1557 = vrot.slane %v1547, 6
    %v1558 = vrot.slane %v1549, 6
    %v1559 = vrot.slane %v1476, 7
    %v1560 = vrot.slane %v1478, 7
    %v1561 = vrot.slane %v1547, 7
    %v1562 = vrot.slane %v1549, 7
    %v1563 = vrot.slane %v1476, 1
    %v1564 = vrot.slane %v1478, 1
    %v1565 = vrot.slane %v1547, 1
    %v1566 = vrot.slane %v1549, 1
    %v1567 = vrot.slane %v1476, 2
    %v1568 = vrot.slane %v1478, 2
    %v1569 = vrot.slane %v1547, 2
    %v1570 = vrot.slane %v1549, 2
    %v1571 = vrot.slane %v1476, 3
    %v1572 = vrot.slane %v1478, 3
    %v1573 = vrot.slane %v1547, 3
    %v1574 = vrot.slane %v1549, 3
    %v1575 = vrot.slane %v1476, 4
    %v1576 = vrot.slane %v1478, 4
    %v1577 = vrot.slane %v1547, 4
    %v1578 = vrot.slane %v1549, 4
    %v1579 = vrot.slane %v1476, 5
    %v1580 = vrot.slane %v1478, 5
    %v1581 = vrot.slane %v1547, 5
    %v1582 = vrot.slane %v1549, 5
    %v1615 = vadd.f32 %v215, %v1555
    %v1616 = vadd.f32 %v217, %v1556
    %v1617 = vadd.f32 %v328, %v1557
    %v1618 = vadd.f32 %v330, %v1558
    %v1619 = vadd.f32 %v221, %v1559
    %v1620 = vadd.f32 %v223, %v1560
    %v1621 = vadd.f32 %v334, %v1561
    %v1622 = vadd.f32 %v336, %v1562
    %v1623 = vadd.f32 %v227, %v1476
    %v1624 = vadd.f32 %v229, %v1478
    %v1625 = vadd.f32 %v340, %v1547
    %v1626 = vadd.f32 %v342, %v1549
    %v1627 = vadd.f32 %v233, %v1563
    %v1628 = vadd.f32 %v235, %v1564
    %v1629 = vadd.f32 %v346, %v1565
    %v1630 = vadd.f32 %v348, %v1566
    %v1631 = vadd.f32 %v239, %v1567
    %v1632 = vadd.f32 %v241, %v1568
    %v1633 = vadd.f32 %v352, %v1569
    %v1634 = vadd.f32 %v354, %v1570
    %v1635 = vadd.f32 %v245, %v1571
    %v1636 = vadd.f32 %v247, %v1572
    %v1637 = vadd.f32 %v358, %v1573
    %v1638 = vadd.f32 %v360, %v1574
    %v1639 = vadd.f32 %v251, %v1575
    %v1640 = vadd.f32 %v253, %v1576
    %v1641 = vadd.f32 %v364, %v1577
    %v1642 = vadd.f32 %v366, %v1578
    %v1643 = vadd.f32 %v257, %v1579
    %v1644 = vadd.f32 %v259, %v1580
    %v1645 = vadd.f32 %v370, %v1581
    %v1646 = vadd.f32 %v372, %v1582
    %v1647 = vxor.u32 %v1615, 2147483648
    %v1648 = vxor.u32 %v1619, 2147483648
    %v1649 = vxor.u32 %v1623, 2147483648
    %v1650 = vxor.u32 %v1627, 2147483648
    %v1651 = vxor.u32 %v1631, 2147483648
    %v1652 = vxor.u32 %v1635, 2147483648
    %v1653 = vxor.u32 %v1639, 2147483648
    %v1654 = vxor.u32 %v1643, 2147483648
    %v1655 = vmul.f32 %v1647, 1.442695
    %v1656 = vpow.pop %v1655
    %v1657 = vmul.f32 %v1648, 1.442695
    %v1658 = vpow.pop %v1657
    %v1659 = vmul.f32 %v1649, 1.442695
    %v1660 = vpow.pop %v1659
    %v1661 = vmul.f32 %v1650, 1.442695
    %v1662 = vpow.pop %v1661
    %v1663 = vmul.f32 %v1651, 1.442695
    %v1664 = vpow.pop %v1663
    %v1665 = vmul.f32 %v1652, 1.442695
    %v1666 = vpow.pop %v1665
    %v1667 = vmul.f32 %v1653, 1.442695
    %v1668 = vpow.pop %v1667
    %v1669 = vmul.f32 %v1654, 1.442695
    %v1670 = vpow.pop %v1669
    %v1671 = vadd.f32 %v1656, 1.0
    %v1672 = vadd.f32 %v1658, 1.0
    %v1673 = vadd.f32 %v1660, 1.0
    %v1674 = vadd.f32 %v1662, 1.0
    %v1675 = vadd.f32 %v1664, 1.0
    %v1676 = vadd.f32 %v1666, 1.0
    %v1677 = vadd.f32 %v1668, 1.0
    %v1678 = vadd.f32 %v1670, 1.0
    %v1679 = vrcp.pop %v1671
    %v1680 = vmul.f32 1.0, %v1679
    %v1681 = vrcp.pop %v1672
    %v1682 = vmul.f32 1.0, %v1681
    %v1683 = vrcp.pop %v1673
    %v1684 = vmul.f32 1.0, %v1683
    %v1685 = vrcp.pop %v1674
    %v1686 = vmul.f32 1.0, %v1685
    %v1687 = vrcp.pop %v1675
    %v1688 = vmul.f32 1.0, %v1687
    %v1689 = vrcp.pop %v1676
    %v1690 = vmul.f32 1.0, %v1689
    %v1691 = vrcp.pop %v1677
    %v1692 = vmul.f32 1.0, %v1691
    %v1693 = vrcp.pop %v1678
    %v1694 = vmul.f32 1.0, %v1693
    %v1695 = vxor.u32 %v1616, 2147483648
    %v1696 = vxor.u32 %v1620, 2147483648
    %v1697 = vxor.u32 %v1624, 2147483648
    %v1698 = vxor.u32 %v1628, 2147483648
    %v1699 = vxor.u32 %v1632, 2147483648
    %v1700 = vxor.u32 %v1636, 2147483648
    %v1701 = vxor.u32 %v1640, 2147483648
    %v1702 = vxor.u32 %v1644, 2147483648
    %v1703 = vmul.f32 %v1695, 1.442695
    %v1704 = vpow.pop %v1703
    %v1705 = vmul.f32 %v1696, 1.442695
    %v1706 = vpow.pop %v1705
    %v1707 = vmul.f32 %v1697, 1.442695
    %v1708 = vpow.pop %v1707
    %v1709 = vmul.f32 %v1698, 1.442695
    %v1710 = vpow.pop %v1709
    %v1711 = vmul.f32 %v1699, 1.442695
    %v1712 = vpow.pop %v1711
    %v1713 = vmul.f32 %v1700, 1.442695
    %v1714 = vpow.pop %v1713
    %v1715 = vmul.f32 %v1701, 1.442695
    %v1716 = vpow.pop %v1715
    %v1717 = vmul.f32 %v1702, 1.442695
    %v1718 = vpow.pop %v1717
    %v1719 = vadd.f32 %v1704, 1.0
    %v1720 = vadd.f32 %v1706, 1.0
    %v1721 = vadd.f32 %v1708, 1.0
    %v1722 = vadd.f32 %v1710, 1.0
    %v1723 = vadd.f32 %v1712, 1.0
    %v1724 = vadd.f32 %v1714, 1.0
    %v1725 = vadd.f32 %v1716, 1.0
    %v1726 = vadd.f32 %v1718, 1.0
    %v1727 = vrcp.pop %v1719
    %v1728 = vmul.f32 1.0, %v1727
    %v1729 = vrcp.pop %v1720
    %v1730 = vmul.f32 1.0, %v1729
    %v1731 = vrcp.pop %v1721
    %v1732 = vmul.f32 1.0, %v1731
    %v1733 = vrcp.pop %v1722
    %v1734 = vmul.f32 1.0, %v1733
    %v1735 = vrcp.pop %v1723
    %v1736 = vmul.f32 1.0, %v1735
    %v1737 = vrcp.pop %v1724
    %v1738 = vmul.f32 1.0, %v1737
    %v1739 = vrcp.pop %v1725
    %v1740 = vmul.f32 1.0, %v1739
    %v1741 = vrcp.pop %v1726
    %v1742 = vmul.f32 1.0, %v1741
    %v1743 = vtanh.pop %v1617
    %v1744 = vtanh.pop %v1621
    %v1745 = vtanh.pop %v1625
    %v1746 = vtanh.pop %v1629
    %v1747 = vtanh.pop %v1633
    %v1748 = vtanh.pop %v1637
    %v1749 = vtanh.pop %v1641
    %v1750 = vtanh.pop %v1645
    %v1751 = vxor.u32 %v1618, 2147483648
    %v1752 = vxor.u32 %v1622, 2147483648
    %v1753 = vxor.u32 %v1626, 2147483648
    %v1754 = vxor.u32 %v1630, 2147483648
    %v1755 = vxor.u32 %v1634, 2147483648
    %v1756 = vxor.u32 %v1638, 2147483648
    %v1757 = vxor.u32 %v1642, 2147483648
    %v1758 = vxor.u32 %v1646, 2147483648
    %v1759 = vmul.f32 %v1751, 1.442695
    %v1760 = vpow.pop %v1759
    %v1761 = vmul.f32 %v1752, 1.442695
    %v1762 = vpow.pop %v1761
    %v1763 = vmul.f32 %v1753, 1.442695
    %v1764 = vpow.pop %v1763
    %v1765 = vmul.f32 %v1754, 1.442695
    %v1766 = vpow.pop %v1765
    %v1767 = vmul.f32 %v1755, 1.442695
    %v1768 = vpow.pop %v1767
    %v1769 = vmul.f32 %v1756, 1.442695
    %v1770 = vpow.pop %v1769
    %v1771 = vmul.f32 %v1757, 1.442695
    %v1772 = vpow.pop %v1771
    %v1773 = vmul.f32 %v1758, 1.442695
    %v1774 = vpow.pop %v1773
    %v1775 = vadd.f32 %v1760, 1.0
    %v1776 = vadd.f32 %v1762, 1.0
    %v1777 = vadd.f32 %v1764, 1.0
    %v1778 = vadd.f32 %v1766, 1.0
    %v1779 = vadd.f32 %v1768, 1.0
    %v1780 = vadd.f32 %v1770, 1.0
    %v1781 = vadd.f32 %v1772, 1.0
    %v1782 = vadd.f32 %v1774, 1.0
    %v1783 = vrcp.pop %v1775
    %v1784 = vmul.f32 1.0, %v1783
    %v1785 = vrcp.pop %v1776
    %v1786 = vmul.f32 1.0, %v1785
    %v1787 = vrcp.pop %v1777
    %v1788 = vmul.f32 1.0, %v1787
    %v1789 = vrcp.pop %v1778
    %v1790 = vmul.f32 1.0, %v1789
    %v1791 = vrcp.pop %v1779
    %v1792 = vmul.f32 1.0, %v1791
    %v1793 = vrcp.pop %v1780
    %v1794 = vmul.f32 1.0, %v1793
    %v1795 = vrcp.pop %v1781
    %v1796 = vmul.f32 1.0, %v1795
    %v1797 = vrcp.pop %v1782
    %v1798 = vmul.f32 1.0, %v1797
    %v1807 = vrot.slane %v1354, 7
    %v1808 = vrot.slane %v1355, 7
    %v1809 = vrot.slane %v1356, 7
    %v1810 = vrot.slane %v1357, 7
    %v1811 = vrot.slane %v1358, 7
    %v1812 = vrot.slane %v1359, 7
    %v1813 = vrot.slane %v1360, 7
    %v1814 = vrot.slane %v1361, 7
    %v1823 = vmul.f32 %v1728, %v1807
    %v1824 = vmul.f32 %v1730, %v1808
    %v1825 = vmul.f32 %v1732, %v1809
    %v1826 = vmul.f32 %v1734, %v1810
    %v1827 = vmul.f32 %v1736, %v1811
    %v1828 = vmul.f32 %v1738, %v1812
    %v1829 = vmul.f32 %v1740, %v1813
    %v1830 = vmul.f32 %v1742, %v1814
    %v1831 = vmul.f32 %v1680, %v1743
    %v1832 = vmul.f32 %v1682, %v1744
    %v1833 = vmul.f32 %v1684, %v1745
    %v1834 = vmul.f32 %v1686, %v1746
    %v1835 = vmul.f32 %v1688, %v1747
    %v1836 = vmul.f32 %v1690, %v1748
    %v1837 = vmul.f32 %v1692, %v1749
    %v1838 = vmul.f32 %v1694, %v1750
    %v1839 = vadd.f32 %v1823, %v1831
    %v1840 = vadd.f32 %v1824, %v1832
    %v1841 = vadd.f32 %v1825, %v1833
    %v1842 = vadd.f32 %v1826, %v1834
    %v1843 = vadd.f32 %v1827, %v1835
    %v1844 = vadd.f32 %v1828, %v1836
    %v1845 = vadd.f32 %v1829, %v1837
    %v1846 = vadd.f32 %v1830, %v1838
    %v1847 = vtanh.pop %v1839
    %v1848 = vtanh.pop %v1840
    %v1849 = vtanh.pop %v1841
    %v1850 = vtanh.pop %v1842
    %v1851 = vtanh.pop %v1843
    %v1852 = vtanh.pop %v1844
    %v1853 = vtanh.pop %v1845
    %v1854 = vtanh.pop %v1846
    %v1855 = vmul.f32 %v1784, %v1847
    %v1856 = vmul.f32 %v1786, %v1848
    %v1857 = vmul.f32 %v1788, %v1849
    %v1858 = vmul.f32 %v1790, %v1850
    %v1859 = vmul.f32 %v1792, %v1851
    %v1860 = vmul.f32 %v1794, %v1852
    %v1861 = vmul.f32 %v1796, %v1853
    %v1862 = vmul.f32 %v1798, %v1854
    %1863 = vst [vmem:[#allocation4] sm:$0x4] %v1855
    %1864 = vst [vmem:[#allocation4 + $0x8] sm:$0x4] %v1856
    %1865 = vst [vmem:[#allocation4 + $0x10] sm:$0x4] %v1857
    %1866 = vst [vmem:[#allocation4 + $0x18] sm:$0x4] %v1858
    %1867 = vst [vmem:[#allocation4 + $0x20] sm:$0x4] %v1859
    %1868 = vst [vmem:[#allocation4 + $0x28] sm:$0x4] %v1860
    %1869 = vst [vmem:[#allocation4 + $0x30] sm:$0x4] %v1861
    %1870 = vst [vmem:[#allocation4 + $0x38] sm:$0x4] %v1862
    %v1879 = vrot.slane %v1855, 2
    %v1880 = vrot.slane %v1856, 1
    %v1881 = vsel %vm903, %v1880, %v1879
    %v1882 = vsel %vm906, %v1857, %v1881
    %v1883 = vrot.slane %v1858, 7
    %v1884 = vsel %vm909, %v1883, %v1882
    %v1885 = vrot.slane %v1859, 6
    %v1886 = vsel %vm912, %v1885, %v1884
    %v1887 = vrot.slane %v1860, 5
    %v1888 = vsel %vm915, %v1887, %v1886
    %v1889 = vrot.slane %v1861, 4
    %v1890 = vsel %vm918, %v1889, %v1888
    %v1891 = vrot.slane %v1862, 3
    %v1892 = vsel %vm921, %v1891, %v1890
    %1894 = vmatprep.subr.mxu0 %v377
    %1895 = vmatpush1.msra.mxu0 %v376
    %1896 = vmatprep.subr.mxu0 %v381
    %1897 = vmatpush1.msra.mxu0 %v380
    %1898 = vmatprep.subr.mxu0 %v385
    %1899 = vmatpush1.msra.mxu0 %v384
    %1900 = vmatprep.subr.mxu0 %v389
    %1901 = vmatpush1.msra.mxu0 %v388
    %1902 = vmatprep.subr.mxu0 %v393
    %1903 = vmatpush1.msra.mxu0 %v392
    %1904 = vmatprep.subr.mxu0 %v397
    %1905 = vmatpush1.msra.mxu0 %v396
    %1906 = vmatprep.subr.mxu0 %v401
    %1907 = vmatpush1.msra.mxu0 %v400
    %1908 = vmatprep.subr.mxu0 %v405
    %1909 = vmatpush1.msra.mxu0 %v404
    %1910 = vmatprep.subr.mxu0 %v409
    %1911 = vmatpush1.msra.mxu0 %v408
    %1912 = vmatprep.subr.mxu0 %v413
    %1913 = vmatpush1.msra.mxu0 %v412
    %1914 = vmatprep.subr.mxu0 %v417
    %1915 = vmatpush1.msra.mxu0 %v416
    %1916 = vmatprep.subr.mxu0 %v421
    %1917 = vmatpush1.msra.mxu0 %v420
    %1918 = vmatprep.subr.mxu0 %v425
    %1919 = vmatpush1.msra.mxu0 %v424
    %1920 = vmatprep.subr.mxu0 %v429
    %1921 = vmatpush1.msra.mxu0 %v428
    %1922 = vmatprep.subr.mxu0 %v433
    %1923 = vmatpush1.msra.mxu0 %v432
    %1924 = vmatprep.subr.mxu0 %v437
    %1925 = vmatpush1.msra.mxu0 %v436
    %1926 = vmatprep.subr.mxu0 0.0
    %1927 = vmatpush1.msra.mxu0 0.0
    %1928 = vmatprep.subr.mxu0 0.0
    %1929 = vmatpush1.msra.mxu0 0.0
    %1930 = vmatprep.subr.mxu0 0.0
    %1931 = vmatpush1.msra.mxu0 0.0
    %1932 = vmatprep.subr.mxu0 0.0
    %1933 = vmatpush1.msra.mxu0 0.0
    %1934 = vmatprep.subr.mxu0 0.0
    %1935 = vmatpush1.msra.mxu0 0.0
    %1936 = vmatprep.subr.mxu0 0.0
    %1937 = vmatpush1.msra.mxu0 0.0
    %1938 = vmatprep.subr.mxu0 0.0
    %1939 = vmatpush1.msra.mxu0 0.0
    %1940 = vmatprep.subr.mxu0 0.0
    %1941 = vmatpush1.msra.mxu0 0.0
    %1942 = vmatprep.subr.mxu0 0.0
    %1943 = vmatpush1.msra.mxu0 0.0
    %1944 = vmatprep.subr.mxu0 0.0
    %1945 = vmatpush1.msra.mxu0 0.0
    %1946 = vmatprep.subr.mxu0 0.0
    %1947 = vmatpush1.msra.mxu0 0.0
    %1948 = vmatprep.subr.mxu0 0.0
    %1949 = vmatpush1.msra.mxu0 0.0
    %1950 = vmatprep.subr.mxu0 0.0
    %1951 = vmatpush1.msra.mxu0 0.0
    %1952 = vmatprep.subr.mxu0 0.0
    %1953 = vmatpush1.msra.mxu0 0.0
    %1954 = vmatprep.subr.mxu0 0.0
    %1955 = vmatpush1.msra.mxu0 0.0
    %1956 = vmatprep.subr.mxu0 0.0
    %1957 = vmatpush1.msra.mxu0 0.0
    %1958 = vmatprep.mubr.f32.mxu0 0.0
    %1959 = vmatmul.mubr.f32.gmra.mrb[0].mxu0 %v1892
    %v1960 = vpop.f32.mrb[0].mxu0
    %v1961 = vadd.f32 0.0, %v1960
    %v1962 = vpop.f32.mrb[0].mxu0
    %v1963 = vadd.f32 0.0, %v1962
    %1964 = vdwg.mxu0
    %1965 = vmatprep.subr.mxu0 %v379
    %1966 = vmatpush1.msra.mxu0 %v378
    %1967 = vmatprep.subr.mxu0 %v383
    %1968 = vmatpush1.msra.mxu0 %v382
    %1969 = vmatprep.subr.mxu0 %v387
    %1970 = vmatpush1.msra.mxu0 %v386
    %1971 = vmatprep.subr.mxu0 %v391
    %1972 = vmatpush1.msra.mxu0 %v390
    %1973 = vmatprep.subr.mxu0 %v395
    %1974 = vmatpush1.msra.mxu0 %v394
    %1975 = vmatprep.subr.mxu0 %v399
    %1976 = vmatpush1.msra.mxu0 %v398
    %1977 = vmatprep.subr.mxu0 %v403
    %1978 = vmatpush1.msra.mxu0 %v402
    %1979 = vmatprep.subr.mxu0 %v407
    %1980 = vmatpush1.msra.mxu0 %v406
    %1981 = vmatprep.subr.mxu0 %v411
    %1982 = vmatpush1.msra.mxu0 %v410
    %1983 = vmatprep.subr.mxu0 %v415
    %1984 = vmatpush1.msra.mxu0 %v414
    %1985 = vmatprep.subr.mxu0 %v419
    %1986 = vmatpush1.msra.mxu0 %v418
    %1987 = vmatprep.subr.mxu0 %v423
    %1988 = vmatpush1.msra.mxu0 %v422
    %1989 = vmatprep.subr.mxu0 %v427
    %1990 = vmatpush1.msra.mxu0 %v426
    %1991 = vmatprep.subr.mxu0 %v431
    %1992 = vmatpush1.msra.mxu0 %v430
    %1993 = vmatprep.subr.mxu0 %v435
    %1994 = vmatpush1.msra.mxu0 %v434
    %1995 = vmatprep.subr.mxu0 %v439
    %1996 = vmatpush1.msra.mxu0 %v438
    %1997 = vmatprep.subr.mxu0 0.0
    %1998 = vmatpush1.msra.mxu0 0.0
    %1999 = vmatprep.subr.mxu0 0.0
    %2000 = vmatpush1.msra.mxu0 0.0
    %2001 = vmatprep.subr.mxu0 0.0
    %2002 = vmatpush1.msra.mxu0 0.0
    %2003 = vmatprep.subr.mxu0 0.0
    %2004 = vmatpush1.msra.mxu0 0.0
    %2005 = vmatprep.subr.mxu0 0.0
    %2006 = vmatpush1.msra.mxu0 0.0
    %2007 = vmatprep.subr.mxu0 0.0
    %2008 = vmatpush1.msra.mxu0 0.0
    %2009 = vmatprep.subr.mxu0 0.0
    %2010 = vmatpush1.msra.mxu0 0.0
    %2011 = vmatprep.subr.mxu0 0.0
    %2012 = vmatpush1.msra.mxu0 0.0
    %2013 = vmatprep.subr.mxu0 0.0
    %2014 = vmatpush1.msra.mxu0 0.0
    %2015 = vmatprep.subr.mxu0 0.0
    %2016 = vmatpush1.msra.mxu0 0.0
    %2017 = vmatprep.subr.mxu0 0.0
    %2018 = vmatpush1.msra.mxu0 0.0
    %2019 = vmatprep.subr.mxu0 0.0
    %2020 = vmatpush1.msra.mxu0 0.0
    %2021 = vmatprep.subr.mxu0 0.0
    %2022 = vmatpush1.msra.mxu0 0.0
    %2023 = vmatprep.subr.mxu0 0.0
    %2024 = vmatpush1.msra.mxu0 0.0
    %2025 = vmatprep.subr.mxu0 0.0
    %2026 = vmatpush1.msra.mxu0 0.0
    %2027 = vmatprep.subr.mxu0 0.0
    %2028 = vmatpush1.msra.mxu0 0.0
    %2029 = vmatprep.mubr.f32.mxu0 0.0
    %2030 = vmatmul.mubr.f32.gmra.mrb[0].mxu0 %v1892
    %v2031 = vpop.f32.mrb[0].mxu0
    %v2032 = vadd.f32 0.0, %v2031
    %v2033 = vpop.f32.mrb[0].mxu0
    %v2034 = vadd.f32 0.0, %v2033
    %2035 = vdwg.mxu0
    %v2040 = vrot.slane %v1961, 5
    %v2041 = vrot.slane %v1963, 5
    %v2042 = vrot.slane %v2032, 5
    %v2043 = vrot.slane %v2034, 5
    %v2044 = vrot.slane %v1961, 6
    %v2045 = vrot.slane %v1963, 6
    %v2046 = vrot.slane %v2032, 6
    %v2047 = vrot.slane %v2034, 6
    %v2048 = vrot.slane %v1961, 7
    %v2049 = vrot.slane %v1963, 7
    %v2050 = vrot.slane %v2032, 7
    %v2051 = vrot.slane %v2034, 7
    %v2052 = vrot.slane %v1961, 1
    %v2053 = vrot.slane %v1963, 1
    %v2054 = vrot.slane %v2032, 1
    %v2055 = vrot.slane %v2034, 1
    %v2056 = vrot.slane %v1961, 2
    %v2057 = vrot.slane %v1963, 2
    %v2058 = vrot.slane %v2032, 2
    %v2059 = vrot.slane %v2034, 2
    %v2060 = vrot.slane %v1961, 3
    %v2061 = vrot.slane %v1963, 3
    %v2062 = vrot.slane %v2032, 3
    %v2063 = vrot.slane %v2034, 3
    %v2064 = vrot.slane %v1961, 4
    %v2065 = vrot.slane %v1963, 4
    %v2066 = vrot.slane %v2032, 4
    %v2067 = vrot.slane %v2034, 4
    %v2100 = vadd.f32 %v215, %v2040
    %v2101 = vadd.f32 %v217, %v2041
    %v2102 = vadd.f32 %v328, %v2042
    %v2103 = vadd.f32 %v330, %v2043
    %v2104 = vadd.f32 %v221, %v2044
    %v2105 = vadd.f32 %v223, %v2045
    %v2106 = vadd.f32 %v334, %v2046
    %v2107 = vadd.f32 %v336, %v2047
    %v2108 = vadd.f32 %v227, %v2048
    %v2109 = vadd.f32 %v229, %v2049
    %v2110 = vadd.f32 %v340, %v2050
    %v2111 = vadd.f32 %v342, %v2051
    %v2112 = vadd.f32 %v233, %v1961
    %v2113 = vadd.f32 %v235, %v1963
    %v2114 = vadd.f32 %v346, %v2032
    %v2115 = vadd.f32 %v348, %v2034
    %v2116 = vadd.f32 %v239, %v2052
    %v2117 = vadd.f32 %v241, %v2053
    %v2118 = vadd.f32 %v352, %v2054
    %v2119 = vadd.f32 %v354, %v2055
    %v2120 = vadd.f32 %v245, %v2056
    %v2121 = vadd.f32 %v247, %v2057
    %v2122 = vadd.f32 %v358, %v2058
    %v2123 = vadd.f32 %v360, %v2059
    %v2124 = vadd.f32 %v251, %v2060
    %v2125 = vadd.f32 %v253, %v2061
    %v2126 = vadd.f32 %v364, %v2062
    %v2127 = vadd.f32 %v366, %v2063
    %v2128 = vadd.f32 %v257, %v2064
    %v2129 = vadd.f32 %v259, %v2065
    %v2130 = vadd.f32 %v370, %v2066
    %v2131 = vadd.f32 %v372, %v2067
    %v2132 = vxor.u32 %v2100, 2147483648
    %v2133 = vxor.u32 %v2104, 2147483648
    %v2134 = vxor.u32 %v2108, 2147483648
    %v2135 = vxor.u32 %v2112, 2147483648
    %v2136 = vxor.u32 %v2116, 2147483648
    %v2137 = vxor.u32 %v2120, 2147483648
    %v2138 = vxor.u32 %v2124, 2147483648
    %v2139 = vxor.u32 %v2128, 2147483648
    %v2140 = vmul.f32 %v2132, 1.442695
    %v2141 = vpow.pop %v2140
    %v2142 = vmul.f32 %v2133, 1.442695
    %v2143 = vpow.pop %v2142
    %v2144 = vmul.f32 %v2134, 1.442695
    %v2145 = vpow.pop %v2144
    %v2146 = vmul.f32 %v2135, 1.442695
    %v2147 = vpow.pop %v2146
    %v2148 = vmul.f32 %v2136, 1.442695
    %v2149 = vpow.pop %v2148
    %v2150 = vmul.f32 %v2137, 1.442695
    %v2151 = vpow.pop %v2150
    %v2152 = vmul.f32 %v2138, 1.442695
    %v2153 = vpow.pop %v2152
    %v2154 = vmul.f32 %v2139, 1.442695
    %v2155 = vpow.pop %v2154
    %v2156 = vadd.f32 %v2141, 1.0
    %v2157 = vadd.f32 %v2143, 1.0
    %v2158 = vadd.f32 %v2145, 1.0
    %v2159 = vadd.f32 %v2147, 1.0
    %v2160 = vadd.f32 %v2149, 1.0
    %v2161 = vadd.f32 %v2151, 1.0
    %v2162 = vadd.f32 %v2153, 1.0
    %v2163 = vadd.f32 %v2155, 1.0
    %v2164 = vrcp.pop %v2156
    %v2165 = vmul.f32 1.0, %v2164
    %v2166 = vrcp.pop %v2157
    %v2167 = vmul.f32 1.0, %v2166
    %v2168 = vrcp.pop %v2158
    %v2169 = vmul.f32 1.0, %v2168
    %v2170 = vrcp.pop %v2159
    %v2171 = vmul.f32 1.0, %v2170
    %v2172 = vrcp.pop %v2160
    %v2173 = vmul.f32 1.0, %v2172
    %v2174 = vrcp.pop %v2161
    %v2175 = vmul.f32 1.0, %v2174
    %v2176 = vrcp.pop %v2162
    %v2177 = vmul.f32 1.0, %v2176
    %v2178 = vrcp.pop %v2163
    %v2179 = vmul.f32 1.0, %v2178
    %v2180 = vxor.u32 %v2101, 2147483648
    %v2181 = vxor.u32 %v2105, 2147483648
    %v2182 = vxor.u32 %v2109, 2147483648
    %v2183 = vxor.u32 %v2113, 2147483648
    %v2184 = vxor.u32 %v2117, 2147483648
    %v2185 = vxor.u32 %v2121, 2147483648
    %v2186 = vxor.u32 %v2125, 2147483648
    %v2187 = vxor.u32 %v2129, 2147483648
    %v2188 = vmul.f32 %v2180, 1.442695
    %v2189 = vpow.pop %v2188
    %v2190 = vmul.f32 %v2181, 1.442695
    %v2191 = vpow.pop %v2190
    %v2192 = vmul.f32 %v2182, 1.442695
    %v2193 = vpow.pop %v2192
    %v2194 = vmul.f32 %v2183, 1.442695
    %v2195 = vpow.pop %v2194
    %v2196 = vmul.f32 %v2184, 1.442695
    %v2197 = vpow.pop %v2196
    %v2198 = vmul.f32 %v2185, 1.442695
    %v2199 = vpow.pop %v2198
    %v2200 = vmul.f32 %v2186, 1.442695
    %v2201 = vpow.pop %v2200
    %v2202 = vmul.f32 %v2187, 1.442695
    %v2203 = vpow.pop %v2202
    %v2204 = vadd.f32 %v2189, 1.0
    %v2205 = vadd.f32 %v2191, 1.0
    %v2206 = vadd.f32 %v2193, 1.0
    %v2207 = vadd.f32 %v2195, 1.0
    %v2208 = vadd.f32 %v2197, 1.0
    %v2209 = vadd.f32 %v2199, 1.0
    %v2210 = vadd.f32 %v2201, 1.0
    %v2211 = vadd.f32 %v2203, 1.0
    %v2212 = vrcp.pop %v2204
    %v2213 = vmul.f32 1.0, %v2212
    %v2214 = vrcp.pop %v2205
    %v2215 = vmul.f32 1.0, %v2214
    %v2216 = vrcp.pop %v2206
    %v2217 = vmul.f32 1.0, %v2216
    %v2218 = vrcp.pop %v2207
    %v2219 = vmul.f32 1.0, %v2218
    %v2220 = vrcp.pop %v2208
    %v2221 = vmul.f32 1.0, %v2220
    %v2222 = vrcp.pop %v2209
    %v2223 = vmul.f32 1.0, %v2222
    %v2224 = vrcp.pop %v2210
    %v2225 = vmul.f32 1.0, %v2224
    %v2226 = vrcp.pop %v2211
    %v2227 = vmul.f32 1.0, %v2226
    %v2228 = vtanh.pop %v2102
    %v2229 = vtanh.pop %v2106
    %v2230 = vtanh.pop %v2110
    %v2231 = vtanh.pop %v2114
    %v2232 = vtanh.pop %v2118
    %v2233 = vtanh.pop %v2122
    %v2234 = vtanh.pop %v2126
    %v2235 = vtanh.pop %v2130
    %v2236 = vxor.u32 %v2103, 2147483648
    %v2237 = vxor.u32 %v2107, 2147483648
    %v2238 = vxor.u32 %v2111, 2147483648
    %v2239 = vxor.u32 %v2115, 2147483648
    %v2240 = vxor.u32 %v2119, 2147483648
    %v2241 = vxor.u32 %v2123, 2147483648
    %v2242 = vxor.u32 %v2127, 2147483648
    %v2243 = vxor.u32 %v2131, 2147483648
    %v2244 = vmul.f32 %v2236, 1.442695
    %v2245 = vpow.pop %v2244
    %v2246 = vmul.f32 %v2237, 1.442695
    %v2247 = vpow.pop %v2246
    %v2248 = vmul.f32 %v2238, 1.442695
    %v2249 = vpow.pop %v2248
    %v2250 = vmul.f32 %v2239, 1.442695
    %v2251 = vpow.pop %v2250
    %v2252 = vmul.f32 %v2240, 1.442695
    %v2253 = vpow.pop %v2252
    %v2254 = vmul.f32 %v2241, 1.442695
    %v2255 = vpow.pop %v2254
    %v2256 = vmul.f32 %v2242, 1.442695
    %v2257 = vpow.pop %v2256
    %v2258 = vmul.f32 %v2243, 1.442695
    %v2259 = vpow.pop %v2258
    %v2260 = vadd.f32 %v2245, 1.0
    %v2261 = vadd.f32 %v2247, 1.0
    %v2262 = vadd.f32 %v2249, 1.0
    %v2263 = vadd.f32 %v2251, 1.0
    %v2264 = vadd.f32 %v2253, 1.0
    %v2265 = vadd.f32 %v2255, 1.0
    %v2266 = vadd.f32 %v2257, 1.0
    %v2267 = vadd.f32 %v2259, 1.0
    %v2268 = vrcp.pop %v2260
    %v2269 = vmul.f32 1.0, %v2268
    %v2270 = vrcp.pop %v2261
    %v2271 = vmul.f32 1.0, %v2270
    %v2272 = vrcp.pop %v2262
    %v2273 = vmul.f32 1.0, %v2272
    %v2274 = vrcp.pop %v2263
    %v2275 = vmul.f32 1.0, %v2274
    %v2276 = vrcp.pop %v2264
    %v2277 = vmul.f32 1.0, %v2276
    %v2278 = vrcp.pop %v2265
    %v2279 = vmul.f32 1.0, %v2278
    %v2280 = vrcp.pop %v2266
    %v2281 = vmul.f32 1.0, %v2280
    %v2282 = vrcp.pop %v2267
    %v2283 = vmul.f32 1.0, %v2282
    %v2292 = vrot.slane %v1839, 7
    %v2293 = vrot.slane %v1840, 7
    %v2294 = vrot.slane %v1841, 7
    %v2295 = vrot.slane %v1842, 7
    %v2296 = vrot.slane %v1843, 7
    %v2297 = vrot.slane %v1844, 7
    %v2298 = vrot.slane %v1845, 7
    %v2299 = vrot.slane %v1846, 7
    %v2308 = vmul.f32 %v2213, %v2292
    %v2309 = vmul.f32 %v2215, %v2293
    %v2310 = vmul.f32 %v2217, %v2294
    %v2311 = vmul.f32 %v2219, %v2295
    %v2312 = vmul.f32 %v2221, %v2296
    %v2313 = vmul.f32 %v2223, %v2297
    %v2314 = vmul.f32 %v2225, %v2298
    %v2315 = vmul.f32 %v2227, %v2299
    %v2316 = vmul.f32 %v2165, %v2228
    %v2317 = vmul.f32 %v2167, %v2229
    %v2318 = vmul.f32 %v2169, %v2230
    %v2319 = vmul.f32 %v2171, %v2231
    %v2320 = vmul.f32 %v2173, %v2232
    %v2321 = vmul.f32 %v2175, %v2233
    %v2322 = vmul.f32 %v2177, %v2234
    %v2323 = vmul.f32 %v2179, %v2235
    %v2324 = vadd.f32 %v2308, %v2316
    %v2325 = vadd.f32 %v2309, %v2317
    %v2326 = vadd.f32 %v2310, %v2318
    %v2327 = vadd.f32 %v2311, %v2319
    %v2328 = vadd.f32 %v2312, %v2320
    %v2329 = vadd.f32 %v2313, %v2321
    %v2330 = vadd.f32 %v2314, %v2322
    %v2331 = vadd.f32 %v2315, %v2323
    %v2332 = vtanh.pop %v2324
    %v2333 = vtanh.pop %v2325
    %v2334 = vtanh.pop %v2326
    %v2335 = vtanh.pop %v2327
    %v2336 = vtanh.pop %v2328
    %v2337 = vtanh.pop %v2329
    %v2338 = vtanh.pop %v2330
    %v2339 = vtanh.pop %v2331
    %v2340 = vmul.f32 %v2269, %v2332
    %v2341 = vmul.f32 %v2271, %v2333
    %v2342 = vmul.f32 %v2273, %v2334
    %v2343 = vmul.f32 %v2275, %v2335
    %v2344 = vmul.f32 %v2277, %v2336
    %v2345 = vmul.f32 %v2279, %v2337
    %v2346 = vmul.f32 %v2281, %v2338
    %v2347 = vmul.f32 %v2283, %v2339
    %2348 = vst [vmem:[#allocation4] sm:$0x8] %v2340
    %2349 = vst [vmem:[#allocation4 + $0x8] sm:$0x8] %v2341
    %2350 = vst [vmem:[#allocation4 + $0x10] sm:$0x8] %v2342
    %2351 = vst [vmem:[#allocation4 + $0x18] sm:$0x8] %v2343
    %2352 = vst [vmem:[#allocation4 + $0x20] sm:$0x8] %v2344
    %2353 = vst [vmem:[#allocation4 + $0x28] sm:$0x8] %v2345
    %2354 = vst [vmem:[#allocation4 + $0x30] sm:$0x8] %v2346
    %2355 = vst [vmem:[#allocation4 + $0x38] sm:$0x8] %v2347
    %v2364 = vrot.slane %v2340, 3
    %v2365 = vrot.slane %v2341, 2
    %v2366 = vsel %vm903, %v2365, %v2364
    %v2367 = vrot.slane %v2342, 1
    %v2368 = vsel %vm906, %v2367, %v2366
    %v2369 = vsel %vm909, %v2343, %v2368
    %v2370 = vrot.slane %v2344, 7
    %v2371 = vsel %vm912, %v2370, %v2369
    %v2372 = vrot.slane %v2345, 6
    %v2373 = vsel %vm915, %v2372, %v2371
    %v2374 = vrot.slane %v2346, 5
    %v2375 = vsel %vm918, %v2374, %v2373
    %v2376 = vrot.slane %v2347, 4
    %v2377 = vsel %vm921, %v2376, %v2375
    %2379 = vmatprep.subr.mxu0 %v377
    %2380 = vmatpush1.msra.mxu0 %v376
    %2381 = vmatprep.subr.mxu0 %v381
    %2382 = vmatpush1.msra.mxu0 %v380
    %2383 = vmatprep.subr.mxu0 %v385
    %2384 = vmatpush1.msra.mxu0 %v384
    %2385 = vmatprep.subr.mxu0 %v389
    %2386 = vmatpush1.msra.mxu0 %v388
    %2387 = vmatprep.subr.mxu0 %v393
    %2388 = vmatpush1.msra.mxu0 %v392
    %2389 = vmatprep.subr.mxu0 %v397
    %2390 = vmatpush1.msra.mxu0 %v396
    %2391 = vmatprep.subr.mxu0 %v401
    %2392 = vmatpush1.msra.mxu0 %v400
    %2393 = vmatprep.subr.mxu0 %v405
    %2394 = vmatpush1.msra.mxu0 %v404
    %2395 = vmatprep.subr.mxu0 %v409
    %2396 = vmatpush1.msra.mxu0 %v408
    %2397 = vmatprep.subr.mxu0 %v413
    %2398 = vmatpush1.msra.mxu0 %v412
    %2399 = vmatprep.subr.mxu0 %v417
    %2400 = vmatpush1.msra.mxu0 %v416
    %2401 = vmatprep.subr.mxu0 %v421
    %2402 = vmatpush1.msra.mxu0 %v420
    %2403 = vmatprep.subr.mxu0 %v425
    %2404 = vmatpush1.msra.mxu0 %v424
    %2405 = vmatprep.subr.mxu0 %v429
    %2406 = vmatpush1.msra.mxu0 %v428
    %2407 = vmatprep.subr.mxu0 %v433
    %2408 = vmatpush1.msra.mxu0 %v432
    %2409 = vmatprep.subr.mxu0 %v437
    %2410 = vmatpush1.msra.mxu0 %v436
    %2411 = vmatprep.subr.mxu0 0.0
    %2412 = vmatpush1.msra.mxu0 0.0
    %2413 = vmatprep.subr.mxu0 0.0
    %2414 = vmatpush1.msra.mxu0 0.0
    %2415 = vmatprep.subr.mxu0 0.0
    %2416 = vmatpush1.msra.mxu0 0.0
    %2417 = vmatprep.subr.mxu0 0.0
    %2418 = vmatpush1.msra.mxu0 0.0
    %2419 = vmatprep.subr.mxu0 0.0
    %2420 = vmatpush1.msra.mxu0 0.0
    %2421 = vmatprep.subr.mxu0 0.0
    %2422 = vmatpush1.msra.mxu0 0.0
    %2423 = vmatprep.subr.mxu0 0.0
    %2424 = vmatpush1.msra.mxu0 0.0
    %2425 = vmatprep.subr.mxu0 0.0
    %2426 = vmatpush1.msra.mxu0 0.0
    %2427 = vmatprep.subr.mxu0 0.0
    %2428 = vmatpush1.msra.mxu0 0.0
    %2429 = vmatprep.subr.mxu0 0.0
    %2430 = vmatpush1.msra.mxu0 0.0
    %2431 = vmatprep.subr.mxu0 0.0
    %2432 = vmatpush1.msra.mxu0 0.0
    %2433 = vmatprep.subr.mxu0 0.0
    %2434 = vmatpush1.msra.mxu0 0.0
    %2435 = vmatprep.subr.mxu0 0.0
    %2436 = vmatpush1.msra.mxu0 0.0
    %2437 = vmatprep.subr.mxu0 0.0
    %2438 = vmatpush1.msra.mxu0 0.0
    %2439 = vmatprep.subr.mxu0 0.0
    %2440 = vmatpush1.msra.mxu0 0.0
    %2441 = vmatprep.subr.mxu0 0.0
    %2442 = vmatpush1.msra.mxu0 0.0
    %2443 = vmatprep.mubr.f32.mxu0 0.0
    %2444 = vmatmul.mubr.f32.gmra.mrb[0].mxu0 %v2377
    %v2445 = vpop.f32.mrb[0].mxu0
    %v2446 = vadd.f32 0.0, %v2445
    %v2447 = vpop.f32.mrb[0].mxu0
    %v2448 = vadd.f32 0.0, %v2447
    %2449 = vdwg.mxu0
    %2450 = vmatprep.subr.mxu0 %v379
    %2451 = vmatpush1.msra.mxu0 %v378
    %2452 = vmatprep.subr.mxu0 %v383
    %2453 = vmatpush1.msra.mxu0 %v382
    %2454 = vmatprep.subr.mxu0 %v387
    %2455 = vmatpush1.msra.mxu0 %v386
    %2456 = vmatprep.subr.mxu0 %v391
    %2457 = vmatpush1.msra.mxu0 %v390
    %2458 = vmatprep.subr.mxu0 %v395
    %2459 = vmatpush1.msra.mxu0 %v394
    %2460 = vmatprep.subr.mxu0 %v399
    %2461 = vmatpush1.msra.mxu0 %v398
    %2462 = vmatprep.subr.mxu0 %v403
    %2463 = vmatpush1.msra.mxu0 %v402
    %2464 = vmatprep.subr.mxu0 %v407
    %2465 = vmatpush1.msra.mxu0 %v406
    %2466 = vmatprep.subr.mxu0 %v411
    %2467 = vmatpush1.msra.mxu0 %v410
    %2468 = vmatprep.subr.mxu0 %v415
    %2469 = vmatpush1.msra.mxu0 %v414
    %2470 = vmatprep.subr.mxu0 %v419
    %2471 = vmatpush1.msra.mxu0 %v418
    %2472 = vmatprep.subr.mxu0 %v423
    %2473 = vmatpush1.msra.mxu0 %v422
    %2474 = vmatprep.subr.mxu0 %v427
    %2475 = vmatpush1.msra.mxu0 %v426
    %2476 = vmatprep.subr.mxu0 %v431
    %2477 = vmatpush1.msra.mxu0 %v430
    %2478 = vmatprep.subr.mxu0 %v435
    %2479 = vmatpush1.msra.mxu0 %v434
    %2480 = vmatprep.subr.mxu0 %v439
    %2481 = vmatpush1.msra.mxu0 %v438
    %2482 = vmatprep.subr.mxu0 0.0
    %2483 = vmatpush1.msra.mxu0 0.0
    %2484 = vmatprep.subr.mxu0 0.0
    %2485 = vmatpush1.msra.mxu0 0.0
    %2486 = vmatprep.subr.mxu0 0.0
    %2487 = vmatpush1.msra.mxu0 0.0
    %2488 = vmatprep.subr.mxu0 0.0
    %2489 = vmatpush1.msra.mxu0 0.0
    %2490 = vmatprep.subr.mxu0 0.0
    %2491 = vmatpush1.msra.mxu0 0.0
    %2492 = vmatprep.subr.mxu0 0.0
    %2493 = vmatpush1.msra.mxu0 0.0
    %2494 = vmatprep.subr.mxu0 0.0
    %2495 = vmatpush1.msra.mxu0 0.0
    %2496 = vmatprep.subr.mxu0 0.0
    %2497 = vmatpush1.msra.mxu0 0.0
    %2498 = vmatprep.subr.mxu0 0.0
    %2499 = vmatpush1.msra.mxu0 0.0
    %2500 = vmatprep.subr.mxu0 0.0
    %2501 = vmatpush1.msra.mxu0 0.0
    %2502 = vmatprep.subr.mxu0 0.0
    %2503 = vmatpush1.msra.mxu0 0.0
    %2504 = vmatprep.subr.mxu0 0.0
    %2505 = vmatpush1.msra.mxu0 0.0
    %2506 = vmatprep.subr.mxu0 0.0
    %2507 = vmatpush1.msra.mxu0 0.0
    %2508 = vmatprep.subr.mxu0 0.0
    %2509 = vmatpush1.msra.mxu0 0.0
    %2510 = vmatprep.subr.mxu0 0.0
    %2511 = vmatpush1.msra.mxu0 0.0
    %2512 = vmatprep.subr.mxu0 0.0
    %2513 = vmatpush1.msra.mxu0 0.0
    %2514 = vmatprep.mubr.f32.mxu0 0.0
    %2515 = vmatmul.mubr.f32.gmra.mrb[0].mxu0 %v2377
    %v2516 = vpop.f32.mrb[0].mxu0
    %v2517 = vadd.f32 0.0, %v2516
    %v2518 = vpop.f32.mrb[0].mxu0
    %v2519 = vadd.f32 0.0, %v2518
    %2520 = vdwg.mxu0
    %v2525 = vrot.slane %v2446, 4
    %v2526 = vrot.slane %v2448, 4
    %v2527 = vrot.slane %v2517, 4
    %v2528 = vrot.slane %v2519, 4
    %v2529 = vrot.slane %v2446, 5
    %v2530 = vrot.slane %v2448, 5
    %v2531 = vrot.slane %v2517, 5
    %v2532 = vrot.slane %v2519, 5
    %v2533 = vrot.slane %v2446, 6
    %v2534 = vrot.slane %v2448, 6
    %v2535 = vrot.slane %v2517, 6
    %v2536 = vrot.slane %v2519, 6
    %v2537 = vrot.slane %v2446, 7
    %v2538 = vrot.slane %v2448, 7
    %v2539 = vrot.slane %v2517, 7
    %v2540 = vrot.slane %v2519, 7
    %v2541 = vrot.slane %v2446, 1
    %v2542 = vrot.slane %v2448, 1
    %v2543 = vrot.slane %v2517, 1
    %v2544 = vrot.slane %v2519, 1
    %v2545 = vrot.slane %v2446, 2
    %v2546 = vrot.slane %v2448, 2
    %v2547 = vrot.slane %v2517, 2
    %v2548 = vrot.slane %v2519, 2
    %v2549 = vrot.slane %v2446, 3
    %v2550 = vrot.slane %v2448, 3
    %v2551 = vrot.slane %v2517, 3
    %v2552 = vrot.slane %v2519, 3
    %v2585 = vadd.f32 %v215, %v2525
    %v2586 = vadd.f32 %v217, %v2526
    %v2587 = vadd.f32 %v328, %v2527
    %v2588 = vadd.f32 %v330, %v2528
    %v2589 = vadd.f32 %v221, %v2529
    %v2590 = vadd.f32 %v223, %v2530
    %v2591 = vadd.f32 %v334, %v2531
    %v2592 = vadd.f32 %v336, %v2532
    %v2593 = vadd.f32 %v227, %v2533
    %v2594 = vadd.f32 %v229, %v2534
    %v2595 = vadd.f32 %v340, %v2535
    %v2596 = vadd.f32 %v342, %v2536
    %v2597 = vadd.f32 %v233, %v2537
    %v2598 = vadd.f32 %v235, %v2538
    %v2599 = vadd.f32 %v346, %v2539
    %v2600 = vadd.f32 %v348, %v2540
    %v2601 = vadd.f32 %v239, %v2446
    %v2602 = vadd.f32 %v241, %v2448
    %v2603 = vadd.f32 %v352, %v2517
    %v2604 = vadd.f32 %v354, %v2519
    %v2605 = vadd.f32 %v245, %v2541
    %v2606 = vadd.f32 %v247, %v2542
    %v2607 = vadd.f32 %v358, %v2543
    %v2608 = vadd.f32 %v360, %v2544
    %v2609 = vadd.f32 %v251, %v2545
    %v2610 = vadd.f32 %v253, %v2546
    %v2611 = vadd.f32 %v364, %v2547
    %v2612 = vadd.f32 %v366, %v2548
    %v2613 = vadd.f32 %v257, %v2549
    %v2614 = vadd.f32 %v259, %v2550
    %v2615 = vadd.f32 %v370, %v2551
    %v2616 = vadd.f32 %v372, %v2552
    %v2617 = vxor.u32 %v2585, 2147483648
    %v2618 = vxor.u32 %v2589, 2147483648
    %v2619 = vxor.u32 %v2593, 2147483648
    %v2620 = vxor.u32 %v2597, 2147483648
    %v2621 = vxor.u32 %v2601, 2147483648
    %v2622 = vxor.u32 %v2605, 2147483648
    %v2623 = vxor.u32 %v2609, 2147483648
    %v2624 = vxor.u32 %v2613, 2147483648
    %v2625 = vmul.f32 %v2617, 1.442695
    %v2626 = vpow.pop %v2625
    %v2627 = vmul.f32 %v2618, 1.442695
    %v2628 = vpow.pop %v2627
    %v2629 = vmul.f32 %v2619, 1.442695
    %v2630 = vpow.pop %v2629
    %v2631 = vmul.f32 %v2620, 1.442695
    %v2632 = vpow.pop %v2631
    %v2633 = vmul.f32 %v2621, 1.442695
    %v2634 = vpow.pop %v2633
    %v2635 = vmul.f32 %v2622, 1.442695
    %v2636 = vpow.pop %v2635
    %v2637 = vmul.f32 %v2623, 1.442695
    %v2638 = vpow.pop %v2637
    %v2639 = vmul.f32 %v2624, 1.442695
    %v2640 = vpow.pop %v2639
    %v2641 = vadd.f32 %v2626, 1.0
    %v2642 = vadd.f32 %v2628, 1.0
    %v2643 = vadd.f32 %v2630, 1.0
    %v2644 = vadd.f32 %v2632, 1.0
    %v2645 = vadd.f32 %v2634, 1.0
    %v2646 = vadd.f32 %v2636, 1.0
    %v2647 = vadd.f32 %v2638, 1.0
    %v2648 = vadd.f32 %v2640, 1.0
    %v2649 = vrcp.pop %v2641
    %v2650 = vmul.f32 1.0, %v2649
    %v2651 = vrcp.pop %v2642
    %v2652 = vmul.f32 1.0, %v2651
    %v2653 = vrcp.pop %v2643
    %v2654 = vmul.f32 1.0, %v2653
    %v2655 = vrcp.pop %v2644
    %v2656 = vmul.f32 1.0, %v2655
    %v2657 = vrcp.pop %v2645
    %v2658 = vmul.f32 1.0, %v2657
    %v2659 = vrcp.pop %v2646
    %v2660 = vmul.f32 1.0, %v2659
    %v2661 = vrcp.pop %v2647
    %v2662 = vmul.f32 1.0, %v2661
    %v2663 = vrcp.pop %v2648
    %v2664 = vmul.f32 1.0, %v2663
    %v2665 = vxor.u32 %v2586, 2147483648
    %v2666 = vxor.u32 %v2590, 2147483648
    %v2667 = vxor.u32 %v2594, 2147483648
    %v2668 = vxor.u32 %v2598, 2147483648
    %v2669 = vxor.u32 %v2602, 2147483648
    %v2670 = vxor.u32 %v2606, 2147483648
    %v2671 = vxor.u32 %v2610, 2147483648
    %v2672 = vxor.u32 %v2614, 2147483648
    %v2673 = vmul.f32 %v2665, 1.442695
    %v2674 = vpow.pop %v2673
    %v2675 = vmul.f32 %v2666, 1.442695
    %v2676 = vpow.pop %v2675
    %v2677 = vmul.f32 %v2667, 1.442695
    %v2678 = vpow.pop %v2677
    %v2679 = vmul.f32 %v2668, 1.442695
    %v2680 = vpow.pop %v2679
    %v2681 = vmul.f32 %v2669, 1.442695
    %v2682 = vpow.pop %v2681
    %v2683 = vmul.f32 %v2670, 1.442695
    %v2684 = vpow.pop %v2683
    %v2685 = vmul.f32 %v2671, 1.442695
    %v2686 = vpow.pop %v2685
    %v2687 = vmul.f32 %v2672, 1.442695
    %v2688 = vpow.pop %v2687
    %v2689 = vadd.f32 %v2674, 1.0
    %v2690 = vadd.f32 %v2676, 1.0
    %v2691 = vadd.f32 %v2678, 1.0
    %v2692 = vadd.f32 %v2680, 1.0
    %v2693 = vadd.f32 %v2682, 1.0
    %v2694 = vadd.f32 %v2684, 1.0
    %v2695 = vadd.f32 %v2686, 1.0
    %v2696 = vadd.f32 %v2688, 1.0
    %v2697 = vrcp.pop %v2689
    %v2698 = vmul.f32 1.0, %v2697
    %v2699 = vrcp.pop %v2690
    %v2700 = vmul.f32 1.0, %v2699
    %v2701 = vrcp.pop %v2691
    %v2702 = vmul.f32 1.0, %v2701
    %v2703 = vrcp.pop %v2692
    %v2704 = vmul.f32 1.0, %v2703
    %v2705 = vrcp.pop %v2693
    %v2706 = vmul.f32 1.0, %v2705
    %v2707 = vrcp.pop %v2694
    %v2708 = vmul.f32 1.0, %v2707
    %v2709 = vrcp.pop %v2695
    %v2710 = vmul.f32 1.0, %v2709
    %v2711 = vrcp.pop %v2696
    %v2712 = vmul.f32 1.0, %v2711
    %v2713 = vtanh.pop %v2587
    %v2714 = vtanh.pop %v2591
    %v2715 = vtanh.pop %v2595
    %v2716 = vtanh.pop %v2599
    %v2717 = vtanh.pop %v2603
    %v2718 = vtanh.pop %v2607
    %v2719 = vtanh.pop %v2611
    %v2720 = vtanh.pop %v2615
    %v2721 = vxor.u32 %v2588, 2147483648
    %v2722 = vxor.u32 %v2592, 2147483648
    %v2723 = vxor.u32 %v2596, 2147483648
    %v2724 = vxor.u32 %v2600, 2147483648
    %v2725 = vxor.u32 %v2604, 2147483648
    %v2726 = vxor.u32 %v2608, 2147483648
    %v2727 = vxor.u32 %v2612, 2147483648
    %v2728 = vxor.u32 %v2616, 2147483648
    %v2729 = vmul.f32 %v2721, 1.442695
    %v2730 = vpow.pop %v2729
    %v2731 = vmul.f32 %v2722, 1.442695
    %v2732 = vpow.pop %v2731
    %v2733 = vmul.f32 %v2723, 1.442695
    %v2734 = vpow.pop %v2733
    %v2735 = vmul.f32 %v2724, 1.442695
    %v2736 = vpow.pop %v2735
    %v2737 = vmul.f32 %v2725, 1.442695
    %v2738 = vpow.pop %v2737
    %v2739 = vmul.f32 %v2726, 1.442695
    %v2740 = vpow.pop %v2739
    %v2741 = vmul.f32 %v2727, 1.442695
    %v2742 = vpow.pop %v2741
    %v2743 = vmul.f32 %v2728, 1.442695
    %v2744 = vpow.pop %v2743
    %v2745 = vadd.f32 %v2730, 1.0
    %v2746 = vadd.f32 %v2732, 1.0
    %v2747 = vadd.f32 %v2734, 1.0
    %v2748 = vadd.f32 %v2736, 1.0
    %v2749 = vadd.f32 %v2738, 1.0
    %v2750 = vadd.f32 %v2740, 1.0
    %v2751 = vadd.f32 %v2742, 1.0
    %v2752 = vadd.f32 %v2744, 1.0
    %v2753 = vrcp.pop %v2745
    %v2754 = vmul.f32 1.0, %v2753
    %v2755 = vrcp.pop %v2746
    %v2756 = vmul.f32 1.0, %v2755
    %v2757 = vrcp.pop %v2747
    %v2758 = vmul.f32 1.0, %v2757
    %v2759 = vrcp.pop %v2748
    %v2760 = vmul.f32 1.0, %v2759
    %v2761 = vrcp.pop %v2749
    %v2762 = vmul.f32 1.0, %v2761
    %v2763 = vrcp.pop %v2750
    %v2764 = vmul.f32 1.0, %v2763
    %v2765 = vrcp.pop %v2751
    %v2766 = vmul.f32 1.0, %v2765
    %v2767 = vrcp.pop %v2752
    %v2768 = vmul.f32 1.0, %v2767
    %v2777 = vrot.slane %v2324, 7
    %v2778 = vrot.slane %v2325, 7
    %v2779 = vrot.slane %v2326, 7
    %v2780 = vrot.slane %v2327, 7
    %v2781 = vrot.slane %v2328, 7
    %v2782 = vrot.slane %v2329, 7
    %v2783 = vrot.slane %v2330, 7
    %v2784 = vrot.slane %v2331, 7
    %v2793 = vmul.f32 %v2698, %v2777
    %v2794 = vmul.f32 %v2700, %v2778
    %v2795 = vmul.f32 %v2702, %v2779
    %v2796 = vmul.f32 %v2704, %v2780
    %v2797 = vmul.f32 %v2706, %v2781
    %v2798 = vmul.f32 %v2708, %v2782
    %v2799 = vmul.f32 %v2710, %v2783
    %v2800 = vmul.f32 %v2712, %v2784
    %v2801 = vmul.f32 %v2650, %v2713
    %v2802 = vmul.f32 %v2652, %v2714
    %v2803 = vmul.f32 %v2654, %v2715
    %v2804 = vmul.f32 %v2656, %v2716
    %v2805 = vmul.f32 %v2658, %v2717
    %v2806 = vmul.f32 %v2660, %v2718
    %v2807 = vmul.f32 %v2662, %v2719
    %v2808 = vmul.f32 %v2664, %v2720
    %v2809 = vadd.f32 %v2793, %v2801
    %v2810 = vadd.f32 %v2794, %v2802
    %v2811 = vadd.f32 %v2795, %v2803
    %v2812 = vadd.f32 %v2796, %v2804
    %v2813 = vadd.f32 %v2797, %v2805
    %v2814 = vadd.f32 %v2798, %v2806
    %v2815 = vadd.f32 %v2799, %v2807
    %v2816 = vadd.f32 %v2800, %v2808
    %v2817 = vtanh.pop %v2809
    %v2818 = vtanh.pop %v2810
    %v2819 = vtanh.pop %v2811
    %v2820 = vtanh.pop %v2812
    %v2821 = vtanh.pop %v2813
    %v2822 = vtanh.pop %v2814
    %v2823 = vtanh.pop %v2815
    %v2824 = vtanh.pop %v2816
    %v2825 = vmul.f32 %v2754, %v2817
    %v2826 = vmul.f32 %v2756, %v2818
    %v2827 = vmul.f32 %v2758, %v2819
    %v2828 = vmul.f32 %v2760, %v2820
    %v2829 = vmul.f32 %v2762, %v2821
    %v2830 = vmul.f32 %v2764, %v2822
    %v2831 = vmul.f32 %v2766, %v2823
    %v2832 = vmul.f32 %v2768, %v2824
    %2833 = vst [vmem:[#allocation4] sm:$0x10] %v2825
    %2834 = vst [vmem:[#allocation4 + $0x8] sm:$0x10] %v2826
    %2835 = vst [vmem:[#allocation4 + $0x10] sm:$0x10] %v2827
    %2836 = vst [vmem:[#allocation4 + $0x18] sm:$0x10] %v2828
    %2837 = vst [vmem:[#allocation4 + $0x20] sm:$0x10] %v2829
    %2838 = vst [vmem:[#allocation4 + $0x28] sm:$0x10] %v2830
    %2839 = vst [vmem:[#allocation4 + $0x30] sm:$0x10] %v2831
    %2840 = vst [vmem:[#allocation4 + $0x38] sm:$0x10] %v2832
    %v2849 = vrot.slane %v2825, 4
    %v2850 = vrot.slane %v2826, 3
    %v2851 = vsel %vm903, %v2850, %v2849
    %v2852 = vrot.slane %v2827, 2
    %v2853 = vsel %vm906, %v2852, %v2851
    %v2854 = vrot.slane %v2828, 1
    %v2855 = vsel %vm909, %v2854, %v2853
    %v2856 = vsel %vm912, %v2829, %v2855
    %v2857 = vrot.slane %v2830, 7
    %v2858 = vsel %vm915, %v2857, %v2856
    %v2859 = vrot.slane %v2831, 6
    %v2860 = vsel %vm918, %v2859, %v2858
    %v2861 = vrot.slane %v2832, 5
    %v2862 = vsel %vm921, %v2861, %v2860
    %2864 = vmatprep.subr.mxu0 %v377
    %2865 = vmatpush1.msra.mxu0 %v376
    %2866 = vmatprep.subr.mxu0 %v381
    %2867 = vmatpush1.msra.mxu0 %v380
    %2868 = vmatprep.subr.mxu0 %v385
    %2869 = vmatpush1.msra.mxu0 %v384
    %2870 = vmatprep.subr.mxu0 %v389
    %2871 = vmatpush1.msra.mxu0 %v388
    %2872 = vmatprep.subr.mxu0 %v393
    %2873 = vmatpush1.msra.mxu0 %v392
    %2874 = vmatprep.subr.mxu0 %v397
    %2875 = vmatpush1.msra.mxu0 %v396
    %2876 = vmatprep.subr.mxu0 %v401
    %2877 = vmatpush1.msra.mxu0 %v400
    %2878 = vmatprep.subr.mxu0 %v405
    %2879 = vmatpush1.msra.mxu0 %v404
    %2880 = vmatprep.subr.mxu0 %v409
    %2881 = vmatpush1.msra.mxu0 %v408
    %2882 = vmatprep.subr.mxu0 %v413
    %2883 = vmatpush1.msra.mxu0 %v412
    %2884 = vmatprep.subr.mxu0 %v417
    %2885 = vmatpush1.msra.mxu0 %v416
    %2886 = vmatprep.subr.mxu0 %v421
    %2887 = vmatpush1.msra.mxu0 %v420
    %2888 = vmatprep.subr.mxu0 %v425
    %2889 = vmatpush1.msra.mxu0 %v424
    %2890 = vmatprep.subr.mxu0 %v429
    %2891 = vmatpush1.msra.mxu0 %v428
    %2892 = vmatprep.subr.mxu0 %v433
    %2893 = vmatpush1.msra.mxu0 %v432
    %2894 = vmatprep.subr.mxu0 %v437
    %2895 = vmatpush1.msra.mxu0 %v436
    %2896 = vmatprep.subr.mxu0 0.0
    %2897 = vmatpush1.msra.mxu0 0.0
    %2898 = vmatprep.subr.mxu0 0.0
    %2899 = vmatpush1.msra.mxu0 0.0
    %2900 = vmatprep.subr.mxu0 0.0
    %2901 = vmatpush1.msra.mxu0 0.0
    %2902 = vmatprep.subr.mxu0 0.0
    %2903 = vmatpush1.msra.mxu0 0.0
    %2904 = vmatprep.subr.mxu0 0.0
    %2905 = vmatpush1.msra.mxu0 0.0
    %2906 = vmatprep.subr.mxu0 0.0
    %2907 = vmatpush1.msra.mxu0 0.0
    %2908 = vmatprep.subr.mxu0 0.0
    %2909 = vmatpush1.msra.mxu0 0.0
    %2910 = vmatprep.subr.mxu0 0.0
    %2911 = vmatpush1.msra.mxu0 0.0
    %2912 = vmatprep.subr.mxu0 0.0
    %2913 = vmatpush1.msra.mxu0 0.0
    %2914 = vmatprep.subr.mxu0 0.0
    %2915 = vmatpush1.msra.mxu0 0.0
    %2916 = vmatprep.subr.mxu0 0.0
    %2917 = vmatpush1.msra.mxu0 0.0
    %2918 = vmatprep.subr.mxu0 0.0
    %2919 = vmatpush1.msra.mxu0 0.0
    %2920 = vmatprep.subr.mxu0 0.0
    %2921 = vmatpush1.msra.mxu0 0.0
    %2922 = vmatprep.subr.mxu0 0.0
    %2923 = vmatpush1.msra.mxu0 0.0
    %2924 = vmatprep.subr.mxu0 0.0
    %2925 = vmatpush1.msra.mxu0 0.0
    %2926 = vmatprep.subr.mxu0 0.0
    %2927 = vmatpush1.msra.mxu0 0.0
    %2928 = vmatprep.mubr.f32.mxu0 0.0
    %2929 = vmatmul.mubr.f32.gmra.mrb[0].mxu0 %v2862
    %v2930 = vpop.f32.mrb[0].mxu0
    %v2931 = vadd.f32 0.0, %v2930
    %v2932 = vpop.f32.mrb[0].mxu0
    %v2933 = vadd.f32 0.0, %v2932
    %2934 = vdwg.mxu0
    %2935 = vmatprep.subr.mxu0 %v379
    %2936 = vmatpush1.msra.mxu0 %v378
    %2937 = vmatprep.subr.mxu0 %v383
    %2938 = vmatpush1.msra.mxu0 %v382
    %2939 = vmatprep.subr.mxu0 %v387
    %2940 = vmatpush1.msra.mxu0 %v386
    %2941 = vmatprep.subr.mxu0 %v391
    %2942 = vmatpush1.msra.mxu0 %v390
    %2943 = vmatprep.subr.mxu0 %v395
    %2944 = vmatpush1.msra.mxu0 %v394
    %2945 = vmatprep.subr.mxu0 %v399
    %2946 = vmatpush1.msra.mxu0 %v398
    %2947 = vmatprep.subr.mxu0 %v403
    %2948 = vmatpush1.msra.mxu0 %v402
    %2949 = vmatprep.subr.mxu0 %v407
    %2950 = vmatpush1.msra.mxu0 %v406
    %2951 = vmatprep.subr.mxu0 %v411
    %2952 = vmatpush1.msra.mxu0 %v410
    %2953 = vmatprep.subr.mxu0 %v415
    %2954 = vmatpush1.msra.mxu0 %v414
    %2955 = vmatprep.subr.mxu0 %v419
    %2956 = vmatpush1.msra.mxu0 %v418
    %2957 = vmatprep.subr.mxu0 %v423
    %2958 = vmatpush1.msra.mxu0 %v422
    %2959 = vmatprep.subr.mxu0 %v427
    %2960 = vmatpush1.msra.mxu0 %v426
    %2961 = vmatprep.subr.mxu0 %v431
    %2962 = vmatpush1.msra.mxu0 %v430
    %2963 = vmatprep.subr.mxu0 %v435
    %2964 = vmatpush1.msra.mxu0 %v434
    %2965 = vmatprep.subr.mxu0 %v439
    %2966 = vmatpush1.msra.mxu0 %v438
    %2967 = vmatprep.subr.mxu0 0.0
    %2968 = vmatpush1.msra.mxu0 0.0
    %2969 = vmatprep.subr.mxu0 0.0
    %2970 = vmatpush1.msra.mxu0 0.0
    %2971 = vmatprep.subr.mxu0 0.0
    %2972 = vmatpush1.msra.mxu0 0.0
    %2973 = vmatprep.subr.mxu0 0.0
    %2974 = vmatpush1.msra.mxu0 0.0
    %2975 = vmatprep.subr.mxu0 0.0
    %2976 = vmatpush1.msra.mxu0 0.0
    %2977 = vmatprep.subr.mxu0 0.0
    %2978 = vmatpush1.msra.mxu0 0.0
    %2979 = vmatprep.subr.mxu0 0.0
    %2980 = vmatpush1.msra.mxu0 0.0
    %2981 = vmatprep.subr.mxu0 0.0
    %2982 = vmatpush1.msra.mxu0 0.0
    %2983 = vmatprep.subr.mxu0 0.0
    %2984 = vmatpush1.msra.mxu0 0.0
    %2985 = vmatprep.subr.mxu0 0.0
    %2986 = vmatpush1.msra.mxu0 0.0
    %2987 = vmatprep.subr.mxu0 0.0
    %2988 = vmatpush1.msra.mxu0 0.0
    %2989 = vmatprep.subr.mxu0 0.0
    %2990 = vmatpush1.msra.mxu0 0.0
    %2991 = vmatprep.subr.mxu0 0.0
    %2992 = vmatpush1.msra.mxu0 0.0
    %2993 = vmatprep.subr.mxu0 0.0
    %2994 = vmatpush1.msra.mxu0 0.0
    %2995 = vmatprep.subr.mxu0 0.0
    %2996 = vmatpush1.msra.mxu0 0.0
    %2997 = vmatprep.subr.mxu0 0.0
    %2998 = vmatpush1.msra.mxu0 0.0
    %2999 = vmatprep.mubr.f32.mxu0 0.0
    %3000 = vmatmul.mubr.f32.gmra.mrb[0].mxu0 %v2862
    %v3001 = vpop.f32.mrb[0].mxu0
    %v3002 = vadd.f32 0.0, %v3001
    %v3003 = vpop.f32.mrb[0].mxu0
    %v3004 = vadd.f32 0.0, %v3003
    %3005 = vdwg.mxu0
    %v3010 = vrot.slane %v2931, 3
    %v3011 = vrot.slane %v2933, 3
    %v3012 = vrot.slane %v3002, 3
    %v3013 = vrot.slane %v3004, 3
    %v3014 = vrot.slane %v2931, 4
    %v3015 = vrot.slane %v2933, 4
    %v3016 = vrot.slane %v3002, 4
    %v3017 = vrot.slane %v3004, 4
    %v3018 = vrot.slane %v2931, 5
    %v3019 = vrot.slane %v2933, 5
    %v3020 = vrot.slane %v3002, 5
    %v3021 = vrot.slane %v3004, 5
    %v3022 = vrot.slane %v2931, 6
    %v3023 = vrot.slane %v2933, 6
    %v3024 = vrot.slane %v3002, 6
    %v3025 = vrot.slane %v3004, 6
    %v3026 = vrot.slane %v2931, 7
    %v3027 = vrot.slane %v2933, 7
    %v3028 = vrot.slane %v3002, 7
    %v3029 = vrot.slane %v3004, 7
    %v3030 = vrot.slane %v2931, 1
    %v3031 = vrot.slane %v2933, 1
    %v3032 = vrot.slane %v3002, 1
    %v3033 = vrot.slane %v3004, 1
    %v3034 = vrot.slane %v2931, 2
    %v3035 = vrot.slane %v2933, 2
    %v3036 = vrot.slane %v3002, 2
    %v3037 = vrot.slane %v3004, 2
    %v3070 = vadd.f32 %v215, %v3010
    %v3071 = vadd.f32 %v217, %v3011
    %v3072 = vadd.f32 %v328, %v3012
    %v3073 = vadd.f32 %v330, %v3013
    %v3074 = vadd.f32 %v221, %v3014
    %v3075 = vadd.f32 %v223, %v3015
    %v3076 = vadd.f32 %v334, %v3016
    %v3077 = vadd.f32 %v336, %v3017
    %v3078 = vadd.f32 %v227, %v3018
    %v3079 = vadd.f32 %v229, %v3019
    %v3080 = vadd.f32 %v340, %v3020
    %v3081 = vadd.f32 %v342, %v3021
    %v3082 = vadd.f32 %v233, %v3022
    %v3083 = vadd.f32 %v235, %v3023
    %v3084 = vadd.f32 %v346, %v3024
    %v3085 = vadd.f32 %v348, %v3025
    %v3086 = vadd.f32 %v239, %v3026
    %v3087 = vadd.f32 %v241, %v3027
    %v3088 = vadd.f32 %v352, %v3028
    %v3089 = vadd.f32 %v354, %v3029
    %v3090 = vadd.f32 %v245, %v2931
    %v3091 = vadd.f32 %v247, %v2933
    %v3092 = vadd.f32 %v358, %v3002
    %v3093 = vadd.f32 %v360, %v3004
    %v3094 = vadd.f32 %v251, %v3030
    %v3095 = vadd.f32 %v253, %v3031
    %v3096 = vadd.f32 %v364, %v3032
    %v3097 = vadd.f32 %v366, %v3033
    %v3098 = vadd.f32 %v257, %v3034
    %v3099 = vadd.f32 %v259, %v3035
    %v3100 = vadd.f32 %v370, %v3036
    %v3101 = vadd.f32 %v372, %v3037
    %v3102 = vxor.u32 %v3070, 2147483648
    %v3103 = vxor.u32 %v3074, 2147483648
    %v3104 = vxor.u32 %v3078, 2147483648
    %v3105 = vxor.u32 %v3082, 2147483648
    %v3106 = vxor.u32 %v3086, 2147483648
    %v3107 = vxor.u32 %v3090, 2147483648
    %v3108 = vxor.u32 %v3094, 2147483648
    %v3109 = vxor.u32 %v3098, 2147483648
    %v3110 = vmul.f32 %v3102, 1.442695
    %v3111 = vpow.pop %v3110
    %v3112 = vmul.f32 %v3103, 1.442695
    %v3113 = vpow.pop %v3112
    %v3114 = vmul.f32 %v3104, 1.442695
    %v3115 = vpow.pop %v3114
    %v3116 = vmul.f32 %v3105, 1.442695
    %v3117 = vpow.pop %v3116
    %v3118 = vmul.f32 %v3106, 1.442695
    %v3119 = vpow.pop %v3118
    %v3120 = vmul.f32 %v3107, 1.442695
    %v3121 = vpow.pop %v3120
    %v3122 = vmul.f32 %v3108, 1.442695
    %v3123 = vpow.pop %v3122
    %v3124 = vmul.f32 %v3109, 1.442695
    %v3125 = vpow.pop %v3124
    %v3126 = vadd.f32 %v3111, 1.0
    %v3127 = vadd.f32 %v3113, 1.0
    %v3128 = vadd.f32 %v3115, 1.0
    %v3129 = vadd.f32 %v3117, 1.0
    %v3130 = vadd.f32 %v3119, 1.0
    %v3131 = vadd.f32 %v3121, 1.0
    %v3132 = vadd.f32 %v3123, 1.0
    %v3133 = vadd.f32 %v3125, 1.0
    %v3134 = vrcp.pop %v3126
    %v3135 = vmul.f32 1.0, %v3134
    %v3136 = vrcp.pop %v3127
    %v3137 = vmul.f32 1.0, %v3136
    %v3138 = vrcp.pop %v3128
    %v3139 = vmul.f32 1.0, %v3138
    %v3140 = vrcp.pop %v3129
    %v3141 = vmul.f32 1.0, %v3140
    %v3142 = vrcp.pop %v3130
    %v3143 = vmul.f32 1.0, %v3142
    %v3144 = vrcp.pop %v3131
    %v3145 = vmul.f32 1.0, %v3144
    %v3146 = vrcp.pop %v3132
    %v3147 = vmul.f32 1.0, %v3146
    %v3148 = vrcp.pop %v3133
    %v3149 = vmul.f32 1.0, %v3148
    %v3150 = vxor.u32 %v3071, 2147483648
    %v3151 = vxor.u32 %v3075, 2147483648
    %v3152 = vxor.u32 %v3079, 2147483648
    %v3153 = vxor.u32 %v3083, 2147483648
    %v3154 = vxor.u32 %v3087, 2147483648
    %v3155 = vxor.u32 %v3091, 2147483648
    %v3156 = vxor.u32 %v3095, 2147483648
    %v3157 = vxor.u32 %v3099, 2147483648
    %v3158 = vmul.f32 %v3150, 1.442695
    %v3159 = vpow.pop %v3158
    %v3160 = vmul.f32 %v3151, 1.442695
    %v3161 = vpow.pop %v3160
    %v3162 = vmul.f32 %v3152, 1.442695
    %v3163 = vpow.pop %v3162
    %v3164 = vmul.f32 %v3153, 1.442695
    %v3165 = vpow.pop %v3164
    %v3166 = vmul.f32 %v3154, 1.442695
    %v3167 = vpow.pop %v3166
    %v3168 = vmul.f32 %v3155, 1.442695
    %v3169 = vpow.pop %v3168
    %v3170 = vmul.f32 %v3156, 1.442695
    %v3171 = vpow.pop %v3170
    %v3172 = vmul.f32 %v3157, 1.442695
    %v3173 = vpow.pop %v3172
    %v3174 = vadd.f32 %v3159, 1.0
    %v3175 = vadd.f32 %v3161, 1.0
    %v3176 = vadd.f32 %v3163, 1.0
    %v3177 = vadd.f32 %v3165, 1.0
    %v3178 = vadd.f32 %v3167, 1.0
    %v3179 = vadd.f32 %v3169, 1.0
    %v3180 = vadd.f32 %v3171, 1.0
    %v3181 = vadd.f32 %v3173, 1.0
    %v3182 = vrcp.pop %v3174
    %v3183 = vmul.f32 1.0, %v3182
    %v3184 = vrcp.pop %v3175
    %v3185 = vmul.f32 1.0, %v3184
    %v3186 = vrcp.pop %v3176
    %v3187 = vmul.f32 1.0, %v3186
    %v3188 = vrcp.pop %v3177
    %v3189 = vmul.f32 1.0, %v3188
    %v3190 = vrcp.pop %v3178
    %v3191 = vmul.f32 1.0, %v3190
    %v3192 = vrcp.pop %v3179
    %v3193 = vmul.f32 1.0, %v3192
    %v3194 = vrcp.pop %v3180
    %v3195 = vmul.f32 1.0, %v3194
    %v3196 = vrcp.pop %v3181
    %v3197 = vmul.f32 1.0, %v3196
    %v3198 = vtanh.pop %v3072
    %v3199 = vtanh.pop %v3076
    %v3200 = vtanh.pop %v3080
    %v3201 = vtanh.pop %v3084
    %v3202 = vtanh.pop %v3088
    %v3203 = vtanh.pop %v3092
    %v3204 = vtanh.pop %v3096
    %v3205 = vtanh.pop %v3100
    %v3206 = vxor.u32 %v3073, 2147483648
    %v3207 = vxor.u32 %v3077, 2147483648
    %v3208 = vxor.u32 %v3081, 2147483648
    %v3209 = vxor.u32 %v3085, 2147483648
    %v3210 = vxor.u32 %v3089, 2147483648
    %v3211 = vxor.u32 %v3093, 2147483648
    %v3212 = vxor.u32 %v3097, 2147483648
    %v3213 = vxor.u32 %v3101, 2147483648
    %v3214 = vmul.f32 %v3206, 1.442695
    %v3215 = vpow.pop %v3214
    %v3216 = vmul.f32 %v3207, 1.442695
    %v3217 = vpow.pop %v3216
    %v3218 = vmul.f32 %v3208, 1.442695
    %v3219 = vpow.pop %v3218
    %v3220 = vmul.f32 %v3209, 1.442695
    %v3221 = vpow.pop %v3220
    %v3222 = vmul.f32 %v3210, 1.442695
    %v3223 = vpow.pop %v3222
    %v3224 = vmul.f32 %v3211, 1.442695
    %v3225 = vpow.pop %v3224
    %v3226 = vmul.f32 %v3212, 1.442695
    %v3227 = vpow.pop %v3226
    %v3228 = vmul.f32 %v3213, 1.442695
    %v3229 = vpow.pop %v3228
    %v3230 = vadd.f32 %v3215, 1.0
    %v3231 = vadd.f32 %v3217, 1.0
    %v3232 = vadd.f32 %v3219, 1.0
    %v3233 = vadd.f32 %v3221, 1.0
    %v3234 = vadd.f32 %v3223, 1.0
    %v3235 = vadd.f32 %v3225, 1.0
    %v3236 = vadd.f32 %v3227, 1.0
    %v3237 = vadd.f32 %v3229, 1.0
    %v3238 = vrcp.pop %v3230
    %v3239 = vmul.f32 1.0, %v3238
    %v3240 = vrcp.pop %v3231
    %v3241 = vmul.f32 1.0, %v3240
    %v3242 = vrcp.pop %v3232
    %v3243 = vmul.f32 1.0, %v3242
    %v3244 = vrcp.pop %v3233
    %v3245 = vmul.f32 1.0, %v3244
    %v3246 = vrcp.pop %v3234
    %v3247 = vmul.f32 1.0, %v3246
    %v3248 = vrcp.pop %v3235
    %v3249 = vmul.f32 1.0, %v3248
    %v3250 = vrcp.pop %v3236
    %v3251 = vmul.f32 1.0, %v3250
    %v3252 = vrcp.pop %v3237
    %v3253 = vmul.f32 1.0, %v3252
    %v3262 = vrot.slane %v2809, 7
    %v3263 = vrot.slane %v2810, 7
    %v3264 = vrot.slane %v2811, 7
    %v3265 = vrot.slane %v2812, 7
    %v3266 = vrot.slane %v2813, 7
    %v3267 = vrot.slane %v2814, 7
    %v3268 = vrot.slane %v2815, 7
    %v3269 = vrot.slane %v2816, 7
    %v3278 = vmul.f32 %v3183, %v3262
    %v3279 = vmul.f32 %v3185, %v3263
    %v3280 = vmul.f32 %v3187, %v3264
    %v3281 = vmul.f32 %v3189, %v3265
    %v3282 = vmul.f32 %v3191, %v3266
    %v3283 = vmul.f32 %v3193, %v3267
    %v3284 = vmul.f32 %v3195, %v3268
    %v3285 = vmul.f32 %v3197, %v3269
    %v3286 = vmul.f32 %v3135, %v3198
    %v3287 = vmul.f32 %v3137, %v3199
    %v3288 = vmul.f32 %v3139, %v3200
    %v3289 = vmul.f32 %v3141, %v3201
    %v3290 = vmul.f32 %v3143, %v3202
    %v3291 = vmul.f32 %v3145, %v3203
    %v3292 = vmul.f32 %v3147, %v3204
    %v3293 = vmul.f32 %v3149, %v3205
    %v3294 = vadd.f32 %v3278, %v3286
    %v3295 = vadd.f32 %v3279, %v3287
    %v3296 = vadd.f32 %v3280, %v3288
    %v3297 = vadd.f32 %v3281, %v3289
    %v3298 = vadd.f32 %v3282, %v3290
    %v3299 = vadd.f32 %v3283, %v3291
    %v3300 = vadd.f32 %v3284, %v3292
    %v3301 = vadd.f32 %v3285, %v3293
    %v3302 = vtanh.pop %v3294
    %v3303 = vtanh.pop %v3295
    %v3304 = vtanh.pop %v3296
    %v3305 = vtanh.pop %v3297
    %v3306 = vtanh.pop %v3298
    %v3307 = vtanh.pop %v3299
    %v3308 = vtanh.pop %v3300
    %v3309 = vtanh.pop %v3301
    %v3310 = vmul.f32 %v3239, %v3302
    %v3311 = vmul.f32 %v3241, %v3303
    %v3312 = vmul.f32 %v3243, %v3304
    %v3313 = vmul.f32 %v3245, %v3305
    %v3314 = vmul.f32 %v3247, %v3306
    %v3315 = vmul.f32 %v3249, %v3307
    %v3316 = vmul.f32 %v3251, %v3308
    %v3317 = vmul.f32 %v3253, %v3309
    %3318 = vst [vmem:[#allocation4] sm:$0x20] %v3310
    %3319 = vst [vmem:[#allocation4 + $0x8] sm:$0x20] %v3311
    %3320 = vst [vmem:[#allocation4 + $0x10] sm:$0x20] %v3312
    %3321 = vst [vmem:[#allocation4 + $0x18] sm:$0x20] %v3313
    %3322 = vst [vmem:[#allocation4 + $0x20] sm:$0x20] %v3314
    %3323 = vst [vmem:[#allocation4 + $0x28] sm:$0x20] %v3315
    %3324 = vst [vmem:[#allocation4 + $0x30] sm:$0x20] %v3316
    %3325 = vst [vmem:[#allocation4 + $0x38] sm:$0x20] %v3317
    %v3334 = vrot.slane %v3310, 5
    %v3335 = vrot.slane %v3311, 4
    %v3336 = vsel %vm903, %v3335, %v3334
    %v3337 = vrot.slane %v3312, 3
    %v3338 = vsel %vm906, %v3337, %v3336
    %v3339 = vrot.slane %v3313, 2
    %v3340 = vsel %vm909, %v3339, %v3338
    %v3341 = vrot.slane %v3314, 1
    %v3342 = vsel %vm912, %v3341, %v3340
    %v3343 = vsel %vm915, %v3315, %v3342
    %v3344 = vrot.slane %v3316, 7
    %v3345 = vsel %vm918, %v3344, %v3343
    %v3346 = vrot.slane %v3317, 6
    %v3347 = vsel %vm921, %v3346, %v3345
    %3349 = vmatprep.subr.mxu0 %v377
    %3350 = vmatpush1.msra.mxu0 %v376
    %3351 = vmatprep.subr.mxu0 %v381
    %3352 = vmatpush1.msra.mxu0 %v380
    %3353 = vmatprep.subr.mxu0 %v385
    %3354 = vmatpush1.msra.mxu0 %v384
    %3355 = vmatprep.subr.mxu0 %v389
    %3356 = vmatpush1.msra.mxu0 %v388
    %3357 = vmatprep.subr.mxu0 %v393
    %3358 = vmatpush1.msra.mxu0 %v392
    %3359 = vmatprep.subr.mxu0 %v397
    %3360 = vmatpush1.msra.mxu0 %v396
    %3361 = vmatprep.subr.mxu0 %v401
    %3362 = vmatpush1.msra.mxu0 %v400
    %3363 = vmatprep.subr.mxu0 %v405
    %3364 = vmatpush1.msra.mxu0 %v404
    %3365 = vmatprep.subr.mxu0 %v409
    %3366 = vmatpush1.msra.mxu0 %v408
    %3367 = vmatprep.subr.mxu0 %v413
    %3368 = vmatpush1.msra.mxu0 %v412
    %3369 = vmatprep.subr.mxu0 %v417
    %3370 = vmatpush1.msra.mxu0 %v416
    %3371 = vmatprep.subr.mxu0 %v421
    %3372 = vmatpush1.msra.mxu0 %v420
    %3373 = vmatprep.subr.mxu0 %v425
    %3374 = vmatpush1.msra.mxu0 %v424
    %3375 = vmatprep.subr.mxu0 %v429
    %3376 = vmatpush1.msra.mxu0 %v428
    %3377 = vmatprep.subr.mxu0 %v433
    %3378 = vmatpush1.msra.mxu0 %v432
    %3379 = vmatprep.subr.mxu0 %v437
    %3380 = vmatpush1.msra.mxu0 %v436
    %3381 = vmatprep.subr.mxu0 0.0
    %3382 = vmatpush1.msra.mxu0 0.0
    %3383 = vmatprep.subr.mxu0 0.0
    %3384 = vmatpush1.msra.mxu0 0.0
    %3385 = vmatprep.subr.mxu0 0.0
    %3386 = vmatpush1.msra.mxu0 0.0
    %3387 = vmatprep.subr.mxu0 0.0
    %3388 = vmatpush1.msra.mxu0 0.0
    %3389 = vmatprep.subr.mxu0 0.0
    %3390 = vmatpush1.msra.mxu0 0.0
    %3391 = vmatprep.subr.mxu0 0.0
    %3392 = vmatpush1.msra.mxu0 0.0
    %3393 = vmatprep.subr.mxu0 0.0
    %3394 = vmatpush1.msra.mxu0 0.0
    %3395 = vmatprep.subr.mxu0 0.0
    %3396 = vmatpush1.msra.mxu0 0.0
    %3397 = vmatprep.subr.mxu0 0.0
    %3398 = vmatpush1.msra.mxu0 0.0
    %3399 = vmatprep.subr.mxu0 0.0
    %3400 = vmatpush1.msra.mxu0 0.0
    %3401 = vmatprep.subr.mxu0 0.0
    %3402 = vmatpush1.msra.mxu0 0.0
    %3403 = vmatprep.subr.mxu0 0.0
    %3404 = vmatpush1.msra.mxu0 0.0
    %3405 = vmatprep.subr.mxu0 0.0
    %3406 = vmatpush1.msra.mxu0 0.0
    %3407 = vmatprep.subr.mxu0 0.0
    %3408 = vmatpush1.msra.mxu0 0.0
    %3409 = vmatprep.subr.mxu0 0.0
    %3410 = vmatpush1.msra.mxu0 0.0
    %3411 = vmatprep.subr.mxu0 0.0
    %3412 = vmatpush1.msra.mxu0 0.0
    %3413 = vmatprep.mubr.f32.mxu0 0.0
    %3414 = vmatmul.mubr.f32.gmra.mrb[0].mxu0 %v3347
    %v3415 = vpop.f32.mrb[0].mxu0
    %v3416 = vadd.f32 0.0, %v3415
    %v3417 = vpop.f32.mrb[0].mxu0
    %v3418 = vadd.f32 0.0, %v3417
    %3419 = vdwg.mxu0
    %3420 = vmatprep.subr.mxu0 %v379
    %3421 = vmatpush1.msra.mxu0 %v378
    %3422 = vmatprep.subr.mxu0 %v383
    %3423 = vmatpush1.msra.mxu0 %v382
    %3424 = vmatprep.subr.mxu0 %v387
    %3425 = vmatpush1.msra.mxu0 %v386
    %3426 = vmatprep.subr.mxu0 %v391
    %3427 = vmatpush1.msra.mxu0 %v390
    %3428 = vmatprep.subr.mxu0 %v395
    %3429 = vmatpush1.msra.mxu0 %v394
    %3430 = vmatprep.subr.mxu0 %v399
    %3431 = vmatpush1.msra.mxu0 %v398
    %3432 = vmatprep.subr.mxu0 %v403
    %3433 = vmatpush1.msra.mxu0 %v402
    %3434 = vmatprep.subr.mxu0 %v407
    %3435 = vmatpush1.msra.mxu0 %v406
    %3436 = vmatprep.subr.mxu0 %v411
    %3437 = vmatpush1.msra.mxu0 %v410
    %3438 = vmatprep.subr.mxu0 %v415
    %3439 = vmatpush1.msra.mxu0 %v414
    %3440 = vmatprep.subr.mxu0 %v419
    %3441 = vmatpush1.msra.mxu0 %v418
    %3442 = vmatprep.subr.mxu0 %v423
    %3443 = vmatpush1.msra.mxu0 %v422
    %3444 = vmatprep.subr.mxu0 %v427
    %3445 = vmatpush1.msra.mxu0 %v426
    %3446 = vmatprep.subr.mxu0 %v431
    %3447 = vmatpush1.msra.mxu0 %v430
    %3448 = vmatprep.subr.mxu0 %v435
    %3449 = vmatpush1.msra.mxu0 %v434
    %3450 = vmatprep.subr.mxu0 %v439
    %3451 = vmatpush1.msra.mxu0 %v438
    %3452 = vmatprep.subr.mxu0 0.0
    %3453 = vmatpush1.msra.mxu0 0.0
    %3454 = vmatprep.subr.mxu0 0.0
    %3455 = vmatpush1.msra.mxu0 0.0
    %3456 = vmatprep.subr.mxu0 0.0
    %3457 = vmatpush1.msra.mxu0 0.0
    %3458 = vmatprep.subr.mxu0 0.0
    %3459 = vmatpush1.msra.mxu0 0.0
    %3460 = vmatprep.subr.mxu0 0.0
    %3461 = vmatpush1.msra.mxu0 0.0
    %3462 = vmatprep.subr.mxu0 0.0
    %3463 = vmatpush1.msra.mxu0 0.0
    %3464 = vmatprep.subr.mxu0 0.0
    %3465 = vmatpush1.msra.mxu0 0.0
    %3466 = vmatprep.subr.mxu0 0.0
    %3467 = vmatpush1.msra.mxu0 0.0
    %3468 = vmatprep.subr.mxu0 0.0
    %3469 = vmatpush1.msra.mxu0 0.0
    %3470 = vmatprep.subr.mxu0 0.0
    %3471 = vmatpush1.msra.mxu0 0.0
    %3472 = vmatprep.subr.mxu0 0.0
    %3473 = vmatpush1.msra.mxu0 0.0
    %3474 = vmatprep.subr.mxu0 0.0
    %3475 = vmatpush1.msra.mxu0 0.0
    %3476 = vmatprep.subr.mxu0 0.0
    %3477 = vmatpush1.msra.mxu0 0.0
    %3478 = vmatprep.subr.mxu0 0.0
    %3479 = vmatpush1.msra.mxu0 0.0
    %3480 = vmatprep.subr.mxu0 0.0
    %3481 = vmatpush1.msra.mxu0 0.0
    %3482 = vmatprep.subr.mxu0 0.0
    %3483 = vmatpush1.msra.mxu0 0.0
    %3484 = vmatprep.mubr.f32.mxu0 0.0
    %3485 = vmatmul.mubr.f32.gmra.mrb[0].mxu0 %v3347
    %v3486 = vpop.f32.mrb[0].mxu0
    %v3487 = vadd.f32 0.0, %v3486
    %v3488 = vpop.f32.mrb[0].mxu0
    %v3489 = vadd.f32 0.0, %v3488
    %3490 = vdwg.mxu0
    %v3495 = vrot.slane %v3416, 2
    %v3496 = vrot.slane %v3418, 2
    %v3497 = vrot.slane %v3487, 2
    %v3498 = vrot.slane %v3489, 2
    %v3499 = vrot.slane %v3416, 3
    %v3500 = vrot.slane %v3418, 3
    %v3501 = vrot.slane %v3487, 3
    %v3502 = vrot.slane %v3489, 3
    %v3503 = vrot.slane %v3416, 4
    %v3504 = vrot.slane %v3418, 4
    %v3505 = vrot.slane %v3487, 4
    %v3506 = vrot.slane %v3489, 4
    %v3507 = vrot.slane %v3416, 5
    %v3508 = vrot.slane %v3418, 5
    %v3509 = vrot.slane %v3487, 5
    %v3510 = vrot.slane %v3489, 5
    %v3511 = vrot.slane %v3416, 6
    %v3512 = vrot.slane %v3418, 6
    %v3513 = vrot.slane %v3487, 6
    %v3514 = vrot.slane %v3489, 6
    %v3515 = vrot.slane %v3416, 7
    %v3516 = vrot.slane %v3418, 7
    %v3517 = vrot.slane %v3487, 7
    %v3518 = vrot.slane %v3489, 7
    %v3519 = vrot.slane %v3416, 1
    %v3520 = vrot.slane %v3418, 1
    %v3521 = vrot.slane %v3487, 1
    %v3522 = vrot.slane %v3489, 1
    %v3555 = vadd.f32 %v215, %v3495
    %v3556 = vadd.f32 %v217, %v3496
    %v3557 = vadd.f32 %v328, %v3497
    %v3558 = vadd.f32 %v330, %v3498
    %v3559 = vadd.f32 %v221, %v3499
    %v3560 = vadd.f32 %v223, %v3500
    %v3561 = vadd.f32 %v334, %v3501
    %v3562 = vadd.f32 %v336, %v3502
    %v3563 = vadd.f32 %v227, %v3503
    %v3564 = vadd.f32 %v229, %v3504
    %v3565 = vadd.f32 %v340, %v3505
    %v3566 = vadd.f32 %v342, %v3506
    %v3567 = vadd.f32 %v233, %v3507
    %v3568 = vadd.f32 %v235, %v3508
    %v3569 = vadd.f32 %v346, %v3509
    %v3570 = vadd.f32 %v348, %v3510
    %v3571 = vadd.f32 %v239, %v3511
    %v3572 = vadd.f32 %v241, %v3512
    %v3573 = vadd.f32 %v352, %v3513
    %v3574 = vadd.f32 %v354, %v3514
    %v3575 = vadd.f32 %v245, %v3515
    %v3576 = vadd.f32 %v247, %v3516
    %v3577 = vadd.f32 %v358, %v3517
    %v3578 = vadd.f32 %v360, %v3518
    %v3579 = vadd.f32 %v251, %v3416
    %v3580 = vadd.f32 %v253, %v3418
    %v3581 = vadd.f32 %v364, %v3487
    %v3582 = vadd.f32 %v366, %v3489
    %v3583 = vadd.f32 %v257, %v3519
    %v3584 = vadd.f32 %v259, %v3520
    %v3585 = vadd.f32 %v370, %v3521
    %v3586 = vadd.f32 %v372, %v3522
    %v3587 = vxor.u32 %v3555, 2147483648
    %v3588 = vxor.u32 %v3559, 2147483648
    %v3589 = vxor.u32 %v3563, 2147483648
    %v3590 = vxor.u32 %v3567, 2147483648
    %v3591 = vxor.u32 %v3571, 2147483648
    %v3592 = vxor.u32 %v3575, 2147483648
    %v3593 = vxor.u32 %v3579, 2147483648
    %v3594 = vxor.u32 %v3583, 2147483648
    %v3595 = vmul.f32 %v3587, 1.442695
    %v3596 = vpow.pop %v3595
    %v3597 = vmul.f32 %v3588, 1.442695
    %v3598 = vpow.pop %v3597
    %v3599 = vmul.f32 %v3589, 1.442695
    %v3600 = vpow.pop %v3599
    %v3601 = vmul.f32 %v3590, 1.442695
    %v3602 = vpow.pop %v3601
    %v3603 = vmul.f32 %v3591, 1.442695
    %v3604 = vpow.pop %v3603
    %v3605 = vmul.f32 %v3592, 1.442695
    %v3606 = vpow.pop %v3605
    %v3607 = vmul.f32 %v3593, 1.442695
    %v3608 = vpow.pop %v3607
    %v3609 = vmul.f32 %v3594, 1.442695
    %v3610 = vpow.pop %v3609
    %v3611 = vadd.f32 %v3596, 1.0
    %v3612 = vadd.f32 %v3598, 1.0
    %v3613 = vadd.f32 %v3600, 1.0
    %v3614 = vadd.f32 %v3602, 1.0
    %v3615 = vadd.f32 %v3604, 1.0
    %v3616 = vadd.f32 %v3606, 1.0
    %v3617 = vadd.f32 %v3608, 1.0
    %v3618 = vadd.f32 %v3610, 1.0
    %v3619 = vrcp.pop %v3611
    %v3620 = vmul.f32 1.0, %v3619
    %v3621 = vrcp.pop %v3612
    %v3622 = vmul.f32 1.0, %v3621
    %v3623 = vrcp.pop %v3613
    %v3624 = vmul.f32 1.0, %v3623
    %v3625 = vrcp.pop %v3614
    %v3626 = vmul.f32 1.0, %v3625
    %v3627 = vrcp.pop %v3615
    %v3628 = vmul.f32 1.0, %v3627
    %v3629 = vrcp.pop %v3616
    %v3630 = vmul.f32 1.0, %v3629
    %v3631 = vrcp.pop %v3617
    %v3632 = vmul.f32 1.0, %v3631
    %v3633 = vrcp.pop %v3618
    %v3634 = vmul.f32 1.0, %v3633
    %v3635 = vxor.u32 %v3556, 2147483648
    %v3636 = vxor.u32 %v3560, 2147483648
    %v3637 = vxor.u32 %v3564, 2147483648
    %v3638 = vxor.u32 %v3568, 2147483648
    %v3639 = vxor.u32 %v3572, 2147483648
    %v3640 = vxor.u32 %v3576, 2147483648
    %v3641 = vxor.u32 %v3580, 2147483648
    %v3642 = vxor.u32 %v3584, 2147483648
    %v3643 = vmul.f32 %v3635, 1.442695
    %v3644 = vpow.pop %v3643
    %v3645 = vmul.f32 %v3636, 1.442695
    %v3646 = vpow.pop %v3645
    %v3647 = vmul.f32 %v3637, 1.442695
    %v3648 = vpow.pop %v3647
    %v3649 = vmul.f32 %v3638, 1.442695
    %v3650 = vpow.pop %v3649
    %v3651 = vmul.f32 %v3639, 1.442695
    %v3652 = vpow.pop %v3651
    %v3653 = vmul.f32 %v3640, 1.442695
    %v3654 = vpow.pop %v3653
    %v3655 = vmul.f32 %v3641, 1.442695
    %v3656 = vpow.pop %v3655
    %v3657 = vmul.f32 %v3642, 1.442695
    %v3658 = vpow.pop %v3657
    %v3659 = vadd.f32 %v3644, 1.0
    %v3660 = vadd.f32 %v3646, 1.0
    %v3661 = vadd.f32 %v3648, 1.0
    %v3662 = vadd.f32 %v3650, 1.0
    %v3663 = vadd.f32 %v3652, 1.0
    %v3664 = vadd.f32 %v3654, 1.0
    %v3665 = vadd.f32 %v3656, 1.0
    %v3666 = vadd.f32 %v3658, 1.0
    %v3667 = vrcp.pop %v3659
    %v3668 = vmul.f32 1.0, %v3667
    %v3669 = vrcp.pop %v3660
    %v3670 = vmul.f32 1.0, %v3669
    %v3671 = vrcp.pop %v3661
    %v3672 = vmul.f32 1.0, %v3671
    %v3673 = vrcp.pop %v3662
    %v3674 = vmul.f32 1.0, %v3673
    %v3675 = vrcp.pop %v3663
    %v3676 = vmul.f32 1.0, %v3675
    %v3677 = vrcp.pop %v3664
    %v3678 = vmul.f32 1.0, %v3677
    %v3679 = vrcp.pop %v3665
    %v3680 = vmul.f32 1.0, %v3679
    %v3681 = vrcp.pop %v3666
    %v3682 = vmul.f32 1.0, %v3681
    %v3683 = vtanh.pop %v3557
    %v3684 = vtanh.pop %v3561
    %v3685 = vtanh.pop %v3565
    %v3686 = vtanh.pop %v3569
    %v3687 = vtanh.pop %v3573
    %v3688 = vtanh.pop %v3577
    %v3689 = vtanh.pop %v3581
    %v3690 = vtanh.pop %v3585
    %v3691 = vxor.u32 %v3558, 2147483648
    %v3692 = vxor.u32 %v3562, 2147483648
    %v3693 = vxor.u32 %v3566, 2147483648
    %v3694 = vxor.u32 %v3570, 2147483648
    %v3695 = vxor.u32 %v3574, 2147483648
    %v3696 = vxor.u32 %v3578, 2147483648
    %v3697 = vxor.u32 %v3582, 2147483648
    %v3698 = vxor.u32 %v3586, 2147483648
    %v3699 = vmul.f32 %v3691, 1.442695
    %v3700 = vpow.pop %v3699
    %v3701 = vmul.f32 %v3692, 1.442695
    %v3702 = vpow.pop %v3701
    %v3703 = vmul.f32 %v3693, 1.442695
    %v3704 = vpow.pop %v3703
    %v3705 = vmul.f32 %v3694, 1.442695
    %v3706 = vpow.pop %v3705
    %v3707 = vmul.f32 %v3695, 1.442695
    %v3708 = vpow.pop %v3707
    %v3709 = vmul.f32 %v3696, 1.442695
    %v3710 = vpow.pop %v3709
    %v3711 = vmul.f32 %v3697, 1.442695
    %v3712 = vpow.pop %v3711
    %v3713 = vmul.f32 %v3698, 1.442695
    %v3714 = vpow.pop %v3713
    %v3715 = vadd.f32 %v3700, 1.0
    %v3716 = vadd.f32 %v3702, 1.0
    %v3717 = vadd.f32 %v3704, 1.0
    %v3718 = vadd.f32 %v3706, 1.0
    %v3719 = vadd.f32 %v3708, 1.0
    %v3720 = vadd.f32 %v3710, 1.0
    %v3721 = vadd.f32 %v3712, 1.0
    %v3722 = vadd.f32 %v3714, 1.0
    %v3723 = vrcp.pop %v3715
    %v3724 = vmul.f32 1.0, %v3723
    %v3725 = vrcp.pop %v3716
    %v3726 = vmul.f32 1.0, %v3725
    %v3727 = vrcp.pop %v3717
    %v3728 = vmul.f32 1.0, %v3727
    %v3729 = vrcp.pop %v3718
    %v3730 = vmul.f32 1.0, %v3729
    %v3731 = vrcp.pop %v3719
    %v3732 = vmul.f32 1.0, %v3731
    %v3733 = vrcp.pop %v3720
    %v3734 = vmul.f32 1.0, %v3733
    %v3735 = vrcp.pop %v3721
    %v3736 = vmul.f32 1.0, %v3735
    %v3737 = vrcp.pop %v3722
    %v3738 = vmul.f32 1.0, %v3737
    %v3747 = vrot.slane %v3294, 7
    %v3748 = vrot.slane %v3295, 7
    %v3749 = vrot.slane %v3296, 7
    %v3750 = vrot.slane %v3297, 7
    %v3751 = vrot.slane %v3298, 7
    %v3752 = vrot.slane %v3299, 7
    %v3753 = vrot.slane %v3300, 7
    %v3754 = vrot.slane %v3301, 7
    %v3763 = vmul.f32 %v3668, %v3747
    %v3764 = vmul.f32 %v3670, %v3748
    %v3765 = vmul.f32 %v3672, %v3749
    %v3766 = vmul.f32 %v3674, %v3750
    %v3767 = vmul.f32 %v3676, %v3751
    %v3768 = vmul.f32 %v3678, %v3752
    %v3769 = vmul.f32 %v3680, %v3753
    %v3770 = vmul.f32 %v3682, %v3754
    %v3771 = vmul.f32 %v3620, %v3683
    %v3772 = vmul.f32 %v3622, %v3684
    %v3773 = vmul.f32 %v3624, %v3685
    %v3774 = vmul.f32 %v3626, %v3686
    %v3775 = vmul.f32 %v3628, %v3687
    %v3776 = vmul.f32 %v3630, %v3688
    %v3777 = vmul.f32 %v3632, %v3689
    %v3778 = vmul.f32 %v3634, %v3690
    %v3779 = vadd.f32 %v3763, %v3771
    %v3780 = vadd.f32 %v3764, %v3772
    %v3781 = vadd.f32 %v3765, %v3773
    %v3782 = vadd.f32 %v3766, %v3774
    %v3783 = vadd.f32 %v3767, %v3775
    %v3784 = vadd.f32 %v3768, %v3776
    %v3785 = vadd.f32 %v3769, %v3777
    %v3786 = vadd.f32 %v3770, %v3778
    %v3787 = vtanh.pop %v3779
    %v3788 = vtanh.pop %v3780
    %v3789 = vtanh.pop %v3781
    %v3790 = vtanh.pop %v3782
    %v3791 = vtanh.pop %v3783
    %v3792 = vtanh.pop %v3784
    %v3793 = vtanh.pop %v3785
    %v3794 = vtanh.pop %v3786
    %v3795 = vmul.f32 %v3724, %v3787
    %v3796 = vmul.f32 %v3726, %v3788
    %v3797 = vmul.f32 %v3728, %v3789
    %v3798 = vmul.f32 %v3730, %v3790
    %v3799 = vmul.f32 %v3732, %v3791
    %v3800 = vmul.f32 %v3734, %v3792
    %v3801 = vmul.f32 %v3736, %v3793
    %v3802 = vmul.f32 %v3738, %v3794
    %3803 = vst [vmem:[#allocation4] sm:$0x40] %v3795
    %3804 = vst [vmem:[#allocation4 + $0x8] sm:$0x40] %v3796
    %3805 = vst [vmem:[#allocation4 + $0x10] sm:$0x40] %v3797
    %3806 = vst [vmem:[#allocation4 + $0x18] sm:$0x40] %v3798
    %3807 = vst [vmem:[#allocation4 + $0x20] sm:$0x40] %v3799
    %3808 = vst [vmem:[#allocation4 + $0x28] sm:$0x40] %v3800
    %3809 = vst [vmem:[#allocation4 + $0x30] sm:$0x40] %v3801
    %3810 = vst [vmem:[#allocation4 + $0x38] sm:$0x40] %v3802
    %v3819 = vrot.slane %v3795, 6
    %v3820 = vrot.slane %v3796, 5
    %v3821 = vsel %vm903, %v3820, %v3819
    %v3822 = vrot.slane %v3797, 4
    %v3823 = vsel %vm906, %v3822, %v3821
    %v3824 = vrot.slane %v3798, 3
    %v3825 = vsel %vm909, %v3824, %v3823
    %v3826 = vrot.slane %v3799, 2
    %v3827 = vsel %vm912, %v3826, %v3825
    %v3828 = vrot.slane %v3800, 1
    %v3829 = vsel %vm915, %v3828, %v3827
    %v3830 = vsel %vm918, %v3801, %v3829
    %v3831 = vrot.slane %v3802, 7
    %v3832 = vsel %vm921, %v3831, %v3830
    %3834 = vmatprep.subr.mxu0 %v377
    %3835 = vmatpush1.msra.mxu0 %v376
    %3836 = vmatprep.subr.mxu0 %v381
    %3837 = vmatpush1.msra.mxu0 %v380
    %3838 = vmatprep.subr.mxu0 %v385
    %3839 = vmatpush1.msra.mxu0 %v384
    %3840 = vmatprep.subr.mxu0 %v389
    %3841 = vmatpush1.msra.mxu0 %v388
    %3842 = vmatprep.subr.mxu0 %v393
    %3843 = vmatpush1.msra.mxu0 %v392
    %3844 = vmatprep.subr.mxu0 %v397
    %3845 = vmatpush1.msra.mxu0 %v396
    %3846 = vmatprep.subr.mxu0 %v401
    %3847 = vmatpush1.msra.mxu0 %v400
    %3848 = vmatprep.subr.mxu0 %v405
    %3849 = vmatpush1.msra.mxu0 %v404
    %3850 = vmatprep.subr.mxu0 %v409
    %3851 = vmatpush1.msra.mxu0 %v408
    %3852 = vmatprep.subr.mxu0 %v413
    %3853 = vmatpush1.msra.mxu0 %v412
    %3854 = vmatprep.subr.mxu0 %v417
    %3855 = vmatpush1.msra.mxu0 %v416
    %3856 = vmatprep.subr.mxu0 %v421
    %3857 = vmatpush1.msra.mxu0 %v420
    %3858 = vmatprep.subr.mxu0 %v425
    %3859 = vmatpush1.msra.mxu0 %v424
    %3860 = vmatprep.subr.mxu0 %v429
    %3861 = vmatpush1.msra.mxu0 %v428
    %3862 = vmatprep.subr.mxu0 %v433
    %3863 = vmatpush1.msra.mxu0 %v432
    %3864 = vmatprep.subr.mxu0 %v437
    %3865 = vmatpush1.msra.mxu0 %v436
    %3866 = vmatprep.subr.mxu0 0.0
    %3867 = vmatpush1.msra.mxu0 0.0
    %3868 = vmatprep.subr.mxu0 0.0
    %3869 = vmatpush1.msra.mxu0 0.0
    %3870 = vmatprep.subr.mxu0 0.0
    %3871 = vmatpush1.msra.mxu0 0.0
    %3872 = vmatprep.subr.mxu0 0.0
    %3873 = vmatpush1.msra.mxu0 0.0
    %3874 = vmatprep.subr.mxu0 0.0
    %3875 = vmatpush1.msra.mxu0 0.0
    %3876 = vmatprep.subr.mxu0 0.0
    %3877 = vmatpush1.msra.mxu0 0.0
    %3878 = vmatprep.subr.mxu0 0.0
    %3879 = vmatpush1.msra.mxu0 0.0
    %3880 = vmatprep.subr.mxu0 0.0
    %3881 = vmatpush1.msra.mxu0 0.0
    %3882 = vmatprep.subr.mxu0 0.0
    %3883 = vmatpush1.msra.mxu0 0.0
    %3884 = vmatprep.subr.mxu0 0.0
    %3885 = vmatpush1.msra.mxu0 0.0
    %3886 = vmatprep.subr.mxu0 0.0
    %3887 = vmatpush1.msra.mxu0 0.0
    %3888 = vmatprep.subr.mxu0 0.0
    %3889 = vmatpush1.msra.mxu0 0.0
    %3890 = vmatprep.subr.mxu0 0.0
    %3891 = vmatpush1.msra.mxu0 0.0
    %3892 = vmatprep.subr.mxu0 0.0
    %3893 = vmatpush1.msra.mxu0 0.0
    %3894 = vmatprep.subr.mxu0 0.0
    %3895 = vmatpush1.msra.mxu0 0.0
    %3896 = vmatprep.subr.mxu0 0.0
    %3897 = vmatpush1.msra.mxu0 0.0
    %3898 = vmatprep.mubr.f32.mxu0 0.0
    %3899 = vmatmul.mubr.f32.gmra.mrb[0].mxu0 %v3832
    %v3900 = vpop.f32.mrb[0].mxu0
    %v3901 = vadd.f32 0.0, %v3900
    %v3902 = vpop.f32.mrb[0].mxu0
    %v3903 = vadd.f32 0.0, %v3902
    %3904 = vdwg.mxu0
    %3905 = vmatprep.subr.mxu0 %v379
    %3906 = vmatpush1.msra.mxu0 %v378
    %3907 = vmatprep.subr.mxu0 %v383
    %3908 = vmatpush1.msra.mxu0 %v382
    %3909 = vmatprep.subr.mxu0 %v387
    %3910 = vmatpush1.msra.mxu0 %v386
    %3911 = vmatprep.subr.mxu0 %v391
    %3912 = vmatpush1.msra.mxu0 %v390
    %3913 = vmatprep.subr.mxu0 %v395
    %3914 = vmatpush1.msra.mxu0 %v394
    %3915 = vmatprep.subr.mxu0 %v399
    %3916 = vmatpush1.msra.mxu0 %v398
    %3917 = vmatprep.subr.mxu0 %v403
    %3918 = vmatpush1.msra.mxu0 %v402
    %3919 = vmatprep.subr.mxu0 %v407
    %3920 = vmatpush1.msra.mxu0 %v406
    %3921 = vmatprep.subr.mxu0 %v411
    %3922 = vmatpush1.msra.mxu0 %v410
    %3923 = vmatprep.subr.mxu0 %v415
    %3924 = vmatpush1.msra.mxu0 %v414
    %3925 = vmatprep.subr.mxu0 %v419
    %3926 = vmatpush1.msra.mxu0 %v418
    %3927 = vmatprep.subr.mxu0 %v423
    %3928 = vmatpush1.msra.mxu0 %v422
    %3929 = vmatprep.subr.mxu0 %v427
    %3930 = vmatpush1.msra.mxu0 %v426
    %3931 = vmatprep.subr.mxu0 %v431
    %3932 = vmatpush1.msra.mxu0 %v430
    %3933 = vmatprep.subr.mxu0 %v435
    %3934 = vmatpush1.msra.mxu0 %v434
    %3935 = vmatprep.subr.mxu0 %v439
    %3936 = vmatpush1.msra.mxu0 %v438
    %3937 = vmatprep.subr.mxu0 0.0
    %3938 = vmatpush1.msra.mxu0 0.0
    %3939 = vmatprep.subr.mxu0 0.0
    %3940 = vmatpush1.msra.mxu0 0.0
    %3941 = vmatprep.subr.mxu0 0.0
    %3942 = vmatpush1.msra.mxu0 0.0
    %3943 = vmatprep.subr.mxu0 0.0
    %3944 = vmatpush1.msra.mxu0 0.0
    %3945 = vmatprep.subr.mxu0 0.0
    %3946 = vmatpush1.msra.mxu0 0.0
    %3947 = vmatprep.subr.mxu0 0.0
    %3948 = vmatpush1.msra.mxu0 0.0
    %3949 = vmatprep.subr.mxu0 0.0
    %3950 = vmatpush1.msra.mxu0 0.0
    %3951 = vmatprep.subr.mxu0 0.0
    %3952 = vmatpush1.msra.mxu0 0.0
    %3953 = vmatprep.subr.mxu0 0.0
    %3954 = vmatpush1.msra.mxu0 0.0
    %3955 = vmatprep.subr.mxu0 0.0
    %3956 = vmatpush1.msra.mxu0 0.0
    %3957 = vmatprep.subr.mxu0 0.0
    %3958 = vmatpush1.msra.mxu0 0.0
    %3959 = vmatprep.subr.mxu0 0.0
    %3960 = vmatpush1.msra.mxu0 0.0
    %3961 = vmatprep.subr.mxu0 0.0
    %3962 = vmatpush1.msra.mxu0 0.0
    %3963 = vmatprep.subr.mxu0 0.0
    %3964 = vmatpush1.msra.mxu0 0.0
    %3965 = vmatprep.subr.mxu0 0.0
    %3966 = vmatpush1.msra.mxu0 0.0
    %3967 = vmatprep.subr.mxu0 0.0
    %3968 = vmatpush1.msra.mxu0 0.0
    %3969 = vmatprep.mubr.f32.mxu0 0.0
    %3970 = vmatmul.mubr.f32.gmra.mrb[0].mxu0 %v3832
    %v3971 = vpop.f32.mrb[0].mxu0
    %v3972 = vadd.f32 0.0, %v3971
    %v3973 = vpop.f32.mrb[0].mxu0
    %v3974 = vadd.f32 0.0, %v3973
    %3975 = vdwg.mxu0
    %v3980 = vrot.slane %v3901, 1
    %v3981 = vrot.slane %v3903, 1
    %v3982 = vrot.slane %v3972, 1
    %v3983 = vrot.slane %v3974, 1
    %v3984 = vrot.slane %v3901, 2
    %v3985 = vrot.slane %v3903, 2
    %v3986 = vrot.slane %v3972, 2
    %v3987 = vrot.slane %v3974, 2
    %v3988 = vrot.slane %v3901, 3
    %v3989 = vrot.slane %v3903, 3
    %v3990 = vrot.slane %v3972, 3
    %v3991 = vrot.slane %v3974, 3
    %v3992 = vrot.slane %v3901, 4
    %v3993 = vrot.slane %v3903, 4
    %v3994 = vrot.slane %v3972, 4
    %v3995 = vrot.slane %v3974, 4
    %v3996 = vrot.slane %v3901, 5
    %v3997 = vrot.slane %v3903, 5
    %v3998 = vrot.slane %v3972, 5
    %v3999 = vrot.slane %v3974, 5
    %v4000 = vrot.slane %v3901, 6
    %v4001 = vrot.slane %v3903, 6
    %v4002 = vrot.slane %v3972, 6
    %v4003 = vrot.slane %v3974, 6
    %v4004 = vrot.slane %v3901, 7
    %v4005 = vrot.slane %v3903, 7
    %v4006 = vrot.slane %v3972, 7
    %v4007 = vrot.slane %v3974, 7
    %v4040 = vadd.f32 %v215, %v3980
    %v4041 = vadd.f32 %v217, %v3981
    %v4042 = vadd.f32 %v328, %v3982
    %v4043 = vadd.f32 %v330, %v3983
    %v4044 = vadd.f32 %v221, %v3984
    %v4045 = vadd.f32 %v223, %v3985
    %v4046 = vadd.f32 %v334, %v3986
    %v4047 = vadd.f32 %v336, %v3987
    %v4048 = vadd.f32 %v227, %v3988
    %v4049 = vadd.f32 %v229, %v3989
    %v4050 = vadd.f32 %v340, %v3990
    %v4051 = vadd.f32 %v342, %v3991
    %v4052 = vadd.f32 %v233, %v3992
    %v4053 = vadd.f32 %v235, %v3993
    %v4054 = vadd.f32 %v346, %v3994
    %v4055 = vadd.f32 %v348, %v3995
    %v4056 = vadd.f32 %v239, %v3996
    %v4057 = vadd.f32 %v241, %v3997
    %v4058 = vadd.f32 %v352, %v3998
    %v4059 = vadd.f32 %v354, %v3999
    %v4060 = vadd.f32 %v245, %v4000
    %v4061 = vadd.f32 %v247, %v4001
    %v4062 = vadd.f32 %v358, %v4002
    %v4063 = vadd.f32 %v360, %v4003
    %v4064 = vadd.f32 %v251, %v4004
    %v4065 = vadd.f32 %v253, %v4005
    %v4066 = vadd.f32 %v364, %v4006
    %v4067 = vadd.f32 %v366, %v4007
    %v4068 = vadd.f32 %v257, %v3901
    %v4069 = vadd.f32 %v259, %v3903
    %v4070 = vadd.f32 %v370, %v3972
    %v4071 = vadd.f32 %v372, %v3974
    %v4072 = vxor.u32 %v4040, 2147483648
    %v4073 = vxor.u32 %v4044, 2147483648
    %v4074 = vxor.u32 %v4048, 2147483648
    %v4075 = vxor.u32 %v4052, 2147483648
    %v4076 = vxor.u32 %v4056, 2147483648
    %v4077 = vxor.u32 %v4060, 2147483648
    %v4078 = vxor.u32 %v4064, 2147483648
    %v4079 = vxor.u32 %v4068, 2147483648
    %v4080 = vmul.f32 %v4072, 1.442695
    %v4081 = vpow.pop %v4080
    %v4082 = vmul.f32 %v4073, 1.442695
    %v4083 = vpow.pop %v4082
    %v4084 = vmul.f32 %v4074, 1.442695
    %v4085 = vpow.pop %v4084
    %v4086 = vmul.f32 %v4075, 1.442695
    %v4087 = vpow.pop %v4086
    %v4088 = vmul.f32 %v4076, 1.442695
    %v4089 = vpow.pop %v4088
    %v4090 = vmul.f32 %v4077, 1.442695
    %v4091 = vpow.pop %v4090
    %v4092 = vmul.f32 %v4078, 1.442695
    %v4093 = vpow.pop %v4092
    %v4094 = vmul.f32 %v4079, 1.442695
    %v4095 = vpow.pop %v4094
    %v4096 = vadd.f32 %v4081, 1.0
    %v4097 = vadd.f32 %v4083, 1.0
    %v4098 = vadd.f32 %v4085, 1.0
    %v4099 = vadd.f32 %v4087, 1.0
    %v4100 = vadd.f32 %v4089, 1.0
    %v4101 = vadd.f32 %v4091, 1.0
    %v4102 = vadd.f32 %v4093, 1.0
    %v4103 = vadd.f32 %v4095, 1.0
    %v4104 = vrcp.pop %v4096
    %v4105 = vmul.f32 1.0, %v4104
    %v4106 = vrcp.pop %v4097
    %v4107 = vmul.f32 1.0, %v4106
    %v4108 = vrcp.pop %v4098
    %v4109 = vmul.f32 1.0, %v4108
    %v4110 = vrcp.pop %v4099
    %v4111 = vmul.f32 1.0, %v4110
    %v4112 = vrcp.pop %v4100
    %v4113 = vmul.f32 1.0, %v4112
    %v4114 = vrcp.pop %v4101
    %v4115 = vmul.f32 1.0, %v4114
    %v4116 = vrcp.pop %v4102
    %v4117 = vmul.f32 1.0, %v4116
    %v4118 = vrcp.pop %v4103
    %v4119 = vmul.f32 1.0, %v4118
    %v4120 = vxor.u32 %v4041, 2147483648
    %v4121 = vxor.u32 %v4045, 2147483648
    %v4122 = vxor.u32 %v4049, 2147483648
    %v4123 = vxor.u32 %v4053, 2147483648
    %v4124 = vxor.u32 %v4057, 2147483648
    %v4125 = vxor.u32 %v4061, 2147483648
    %v4126 = vxor.u32 %v4065, 2147483648
    %v4127 = vxor.u32 %v4069, 2147483648
    %v4128 = vmul.f32 %v4120, 1.442695
    %v4129 = vpow.pop %v4128
    %v4130 = vmul.f32 %v4121, 1.442695
    %v4131 = vpow.pop %v4130
    %v4132 = vmul.f32 %v4122, 1.442695
    %v4133 = vpow.pop %v4132
    %v4134 = vmul.f32 %v4123, 1.442695
    %v4135 = vpow.pop %v4134
    %v4136 = vmul.f32 %v4124, 1.442695
    %v4137 = vpow.pop %v4136
    %v4138 = vmul.f32 %v4125, 1.442695
    %v4139 = vpow.pop %v4138
    %v4140 = vmul.f32 %v4126, 1.442695
    %v4141 = vpow.pop %v4140
    %v4142 = vmul.f32 %v4127, 1.442695
    %v4143 = vpow.pop %v4142
    %v4144 = vadd.f32 %v4129, 1.0
    %v4145 = vadd.f32 %v4131, 1.0
    %v4146 = vadd.f32 %v4133, 1.0
    %v4147 = vadd.f32 %v4135, 1.0
    %v4148 = vadd.f32 %v4137, 1.0
    %v4149 = vadd.f32 %v4139, 1.0
    %v4150 = vadd.f32 %v4141, 1.0
    %v4151 = vadd.f32 %v4143, 1.0
    %v4152 = vrcp.pop %v4144
    %v4153 = vmul.f32 1.0, %v4152
    %v4154 = vrcp.pop %v4145
    %v4155 = vmul.f32 1.0, %v4154
    %v4156 = vrcp.pop %v4146
    %v4157 = vmul.f32 1.0, %v4156
    %v4158 = vrcp.pop %v4147
    %v4159 = vmul.f32 1.0, %v4158
    %v4160 = vrcp.pop %v4148
    %v4161 = vmul.f32 1.0, %v4160
    %v4162 = vrcp.pop %v4149
    %v4163 = vmul.f32 1.0, %v4162
    %v4164 = vrcp.pop %v4150
    %v4165 = vmul.f32 1.0, %v4164
    %v4166 = vrcp.pop %v4151
    %v4167 = vmul.f32 1.0, %v4166
    %v4168 = vtanh.pop %v4042
    %v4169 = vtanh.pop %v4046
    %v4170 = vtanh.pop %v4050
    %v4171 = vtanh.pop %v4054
    %v4172 = vtanh.pop %v4058
    %v4173 = vtanh.pop %v4062
    %v4174 = vtanh.pop %v4066
    %v4175 = vtanh.pop %v4070
    %v4176 = vxor.u32 %v4043, 2147483648
    %v4177 = vxor.u32 %v4047, 2147483648
    %v4178 = vxor.u32 %v4051, 2147483648
    %v4179 = vxor.u32 %v4055, 2147483648
    %v4180 = vxor.u32 %v4059, 2147483648
    %v4181 = vxor.u32 %v4063, 2147483648
    %v4182 = vxor.u32 %v4067, 2147483648
    %v4183 = vxor.u32 %v4071, 2147483648
    %v4184 = vmul.f32 %v4176, 1.442695
    %v4185 = vpow.pop %v4184
    %v4186 = vmul.f32 %v4177, 1.442695
    %v4187 = vpow.pop %v4186
    %v4188 = vmul.f32 %v4178, 1.442695
    %v4189 = vpow.pop %v4188
    %v4190 = vmul.f32 %v4179, 1.442695
    %v4191 = vpow.pop %v4190
    %v4192 = vmul.f32 %v4180, 1.442695
    %v4193 = vpow.pop %v4192
    %v4194 = vmul.f32 %v4181, 1.442695
    %v4195 = vpow.pop %v4194
    %v4196 = vmul.f32 %v4182, 1.442695
    %v4197 = vpow.pop %v4196
    %v4198 = vmul.f32 %v4183, 1.442695
    %v4199 = vpow.pop %v4198
    %v4200 = vadd.f32 %v4185, 1.0
    %v4201 = vadd.f32 %v4187, 1.0
    %v4202 = vadd.f32 %v4189, 1.0
    %v4203 = vadd.f32 %v4191, 1.0
    %v4204 = vadd.f32 %v4193, 1.0
    %v4205 = vadd.f32 %v4195, 1.0
    %v4206 = vadd.f32 %v4197, 1.0
    %v4207 = vadd.f32 %v4199, 1.0
    %v4208 = vrcp.pop %v4200
    %v4209 = vmul.f32 1.0, %v4208
    %v4210 = vrcp.pop %v4201
    %v4211 = vmul.f32 1.0, %v4210
    %v4212 = vrcp.pop %v4202
    %v4213 = vmul.f32 1.0, %v4212
    %v4214 = vrcp.pop %v4203
    %v4215 = vmul.f32 1.0, %v4214
    %v4216 = vrcp.pop %v4204
    %v4217 = vmul.f32 1.0, %v4216
    %v4218 = vrcp.pop %v4205
    %v4219 = vmul.f32 1.0, %v4218
    %v4220 = vrcp.pop %v4206
    %v4221 = vmul.f32 1.0, %v4220
    %v4222 = vrcp.pop %v4207
    %v4223 = vmul.f32 1.0, %v4222
    %v4232 = vrot.slane %v3779, 7
    %v4233 = vrot.slane %v3780, 7
    %v4234 = vrot.slane %v3781, 7
    %v4235 = vrot.slane %v3782, 7
    %v4236 = vrot.slane %v3783, 7
    %v4237 = vrot.slane %v3784, 7
    %v4238 = vrot.slane %v3785, 7
    %v4239 = vrot.slane %v3786, 7
    %v4248 = vmul.f32 %v4153, %v4232
    %v4249 = vmul.f32 %v4155, %v4233
    %v4250 = vmul.f32 %v4157, %v4234
    %v4251 = vmul.f32 %v4159, %v4235
    %v4252 = vmul.f32 %v4161, %v4236
    %v4253 = vmul.f32 %v4163, %v4237
    %v4254 = vmul.f32 %v4165, %v4238
    %v4255 = vmul.f32 %v4167, %v4239
    %v4256 = vmul.f32 %v4105, %v4168
    %v4257 = vmul.f32 %v4107, %v4169
    %v4258 = vmul.f32 %v4109, %v4170
    %v4259 = vmul.f32 %v4111, %v4171
    %v4260 = vmul.f32 %v4113, %v4172
    %v4261 = vmul.f32 %v4115, %v4173
    %v4262 = vmul.f32 %v4117, %v4174
    %v4263 = vmul.f32 %v4119, %v4175
    %v4264 = vadd.f32 %v4248, %v4256
    %v4265 = vadd.f32 %v4249, %v4257
    %v4266 = vadd.f32 %v4250, %v4258
    %v4267 = vadd.f32 %v4251, %v4259
    %v4268 = vadd.f32 %v4252, %v4260
    %v4269 = vadd.f32 %v4253, %v4261
    %v4270 = vadd.f32 %v4254, %v4262
    %v4271 = vadd.f32 %v4255, %v4263
    %v4272 = vtanh.pop %v4264
    %v4273 = vtanh.pop %v4265
    %v4274 = vtanh.pop %v4266
    %v4275 = vtanh.pop %v4267
    %v4276 = vtanh.pop %v4268
    %v4277 = vtanh.pop %v4269
    %v4278 = vtanh.pop %v4270
    %v4279 = vtanh.pop %v4271
    %v4280 = vmul.f32 %v4209, %v4272
    %v4281 = vmul.f32 %v4211, %v4273
    %v4282 = vmul.f32 %v4213, %v4274
    %v4283 = vmul.f32 %v4215, %v4275
    %v4284 = vmul.f32 %v4217, %v4276
    %v4285 = vmul.f32 %v4219, %v4277
    %v4286 = vmul.f32 %v4221, %v4278
    %v4287 = vmul.f32 %v4223, %v4279
    %4288 = vst [vmem:[#allocation4] sm:$0x80] %v4280
    %4289 = vst [vmem:[#allocation4 + $0x8] sm:$0x80] %v4281
    %4290 = vst [vmem:[#allocation4 + $0x10] sm:$0x80] %v4282
    %4291 = vst [vmem:[#allocation4 + $0x18] sm:$0x80] %v4283
    %4292 = vst [vmem:[#allocation4 + $0x20] sm:$0x80] %v4284
    %4293 = vst [vmem:[#allocation4 + $0x28] sm:$0x80] %v4285
    %4294 = vst [vmem:[#allocation4 + $0x30] sm:$0x80] %v4286
    %4295 = vst [vmem:[#allocation4 + $0x38] sm:$0x80] %v4287
    %v4304 = vrot.slane %v4281, 7
    %v4305 = vrot.slane %v4282, 6
    %v4306 = vsel %vm903, %v4305, %v4304
    %v4307 = vrot.slane %v4283, 5
    %v4308 = vsel %vm906, %v4307, %v4306
    %v4309 = vrot.slane %v4284, 4
    %v4310 = vsel %vm909, %v4309, %v4308
    %v4311 = vrot.slane %v4285, 3
    %v4312 = vsel %vm912, %v4311, %v4310
    %v4313 = vrot.slane %v4286, 2
    %v4314 = vsel %vm915, %v4313, %v4312
    %v4315 = vrot.slane %v4287, 1
    %v4316 = vsel %vm918, %v4315, %v4314
    %4319 = vst [vmem:[#allocation2 - $0x7] sm:$0x80] %v4280
    %4320 = vst [vmem:[#allocation2 + $0x1] sm:$0x7f] %v4316
    %v4329 = vrot.slane %v4265, 7
    %v4330 = vrot.slane %v4266, 6
    %v4331 = vsel %vm903, %v4330, %v4329
    %v4332 = vrot.slane %v4267, 5
    %v4333 = vsel %vm906, %v4332, %v4331
    %v4334 = vrot.slane %v4268, 4
    %v4335 = vsel %vm909, %v4334, %v4333
    %v4336 = vrot.slane %v4269, 3
    %v4337 = vsel %vm912, %v4336, %v4335
    %v4338 = vrot.slane %v4270, 2
    %v4339 = vsel %vm915, %v4338, %v4337
    %v4340 = vrot.slane %v4271, 1
    %v4341 = vsel %vm918, %v4340, %v4339
    %4344 = vst [vmem:[#allocation3 - $0x7] sm:$0x80] %v4264
    %4345 = vst [vmem:[#allocation3 + $0x1] sm:$0x7f] %v4341
    %v4346 = vld [vmem:[#allocation4] sm:$0xff]
    %v4347 = vld [vmem:[#allocation4 + $0x8] sm:$0xff]
    %v4348 = vld [vmem:[#allocation4 + $0x10] sm:$0xff]
    %v4349 = vld [vmem:[#allocation4 + $0x18] sm:$0xff]
    %v4350 = vld [vmem:[#allocation4 + $0x20] sm:$0xff]
    %v4351 = vld [vmem:[#allocation4 + $0x28] sm:$0xff]
    %v4352 = vld [vmem:[#allocation4 + $0x30] sm:$0xff]
    %v4353 = vld [vmem:[#allocation4 + $0x38] sm:$0xff]
    %v4354 = vld [vmem:[#allocation11] sm:$0xff]
    %v4355 = vld [vmem:[#allocation11 + $0x8] sm:$0xff]
    %v4356 = vld [vmem:[#allocation11 + $0x10] sm:$0xff]
    %v4357 = vld [vmem:[#allocation11 + $0x18] sm:$0xff]
    %v4358 = vld [vmem:[#allocation11 + $0x20] sm:$0xff]
    %v4359 = vld [vmem:[#allocation11 + $0x28] sm:$0xff]
    %v4360 = vld [vmem:[#allocation11 + $0x30] sm:$0xff]
    %v4361 = vld [vmem:[#allocation11 + $0x38] sm:$0xff]
    %v4362 = vld [vmem:[#allocation11 + $0x40] sm:$0xff]
    %v4363 = vld [vmem:[#allocation11 + $0x48] sm:$0xff]
    %v4364 = vld [vmem:[#allocation11 + $0x50] sm:$0xff]
    %v4365 = vld [vmem:[#allocation11 + $0x58] sm:$0xff]
    %v4366 = vld [vmem:[#allocation11 + $0x60] sm:$0xff]
    %v4367 = vld [vmem:[#allocation11 + $0x68] sm:$0xff]
    %v4368 = vld [vmem:[#allocation11 + $0x70] sm:$0xff]
    %v4369 = vld [vmem:[#allocation11 + $0x78] sm:$0xff]
    %v4370 = vld [vmem:[%s5] sm:$0x1]
    %v4372 = vlaneseq
    %v4373 = vshrl.u32 %v4372, 7
    %v4374 = vsub.s32 0, %v4373
    %v4375 = vrot.slane %v4370, %v4374
    %4377 = vmatprep.subr.mxu0 0.0
    %4378 = vmatpush1.msra.mxu0 %v4354
    %4379 = vmatprep.subr.mxu0 0.0
    %4380 = vmatpush1.msra.mxu0 %v4355
    %4381 = vmatprep.subr.mxu0 0.0
    %4382 = vmatpush1.msra.mxu0 %v4356
    %4383 = vmatprep.subr.mxu0 0.0
    %4384 = vmatpush1.msra.mxu0 %v4357
    %4385 = vmatprep.subr.mxu0 0.0
    %4386 = vmatpush1.msra.mxu0 %v4358
    %4387 = vmatprep.subr.mxu0 0.0
    %4388 = vmatpush1.msra.mxu0 %v4359
    %4389 = vmatprep.subr.mxu0 0.0
    %4390 = vmatpush1.msra.mxu0 %v4360
    %4391 = vmatprep.subr.mxu0 0.0
    %4392 = vmatpush1.msra.mxu0 %v4361
    %4393 = vmatprep.subr.mxu0 0.0
    %4394 = vmatpush1.msra.mxu0 %v4362
    %4395 = vmatprep.subr.mxu0 0.0
    %4396 = vmatpush1.msra.mxu0 %v4363
    %4397 = vmatprep.subr.mxu0 0.0
    %4398 = vmatpush1.msra.mxu0 %v4364
    %4399 = vmatprep.subr.mxu0 0.0
    %4400 = vmatpush1.msra.mxu0 %v4365
    %4401 = vmatprep.subr.mxu0 0.0
    %4402 = vmatpush1.msra.mxu0 %v4366
    %4403 = vmatprep.subr.mxu0 0.0
    %4404 = vmatpush1.msra.mxu0 %v4367
    %4405 = vmatprep.subr.mxu0 0.0
    %4406 = vmatpush1.msra.mxu0 %v4368
    %4407 = vmatprep.subr.mxu0 0.0
    %4408 = vmatpush1.msra.mxu0 %v4369
    %4409 = vmatprep.subr.mxu0 0.0
    %4410 = vmatpush1.msra.mxu0 0.0
    %4411 = vmatprep.subr.mxu0 0.0
    %4412 = vmatpush1.msra.mxu0 0.0
    %4413 = vmatprep.subr.mxu0 0.0
    %4414 = vmatpush1.msra.mxu0 0.0
    %4415 = vmatprep.subr.mxu0 0.0
    %4416 = vmatpush1.msra.mxu0 0.0
    %4417 = vmatprep.subr.mxu0 0.0
    %4418 = vmatpush1.msra.mxu0 0.0
    %4419 = vmatprep.subr.mxu0 0.0
    %4420 = vmatpush1.msra.mxu0 0.0
    %4421 = vmatprep.subr.mxu0 0.0
    %4422 = vmatpush1.msra.mxu0 0.0
    %4423 = vmatprep.subr.mxu0 0.0
    %4424 = vmatpush1.msra.mxu0 0.0
    %4425 = vmatprep.subr.mxu0 0.0
    %4426 = vmatpush1.msra.mxu0 0.0
    %4427 = vmatprep.subr.mxu0 0.0
    %4428 = vmatpush1.msra.mxu0 0.0
    %4429 = vmatprep.subr.mxu0 0.0
    %4430 = vmatpush1.msra.mxu0 0.0
    %4431 = vmatprep.subr.mxu0 0.0
    %4432 = vmatpush1.msra.mxu0 0.0
    %4433 = vmatprep.subr.mxu0 0.0
    %4434 = vmatpush1.msra.mxu0 0.0
    %4435 = vmatprep.subr.mxu0 0.0
    %4436 = vmatpush1.msra.mxu0 0.0
    %4437 = vmatprep.subr.mxu0 0.0
    %4438 = vmatpush1.msra.mxu0 0.0
    %4439 = vmatprep.subr.mxu0 0.0
    %4440 = vmatpush1.msra.mxu0 0.0
    %4441 = vmatprep.mubr.f32.mxu0 0.0
    %4442 = vmatmul.mubr.f32.gmra.mrb[0].mxu0 %v4346
    %v4443 = vpop.f32.mrb[0].mxu0
    %v4444 = vadd.f32 %v4375, %v4443
    %v4445 = vpop.f32.mrb[0].mxu0
    %4446 = vmatprep.mubr.f32.mxu0 0.0
    %4447 = vmatmul.mubr.f32.gmra.mrb[0].mxu0 %v4347
    %v4448 = vpop.f32.mrb[0].mxu0
    %v4449 = vadd.f32 %v4375, %v4448
    %v4450 = vpop.f32.mrb[0].mxu0
    %4451 = vmatprep.mubr.f32.mxu0 0.0
    %4452 = vmatmul.mubr.f32.gmra.mrb[0].mxu0 %v4348
    %v4453 = vpop.f32.mrb[0].mxu0
    %v4454 = vadd.f32 %v4375, %v4453
    %v4455 = vpop.f32.mrb[0].mxu0
    %4456 = vmatprep.mubr.f32.mxu0 0.0
    %4457 = vmatmul.mubr.f32.gmra.mrb[0].mxu0 %v4349
    %v4458 = vpop.f32.mrb[0].mxu0
    %v4459 = vadd.f32 %v4375, %v4458
    %v4460 = vpop.f32.mrb[0].mxu0
    %4461 = vmatprep.mubr.f32.mxu0 0.0
    %4462 = vmatmul.mubr.f32.gmra.mrb[0].mxu0 %v4350
    %v4463 = vpop.f32.mrb[0].mxu0
    %v4464 = vadd.f32 %v4375, %v4463
    %v4465 = vpop.f32.mrb[0].mxu0
    %4466 = vmatprep.mubr.f32.mxu0 0.0
    %4467 = vmatmul.mubr.f32.gmra.mrb[0].mxu0 %v4351
    %v4468 = vpop.f32.mrb[0].mxu0
    %v4469 = vadd.f32 %v4375, %v4468
    %v4470 = vpop.f32.mrb[0].mxu0
    %4471 = vmatprep.mubr.f32.mxu0 0.0
    %4472 = vmatmul.mubr.f32.gmra.mrb[0].mxu0 %v4352
    %v4473 = vpop.f32.mrb[0].mxu0
    %v4474 = vadd.f32 %v4375, %v4473
    %v4475 = vpop.f32.mrb[0].mxu0
    %4476 = vmatprep.mubr.f32.mxu0 0.0
    %4477 = vmatmul.mubr.f32.gmra.mrb[0].mxu0 %v4353
    %v4478 = vpop.f32.mrb[0].mxu0
    %v4479 = vadd.f32 %v4375, %v4478
    %v4480 = vpop.f32.mrb[0].mxu0
    %4481 = vdwg.mxu0
    %4482 = vst [vmem:[#allocation13] sm:$0xff] %v4444
    %4483 = vst [vmem:[#allocation13 + $0x8] sm:$0xff] %v4449
    %4484 = vst [vmem:[#allocation13 + $0x10] sm:$0xff] %v4454
    %4485 = vst [vmem:[#allocation13 + $0x18] sm:$0xff] %v4459
    %4486 = vst [vmem:[#allocation13 + $0x20] sm:$0xff] %v4464
    %4487 = vst [vmem:[#allocation13 + $0x28] sm:$0xff] %v4469
    %4488 = vst [vmem:[#allocation13 + $0x30] sm:$0xff] %v4474
    %4489 = vst [vmem:[#allocation13 + $0x38] sm:$0xff] %v4479
    // Predicated region
    $region46: #{tpu_custom_call.1} parent=1 // pred_check
      _
    $region47: #{tpu_custom_call.1} parent=1 // pred_check_branch
      %4491 = sbr.rel (0) target = $region49
    $region48: #{tpu_custom_call.1} parent=1 // pred_region
      %s4493 = ssub.s32 1024, 1024
      %4494 = vsyncadd [#allocation7], %s4493
      %s4495 = sshll.u32 [#allocation13], 4
      %s4496 = int_to_ptr.vmem [resolvable:$true] %s4495
      %4501 = dma.vmem_to_hbm [thread:$0]  %s4496, 1024, %s6, [#allocation7], 128, 128, 8
    $region49: #{tpu_custom_call.1} parent=1 // pred_fallthru
      _
    // Predicated region
    $region50: #{tpu_custom_call.1} parent=1 // pred_check
      _
    $region51: #{tpu_custom_call.1} parent=1 // pred_check_branch
      %4503 = sbr.rel (0) target = $region53
    $region52: #{tpu_custom_call.1} parent=1 // pred_region
      %4504 = dma.done [#allocation7], 1024
    $region53: #{tpu_custom_call.1} parent=1 // pred_fallthru
      _
    %4505 = vsyncpa [#allocation6], 1
    %4506 = vsyncpa [#allocation9], 1
    %4507 = vsyncpa [#allocation12], 1
    %4508 = vsyncpa [#allocation7], 1

</llo_original>
